<compile_context>
chip_gen: v7x
topology: tpu7x:2x2x1
jax: 0.10.0
libtpu: 0.0.40
codegen_flags: <defaults>
</compile_context>

<pallas_src>
import functools
import math

import jax
import jax.numpy as jnp
from jax.experimental import pallas as pl
from jax.experimental.pallas import tpu as pltpu

# ----------------------------- small config ---------------------------------
TRANS_DIM   = 32   # config.trans_dim
DEPTH       = 2    # config.depth
NUM_HEADS   = 2    # config.num_heads
GROUP_SIZE  = 8    # config.group_size
NUM_GROUP   = 8    # config.num_group
ENCODER_DIM = 32   # config.encoder_dims (== trans_dim -> reduce_dim = nn.Identity)
CLS_DIM     = 8    # config.cls_dim     (cls_head_arch == '1x')
MLP_RATIO   = 4
HEAD_DIM    = TRANS_DIM // NUM_HEADS
BN_EPS      = 1e-5
LN_EPS      = 1e-5


# ----------------------------- in-kernel helpers -----------------------------
def _ln(x, g, b):
    mu = jnp.mean(x, axis=-1, keepdims=True)
    var = jnp.mean(jnp.square(x - mu), axis=-1, keepdims=True)
    return (x - mu) * jax.lax.rsqrt(var + LN_EPS) * g + b


def _gelu(x):
    # TODO(synk): tanh-approx GELU (EUP tanh); swap to exact erf once Mosaic erf
    # lowering is confirmed (tiny numeric delta vs torch nn.GELU()).
    c = math.sqrt(2.0 / math.pi)
    return 0.5 * x * (1.0 + jnp.tanh(c * (x + 0.044715 * x * x * x)))


def _mm(x, w, b=None):
    y = jnp.dot(x, w, preferred_element_type=jnp.float32)
    if b is not None:
        y = y + b
    return y


# -------------------- fully fused per-batch-element kernel -------------------
def _point_transformer_kernel(depth, num_heads, g, n,
                              neigh_ref, cen_ref,
                              e_w1, e_b1, e_w2, e_b2, e_w3, e_b3, e_w4, e_b4,
                              cls_t_ref, cls_p_ref,
                              pe_w1, pe_b1, pe_w2, pe_b2,
                              n1_g, n1_b, qkv_w, qkv_b, proj_w, proj_b,
                              n2_g, n2_b, fc1_w, fc1_b, fc2_w, fc2_b,
                              nf_g, nf_b, h_w1, h_b1, h_w2, h_b2,
                              o_ref):
    """One batch element end-to-end.

    (g*n, 3) grouped points + (g, 3) centers -> (1, CLS) logits.
    Eval-mode BN is folded into the encoder conv weights on the host side;
    dropout / drop-path are eval-mode identities.
    """
    # ---------------- Encoder (mini PointNet) ----------------
    pts = neigh_ref[...]                                             # (g*n, 3)
    f1 = jnp.maximum(_mm(pts, e_w1[...], e_b1[...]), 0.0)            # Conv1d(3,128)+BN+ReLU
    f2 = _mm(f1, e_w2[...], e_b2[...])                               # (g*n, 256)
    c2 = f2.shape[-1]
    fg = jnp.max(f2.reshape(g, n, c2), axis=1, keepdims=True)        # per-group max (g,1,256)
    fg = jnp.broadcast_to(fg, (g, n, c2)).reshape(g * n, c2)
    # concat([global, local]) @ W3 done as a split matmul (avoids 512-lane concat)
    f3 = jnp.maximum(
        jnp.dot(fg, e_w3[0:c2, :], preferred_element_type=jnp.float32)
        + jnp.dot(f2, e_w3[c2:2 * c2, :], preferred_element_type=jnp.float32)
        + e_b3[...], 0.0)                                            # (g*n, 512)
    f4 = _mm(f3, e_w4[...], e_b4[...])                               # (g*n, D)
    D = f4.shape[-1]
    tokens = jnp.max(f4.reshape(g, n, D), axis=1)                    # (g, D)

    # ---------------- pos_embed: Linear(3,128) -> GELU -> Linear(128,D) ------
    cen = cen_ref[...]                                               # (g, 3)
    ph = _gelu(_mm(cen, pe_w1[...], pe_b1[...]))
    pos_tok = _mm(ph, pe_w2[...], pe_b2[...])                        # (g, D)

    x = jnp.concatenate([cls_t_ref[...], tokens], axis=0)            # (S, D), S = g+1
    pos = jnp.concatenate([cls_p_ref[...], pos_tok], axis=0)         # (S, D)

    # ---------------- transformer blocks:  x = block(x + pos) ----------------
    Dh = D // num_heads
    scale = Dh ** -0.5
    for d in range(depth):
        xi = x + pos
        h = _ln(xi, n1_g[d], n1_b[d])
        qkv = _mm(h, qkv_w[d], qkv_b[d])                             # (S, 3D)
        pw = proj_w[d]                                               # (D, D)
        attn = None
        for hd in range(num_heads):
            q = qkv[:, hd * Dh:(hd + 1) * Dh]
            k = qkv[:, D + hd * Dh:D + (hd + 1) * Dh]
            v = qkv[:, 2 * D + hd * Dh:2 * D + (hd + 1) * Dh]
            # q @ k^T without materializing a transpose.
            s = jax.lax.dot_general(q, k, (((1,), (1,)), ((), ())),
                                    preferred_element_type=jnp.float32) * scale
            s = s - jnp.max(s, axis=-1, keepdims=True)
            p = jnp.exp(s)
            p = p * pl.reciprocal(jnp.sum(p, axis=-1, keepdims=True), approx=True)
            o_h = jnp.dot(p, v, preferred_element_type=jnp.float32)  # (S, Dh)
            # projection folded per-head (avoids lane concat of 16-wide heads)
            contrib = jnp.dot(o_h, pw[hd * Dh:(hd + 1) * Dh, :],
                              preferred_element_type=jnp.float32)
            attn = contrib if attn is None else attn + contrib
        attn = attn + proj_b[d]
        x = xi + attn
        h2 = _ln(x, n2_g[d], n2_b[d])
        h2 = _gelu(_mm(h2, fc1_w[d], fc1_b[d]))                      # (S, 4D)
        h2 = _mm(h2, fc2_w[d], fc2_b[d])
        x = x + h2

    # ---------------- final norm, pooling, classification head ---------------
    x = _ln(x, nf_g[...], nf_b[...])                                 # (S, D)
    cls_f = x[0:1, :]                                                # (1, D)
    max_f = jnp.max(x[1:, :], axis=0, keepdims=True)                 # (1, D)
    # head Linear(2D,256) as two split matmuls (avoids lane concat), ReLU, Linear(256,CLS)
    hh = jnp.maximum(
        jnp.dot(cls_f, h_w1[0:D, :], preferred_element_type=jnp.float32)
        + jnp.dot(max_f, h_w1[D:2 * D, :], preferred_element_type=jnp.float32)
        + h_b1[...], 0.0)
    out = _mm(hh, h_w2[...], h_b2[...])                              # (1, CLS)
    o_ref[...] = out.astype(o_ref.dtype)


def point_transformer_pallas(neighborhood, center, params):
    """neighborhood: (B, G, N, 3), center: (B, G, 3) -> logits (B, CLS)."""
    B, G, N, _ = neighborhood.shape
    ep, pe, bl, head = (params["encoder"], params["pos_embed"],
                        params["blocks"], params["head"])
    D = TRANS_DIM
    CLS = head["w2"].shape[1]
    neigh = neighborhood.reshape(B, G * N, 3)

    def rep2(v):
        return v.reshape(1, -1)

    args = [
        neigh, center,
        ep["w1"], rep2(ep["b1"]), ep["w2"], rep2(ep["b2"]),
        ep["w3"], rep2(ep["b3"]), ep["w4"], rep2(ep["b4"]),
        params["cls_token"].reshape(1, D), params["cls_pos"].reshape(1, D),
        pe["w1"], rep2(pe["b1"]), pe["w2"], rep2(pe["b2"]),
        bl["n1_g"], bl["n1_b"], bl["qkv_w"], bl["qkv_b"],
        bl["proj_w"], bl["proj_b"], bl["n2_g"], bl["n2_b"],
        bl["fc1_w"], bl["fc1_b"], bl["fc2_w"], bl["fc2_b"],
        rep2(params["norm_g"]), rep2(params["norm_b"]),
        head["w1"], rep2(head["b1"]), head["w2"], rep2(head["b2"]),
    ]

    def full(a):
        nd = a.ndim
        return pl.BlockSpec(a.shape, lambda b, _n=nd: (0,) * _n)   # grid-invariant block

    in_specs = [pl.BlockSpec((None, G * N, 3), lambda b: (b, 0, 0)),
                pl.BlockSpec((None, G, 3), lambda b: (b, 0, 0))] + \
               [full(a) for a in args[2:]]

    out = pl.pallas_call(
        functools.partial(_point_transformer_kernel, DEPTH, NUM_HEADS, G, N),
        out_shape=jax.ShapeDtypeStruct((B, 1, CLS), jnp.float32),
        grid=(B,),
        in_specs=in_specs,
        out_specs=pl.BlockSpec((None, 1, CLS), lambda b: (b, 0, 0)),
        compiler_params=pltpu.CompilerParams(dimension_semantics=("parallel",)),
    )(*args)
    return out.reshape(B, CLS)


# ----------------------------- JAX glue (grouping) ---------------------------
def farthest_point_sample(xyz, npoint):
    # TODO(synk): FPS is sequential index chasing; kept in plain JAX.
    B, N, _ = xyz.shape

    def body(i, carry):
        idxs, dist, farthest = carry
        idxs = idxs.at[:, i].set(farthest)
        centroid = jax.vmap(lambda p, j: p[j])(xyz, farthest)[:, None, :]   # (B,1,3)
        d = jnp.sum((xyz - centroid) ** 2, axis=-1)                         # (B,N)
        dist = jnp.minimum(dist, d)
        farthest = jnp.argmax(dist, axis=-1).astype(jnp.int32)
        return idxs, dist, farthest

    idxs0 = jnp.zeros((B, npoint), jnp.int32)
    dist0 = jnp.full((B, N), 1e10, jnp.float32)
    far0 = jnp.zeros((B,), jnp.int32)
    idxs, _, _ = jax.lax.fori_loop(0, npoint, body, (idxs0, dist0, far0))
    return idxs


def group_divider(pts):
    # TODO(synk): KNN gather is index-chasing; no clean Pallas tile pattern, kept in JAX.
    B, N, _ = pts.shape
    fps_idx = farthest_point_sample(pts, NUM_GROUP)                     # (B, G)
    center = jax.vmap(lambda p, i: p[i])(pts, fps_idx)                  # (B, G, 3)
    d2 = jnp.sum((center[:, :, None, :] - pts[:, None, :, :]) ** 2, axis=-1)  # (B, G, N)
    _, knn_idx = jax.lax.top_k(-d2, GROUP_SIZE)                         # (B, G, k)
    neighborhood = jax.vmap(lambda p, i: p[i])(pts, knn_idx)            # (B, G, k, 3)
    neighborhood = neighborhood - center[:, :, None, :]
    return neighborhood, center


def point_transformer_forward(params, pts):
    neighborhood, center = group_divider(pts)                           # (B,G,k,3), (B,G,3)
    # reduce_dim: nn.Identity() (encoder_dims == trans_dim)
    return point_transformer_pallas(neighborhood, center, params)       # (B, CLS_DIM)


# ----------------------------- parameter init --------------------------------
def init_params(key):
    ks = iter(jax.random.split(key, 64))

    def w(shape, s=0.02):
        return (s * jax.random.normal(next(ks), shape)).astype(jnp.float32)

    zeros = lambda shape: jnp.zeros(shape, jnp.float32)
    ones = lambda shape: jnp.ones(shape, jnp.float32)
    D = TRANS_DIM

    # Encoder: Conv1d(3,128)+BN+ReLU+Conv1d(128,256); Conv1d(512,512)+BN+ReLU+Conv1d(512,C)
    # Eval-mode BN (running_mean=0, running_var=1) folded into the preceding conv.
    # NOTE: loading a real checkpoint would require folding the actual running stats.
    w1, b1 = w((3, 128)), w((128,))
    g1, be1 = ones((128,)) + w((128,)), w((128,))
    w2, b2 = w((128, 256)), w((256,))
    w3, b3 = w((512, 512)), w((512,))
    g3, be3 = ones((512,)) + w((512,)), w((512,))
    w4, b4 = w((512, ENCODER_DIM)), w((ENCODER_DIM,))
    s1 = g1 / jnp.sqrt(1.0 + BN_EPS)
    s3 = g3 / jnp.sqrt(1.0 + BN_EPS)
    encoder = dict(w1=w1 * s1[None, :], b1=b1 * s1 + be1,
                   w2=w2, b2=b2,
                   w3=w3 * s3[None, :], b3=b3 * s3 + be3,
                   w4=w4, b4=b4)

    pos_embed = dict(w1=w((3, 128)), b1=w((128,)),
                     w2=w((128, D)), b2=w((D,)))

    # Transformer block weights, stacked along depth (one fused kernel consumes them).
    blocks = dict(
        n1_g=jnp.ones((DEPTH, 1, D), jnp.float32),
        n1_b=jnp.zeros((DEPTH, 1, D), jnp.float32),
        qkv_w=w((DEPTH, D, 3 * D)),
        qkv_b=jnp.zeros((DEPTH, 1, 3 * D), jnp.float32),     # qkv_bias=False
        proj_w=w((DEPTH, D, D)),
        proj_b=w((DEPTH, 1, D)),
        n2_g=jnp.ones((DEPTH, 1, D), jnp.float32),
        n2_b=jnp.zeros((DEPTH, 1, D), jnp.float32),
        fc1_w=w((DEPTH, D, MLP_RATIO * D)),
        fc1_b=w((DEPTH, 1, MLP_RATIO * D)),
        fc2_w=w((DEPTH, MLP_RATIO * D, D)),
        fc2_b=w((DEPTH, 1, D)))

    head = dict(w1=w((2 * D, 256)), b1=w((256,)),
                w2=w((256, CLS_DIM)), b2=w((CLS_DIM,)))

    return dict(cls_token=jnp.zeros((1, 1, D), jnp.float32),    # nn.Parameter zeros
                cls_pos=jax.random.normal(next(ks), (1, 1, D), jnp.float32),
                encoder=encoder, pos_embed=pos_embed, blocks=blocks,
                norm_g=ones((D,)), norm_b=zeros((D,)),
                head=head)


# ----------------------------- main -------------------------------------------
if __name__ == "__main__":
    key = jax.random.PRNGKey(0)
    pkey, xkey = jax.random.split(key)
    params = init_params(pkey)

    # point cloud input: (batch=2, n_points=64, xyz=3)
    pts = jax.random.normal(xkey, (2, 64, 3), dtype=jnp.float32)

    fwd = jax.jit(point_transformer_forward)
    out = fwd(params, pts)
    jax.block_until_ready(out)
    assert out.shape == (2, CLS_DIM) and out.dtype == jnp.float32
    assert bool(jnp.all(jnp.isfinite(out)))
    print("KERNEL_OK")
</pallas_src>

<mosaic_0001>
module attributes {stable_mosaic.version = 11 : i64} {
  func.func @_point_transformer_kernel(%arg0: i32, %arg1: memref<1x64x3xf32, #tpu.memory_space<vmem>>, %arg2: memref<1x8x3xf32, #tpu.memory_space<vmem>>, %arg3: memref<3x128xf32, #tpu.memory_space<vmem>>, %arg4: memref<1x128xf32, #tpu.memory_space<vmem>>, %arg5: memref<128x256xf32, #tpu.memory_space<vmem>>, %arg6: memref<1x256xf32, #tpu.memory_space<vmem>>, %arg7: memref<512x512xf32, #tpu.memory_space<vmem>>, %arg8: memref<1x512xf32, #tpu.memory_space<vmem>>, %arg9: memref<512x32xf32, #tpu.memory_space<vmem>>, %arg10: memref<1x32xf32, #tpu.memory_space<vmem>>, %arg11: memref<1x32xf32, #tpu.memory_space<vmem>>, %arg12: memref<1x32xf32, #tpu.memory_space<vmem>>, %arg13: memref<3x128xf32, #tpu.memory_space<vmem>>, %arg14: memref<1x128xf32, #tpu.memory_space<vmem>>, %arg15: memref<128x32xf32, #tpu.memory_space<vmem>>, %arg16: memref<1x32xf32, #tpu.memory_space<vmem>>, %arg17: memref<2x1x32xf32, #tpu.memory_space<vmem>>, %arg18: memref<2x1x32xf32, #tpu.memory_space<vmem>>, %arg19: memref<2x32x96xf32, #tpu.memory_space<vmem>>, %arg20: memref<2x1x96xf32, #tpu.memory_space<vmem>>, %arg21: memref<2x32x32xf32, #tpu.memory_space<vmem>>, %arg22: memref<2x1x32xf32, #tpu.memory_space<vmem>>, %arg23: memref<2x1x32xf32, #tpu.memory_space<vmem>>, %arg24: memref<2x1x32xf32, #tpu.memory_space<vmem>>, %arg25: memref<2x32x128xf32, #tpu.memory_space<vmem>>, %arg26: memref<2x1x128xf32, #tpu.memory_space<vmem>>, %arg27: memref<2x128x32xf32, #tpu.memory_space<vmem>>, %arg28: memref<2x1x32xf32, #tpu.memory_space<vmem>>, %arg29: memref<1x32xf32, #tpu.memory_space<vmem>>, %arg30: memref<1x32xf32, #tpu.memory_space<vmem>>, %arg31: memref<64x256xf32, #tpu.memory_space<vmem>>, %arg32: memref<1x256xf32, #tpu.memory_space<vmem>>, %arg33: memref<256x8xf32, #tpu.memory_space<vmem>>, %arg34: memref<1x8xf32, #tpu.memory_space<vmem>>, %arg35: memref<1x1x8xf32, #tpu.memory_space<vmem>>) attributes {dimension_semantics = [#tpu.dimension_semantics<parallel>], iteration_bounds = array<i64: 2>, scalar_prefetch = 0 : i64, scratch_operands = 0 : i64, tpu.core_type = #tpu.core_type<tc>, window_params = [{transform_indices = @transform_0, window_bounds = array<i64: 1, 64, 3>}, {transform_indices = @transform_1, window_bounds = array<i64: 1, 8, 3>}, {pipeline_mode = #tpu.pipeline_mode<synchronous>, transform_indices = @transform_2, window_bounds = array<i64: 3, 128>}, {pipeline_mode = #tpu.pipeline_mode<synchronous>, transform_indices = @transform_3, window_bounds = array<i64: 1, 128>}, {pipeline_mode = #tpu.pipeline_mode<synchronous>, transform_indices = @transform_4, window_bounds = array<i64: 128, 256>}, {pipeline_mode = #tpu.pipeline_mode<synchronous>, transform_indices = @transform_5, window_bounds = array<i64: 1, 256>}, {pipeline_mode = #tpu.pipeline_mode<synchronous>, transform_indices = @transform_6, window_bounds = array<i64: 512, 512>}, {pipeline_mode = #tpu.pipeline_mode<synchronous>, transform_indices = @transform_7, window_bounds = array<i64: 1, 512>}, {pipeline_mode = #tpu.pipeline_mode<synchronous>, transform_indices = @transform_8, window_bounds = array<i64: 512, 32>}, {pipeline_mode = #tpu.pipeline_mode<synchronous>, transform_indices = @transform_9, window_bounds = array<i64: 1, 32>}, {pipeline_mode = #tpu.pipeline_mode<synchronous>, transform_indices = @transform_10, window_bounds = array<i64: 1, 32>}, {pipeline_mode = #tpu.pipeline_mode<synchronous>, transform_indices = @transform_11, window_bounds = array<i64: 1, 32>}, {pipeline_mode = #tpu.pipeline_mode<synchronous>, transform_indices = @transform_12, window_bounds = array<i64: 3, 128>}, {pipeline_mode = #tpu.pipeline_mode<synchronous>, transform_indices = @transform_13, window_bounds = array<i64: 1, 128>}, {pipeline_mode = #tpu.pipeline_mode<synchronous>, transform_indices = @transform_14, window_bounds = array<i64: 128, 32>}, {pipeline_mode = #tpu.pipeline_mode<synchronous>, transform_indices = @transform_15, window_bounds = array<i64: 1, 32>}, {pipeline_mode = #tpu.pipeline_mode<synchronous>, transform_indices = @transform_16, window_bounds = array<i64: 2, 1, 32>}, {pipeline_mode = #tpu.pipeline_mode<synchronous>, transform_indices = @transform_17, window_bounds = array<i64: 2, 1, 32>}, {pipeline_mode = #tpu.pipeline_mode<synchronous>, transform_indices = @transform_18, window_bounds = array<i64: 2, 32, 96>}, {pipeline_mode = #tpu.pipeline_mode<synchronous>, transform_indices = @transform_19, window_bounds = array<i64: 2, 1, 96>}, {pipeline_mode = #tpu.pipeline_mode<synchronous>, transform_indices = @transform_20, window_bounds = array<i64: 2, 32, 32>}, {pipeline_mode = #tpu.pipeline_mode<synchronous>, transform_indices = @transform_21, window_bounds = array<i64: 2, 1, 32>}, {pipeline_mode = #tpu.pipeline_mode<synchronous>, transform_indices = @transform_22, window_bounds = array<i64: 2, 1, 32>}, {pipeline_mode = #tpu.pipeline_mode<synchronous>, transform_indices = @transform_23, window_bounds = array<i64: 2, 1, 32>}, {pipeline_mode = #tpu.pipeline_mode<synchronous>, transform_indices = @transform_24, window_bounds = array<i64: 2, 32, 128>}, {pipeline_mode = #tpu.pipeline_mode<synchronous>, transform_indices = @transform_25, window_bounds = array<i64: 2, 1, 128>}, {pipeline_mode = #tpu.pipeline_mode<synchronous>, transform_indices = @transform_26, window_bounds = array<i64: 2, 128, 32>}, {pipeline_mode = #tpu.pipeline_mode<synchronous>, transform_indices = @transform_27, window_bounds = array<i64: 2, 1, 32>}, {pipeline_mode = #tpu.pipeline_mode<synchronous>, transform_indices = @transform_28, window_bounds = array<i64: 1, 32>}, {pipeline_mode = #tpu.pipeline_mode<synchronous>, transform_indices = @transform_29, window_bounds = array<i64: 1, 32>}, {pipeline_mode = #tpu.pipeline_mode<synchronous>, transform_indices = @transform_30, window_bounds = array<i64: 64, 256>}, {pipeline_mode = #tpu.pipeline_mode<synchronous>, transform_indices = @transform_31, window_bounds = array<i64: 1, 256>}, {pipeline_mode = #tpu.pipeline_mode<synchronous>, transform_indices = @transform_32, window_bounds = array<i64: 256, 8>}, {pipeline_mode = #tpu.pipeline_mode<synchronous>, transform_indices = @transform_33, window_bounds = array<i64: 1, 8>}, {transform_indices = @transform_34, window_bounds = array<i64: 1, 1, 8>}]} {
    %c0 = arith.constant 0 : index
    %c0_0 = arith.constant 0 : index
    %c0_1 = arith.constant 0 : index
    %0 = vector.load %arg1[%c0, %c0_0, %c0_1] : memref<1x64x3xf32, #tpu.memory_space<vmem>>, vector<1x64x3xf32>
    %1 = vector.shape_cast %0 : vector<1x64x3xf32> to vector<64x3xf32>
    %c0_2 = arith.constant 0 : index
    %c0_3 = arith.constant 0 : index
    %2 = vector.load %arg3[%c0_2, %c0_3] : memref<3x128xf32, #tpu.memory_space<vmem>>, vector<3x128xf32>
    %c0_4 = arith.constant 0 : index
    %c0_5 = arith.constant 0 : index
    %3 = vector.load %arg4[%c0_4, %c0_5] : memref<1x128xf32, #tpu.memory_space<vmem>>, vector<1x128xf32>
    %cst = arith.constant dense<0.000000e+00> : vector<64x128xf32>
    %4 = tpu.matmul %1, %2, %cst {dimension_numbers = #tpu.dot_dimension_numbers<[1], [0], [0], [1], [0, 0, 1, 1], [], []>} : vector<64x3xf32>, vector<3x128xf32>, vector<64x128xf32> -> vector<64x128xf32>
    %5 = vector.broadcast %3 : vector<1x128xf32> to vector<64x128xf32>
    %6 = arith.addf %4, %5 : vector<64x128xf32>
    %cst_6 = arith.constant 0.000000e+00 : f32
    %7 = vector.broadcast %cst_6 : f32 to vector<64x128xf32>
    %8 = arith.maximumf %6, %7 : vector<64x128xf32>
    %c0_7 = arith.constant 0 : index
    %c0_8 = arith.constant 0 : index
    %9 = vector.load %arg5[%c0_7, %c0_8] : memref<128x256xf32, #tpu.memory_space<vmem>>, vector<128x256xf32>
    %c0_9 = arith.constant 0 : index
    %c0_10 = arith.constant 0 : index
    %10 = vector.load %arg6[%c0_9, %c0_10] : memref<1x256xf32, #tpu.memory_space<vmem>>, vector<1x256xf32>
    %cst_11 = arith.constant dense<0.000000e+00> : vector<64x256xf32>
    %11 = tpu.matmul %8, %9, %cst_11 {dimension_numbers = #tpu.dot_dimension_numbers<[1], [0], [0], [1], [0, 0, 1, 1], [], []>} : vector<64x128xf32>, vector<128x256xf32>, vector<64x256xf32> -> vector<64x256xf32>
    %12 = vector.broadcast %10 : vector<1x256xf32> to vector<64x256xf32>
    %13 = arith.addf %11, %12 : vector<64x256xf32>
    %14 = vector.shape_cast %13 : vector<64x256xf32> to vector<8x8x256xf32>
    %cst_12 = arith.constant dense<0xFF800000> : vector<8x256xf32>
    %15 = vector.multi_reduction <maximumf>, %14, %cst_12 [1] : vector<8x8x256xf32> to vector<8x256xf32>
    %16 = vector.shape_cast %15 : vector<8x256xf32> to vector<8x1x256xf32>
    %17 = vector.shape_cast %16 : vector<8x1x256xf32> to vector<8x1x256xf32>
    %18 = vector.broadcast %17 : vector<8x1x256xf32> to vector<8x8x256xf32>
    %19 = vector.shape_cast %18 : vector<8x8x256xf32> to vector<64x256xf32>
    %c0_13 = arith.constant 0 : index
    %c0_14 = arith.constant 0 : index
    %20 = vector.load %arg7[%c0_13, %c0_14] : memref<512x512xf32, #tpu.memory_space<vmem>>, vector<256x512xf32>
    %cst_15 = arith.constant dense<0.000000e+00> : vector<64x512xf32>
    %21 = tpu.matmul %19, %20, %cst_15 {dimension_numbers = #tpu.dot_dimension_numbers<[1], [0], [0], [1], [0, 0, 1, 1], [], []>} : vector<64x256xf32>, vector<256x512xf32>, vector<64x512xf32> -> vector<64x512xf32>
    %c256 = arith.constant 256 : index
    %c0_16 = arith.constant 0 : index
    %22 = vector.load %arg7[%c256, %c0_16] : memref<512x512xf32, #tpu.memory_space<vmem>>, vector<256x512xf32>
    %cst_17 = arith.constant dense<0.000000e+00> : vector<64x512xf32>
    %23 = tpu.matmul %13, %22, %cst_17 {dimension_numbers = #tpu.dot_dimension_numbers<[1], [0], [0], [1], [0, 0, 1, 1], [], []>} : vector<64x256xf32>, vector<256x512xf32>, vector<64x512xf32> -> vector<64x512xf32>
    %24 = arith.addf %21, %23 : vector<64x512xf32>
    %c0_18 = arith.constant 0 : index
    %c0_19 = arith.constant 0 : index
    %25 = vector.load %arg8[%c0_18, %c0_19] : memref<1x512xf32, #tpu.memory_space<vmem>>, vector<1x512xf32>
    %26 = vector.broadcast %25 : vector<1x512xf32> to vector<64x512xf32>
    %27 = arith.addf %24, %26 : vector<64x512xf32>
    %cst_20 = arith.constant 0.000000e+00 : f32
    %28 = vector.broadcast %cst_20 : f32 to vector<64x512xf32>
    %29 = arith.maximumf %27, %28 : vector<64x512xf32>
    %c0_21 = arith.constant 0 : index
    %c0_22 = arith.constant 0 : index
    %30 = vector.load %arg9[%c0_21, %c0_22] : memref<512x32xf32, #tpu.memory_space<vmem>>, vector<512x32xf32>
    %c0_23 = arith.constant 0 : index
    %c0_24 = arith.constant 0 : index
    %31 = vector.load %arg10[%c0_23, %c0_24] : memref<1x32xf32, #tpu.memory_space<vmem>>, vector<1x32xf32>
    %cst_25 = arith.constant dense<0.000000e+00> : vector<64x32xf32>
    %32 = tpu.matmul %29, %30, %cst_25 {dimension_numbers = #tpu.dot_dimension_numbers<[1], [0], [0], [1], [0, 0, 1, 1], [], []>} : vector<64x512xf32>, vector<512x32xf32>, vector<64x32xf32> -> vector<64x32xf32>
    %33 = vector.broadcast %31 : vector<1x32xf32> to vector<64x32xf32>
    %34 = arith.addf %32, %33 : vector<64x32xf32>
    %35 = vector.shape_cast %34 : vector<64x32xf32> to vector<8x8x32xf32>
    %cst_26 = arith.constant dense<0xFF800000> : vector<8x32xf32>
    %36 = vector.multi_reduction <maximumf>, %35, %cst_26 [1] : vector<8x8x32xf32> to vector<8x32xf32>
    %c0_27 = arith.constant 0 : index
    %c0_28 = arith.constant 0 : index
    %c0_29 = arith.constant 0 : index
    %37 = vector.load %arg2[%c0_27, %c0_28, %c0_29] : memref<1x8x3xf32, #tpu.memory_space<vmem>>, vector<1x8x3xf32>
    %38 = vector.shape_cast %37 : vector<1x8x3xf32> to vector<8x3xf32>
    %c0_30 = arith.constant 0 : index
    %c0_31 = arith.constant 0 : index
    %39 = vector.load %arg13[%c0_30, %c0_31] : memref<3x128xf32, #tpu.memory_space<vmem>>, vector<3x128xf32>
    %c0_32 = arith.constant 0 : index
    %c0_33 = arith.constant 0 : index
    %40 = vector.load %arg14[%c0_32, %c0_33] : memref<1x128xf32, #tpu.memory_space<vmem>>, vector<1x128xf32>
    %cst_34 = arith.constant dense<0.000000e+00> : vector<8x128xf32>
    %41 = tpu.matmul %38, %39, %cst_34 {dimension_numbers = #tpu.dot_dimension_numbers<[1], [0], [0], [1], [0, 0, 1, 1], [], []>} : vector<8x3xf32>, vector<3x128xf32>, vector<8x128xf32> -> vector<8x128xf32>
    %42 = vector.broadcast %40 : vector<1x128xf32> to vector<8x128xf32>
    %43 = arith.addf %41, %42 : vector<8x128xf32>
    %cst_35 = arith.constant 5.000000e-01 : f32
    %44 = vector.broadcast %cst_35 : f32 to vector<8x128xf32>
    %45 = arith.mulf %44, %43 : vector<8x128xf32>
    %cst_36 = arith.constant 4.471500e-02 : f32
    %46 = vector.broadcast %cst_36 : f32 to vector<8x128xf32>
    %47 = arith.mulf %46, %43 : vector<8x128xf32>
    %48 = arith.mulf %47, %43 : vector<8x128xf32>
    %49 = arith.mulf %48, %43 : vector<8x128xf32>
    %50 = arith.addf %43, %49 : vector<8x128xf32>
    %cst_37 = arith.constant 0.797884583 : f32
    %51 = vector.broadcast %cst_37 : f32 to vector<8x128xf32>
    %52 = arith.mulf %51, %50 : vector<8x128xf32>
    %53 = math.tanh %52 : vector<8x128xf32>
    %cst_38 = arith.constant 1.000000e+00 : f32
    %54 = vector.broadcast %cst_38 : f32 to vector<8x128xf32>
    %55 = arith.addf %54, %53 : vector<8x128xf32>
    %56 = arith.mulf %45, %55 : vector<8x128xf32>
    %c0_39 = arith.constant 0 : index
    %c0_40 = arith.constant 0 : index
    %57 = vector.load %arg15[%c0_39, %c0_40] : memref<128x32xf32, #tpu.memory_space<vmem>>, vector<128x32xf32>
    %c0_41 = arith.constant 0 : index
    %c0_42 = arith.constant 0 : index
    %58 = vector.load %arg16[%c0_41, %c0_42] : memref<1x32xf32, #tpu.memory_space<vmem>>, vector<1x32xf32>
    %cst_43 = arith.constant dense<0.000000e+00> : vector<8x32xf32>
    %59 = tpu.matmul %56, %57, %cst_43 {dimension_numbers = #tpu.dot_dimension_numbers<[1], [0], [0], [1], [0, 0, 1, 1], [], []>} : vector<8x128xf32>, vector<128x32xf32>, vector<8x32xf32> -> vector<8x32xf32>
    %60 = vector.broadcast %58 : vector<1x32xf32> to vector<8x32xf32>
    %61 = arith.addf %59, %60 : vector<8x32xf32>
    %c0_44 = arith.constant 0 : index
    %c0_45 = arith.constant 0 : index
    %62 = vector.load %arg11[%c0_44, %c0_45] : memref<1x32xf32, #tpu.memory_space<vmem>>, vector<1x32xf32>
    %63 = tpu.concatenate %62, %36 in 0 : vector<1x32xf32>, vector<8x32xf32> -> vector<9x32xf32>
    %c0_46 = arith.constant 0 : index
    %c0_47 = arith.constant 0 : index
    %64 = vector.load %arg12[%c0_46, %c0_47] : memref<1x32xf32, #tpu.memory_space<vmem>>, vector<1x32xf32>
    %65 = tpu.concatenate %64, %61 in 0 : vector<1x32xf32>, vector<8x32xf32> -> vector<9x32xf32>
    %66 = arith.addf %63, %65 : vector<9x32xf32>
    %c0_48 = arith.constant 0 : index
    %c0_49 = arith.constant 0 : index
    %c0_50 = arith.constant 0 : index
    %67 = vector.load %arg17[%c0_48, %c0_49, %c0_50] : memref<2x1x32xf32, #tpu.memory_space<vmem>>, vector<1x1x32xf32>
    %68 = vector.shape_cast %67 : vector<1x1x32xf32> to vector<1x32xf32>
    %c0_51 = arith.constant 0 : index
    %c0_52 = arith.constant 0 : index
    %c0_53 = arith.constant 0 : index
    %69 = vector.load %arg18[%c0_51, %c0_52, %c0_53] : memref<2x1x32xf32, #tpu.memory_space<vmem>>, vector<1x1x32xf32>
    %70 = vector.shape_cast %69 : vector<1x1x32xf32> to vector<1x32xf32>
    %cst_54 = arith.constant dense<0.000000e+00> : vector<9xf32>
    %71 = vector.multi_reduction <add>, %66, %cst_54 [1] : vector<9x32xf32> to vector<9xf32>
    %72 = vector.shape_cast %71 : vector<9xf32> to vector<9x1xf32>
    %cst_55 = arith.constant 3.200000e+01 : f32
    %73 = vector.broadcast %cst_55 : f32 to vector<9x1xf32>
    %74 = arith.divf %72, %73 : vector<9x1xf32>
    %75 = vector.broadcast %74 : vector<9x1xf32> to vector<9x32xf32>
    %76 = arith.subf %66, %75 : vector<9x32xf32>
    %77 = arith.mulf %76, %76 : vector<9x32xf32>
    %cst_56 = arith.constant dense<0.000000e+00> : vector<9xf32>
    %78 = vector.multi_reduction <add>, %77, %cst_56 [1] : vector<9x32xf32> to vector<9xf32>
    %79 = vector.shape_cast %78 : vector<9xf32> to vector<9x1xf32>
    %cst_57 = arith.constant 3.200000e+01 : f32
    %80 = vector.broadcast %cst_57 : f32 to vector<9x1xf32>
    %81 = arith.divf %79, %80 : vector<9x1xf32>
    %82 = vector.broadcast %74 : vector<9x1xf32> to vector<9x32xf32>
    %83 = arith.subf %66, %82 : vector<9x32xf32>
    %cst_58 = arith.constant 9.99999974E-6 : f32
    %84 = vector.broadcast %cst_58 : f32 to vector<9x1xf32>
    %85 = arith.addf %81, %84 : vector<9x1xf32>
    %86 = math.rsqrt %85 : vector<9x1xf32>
    %87 = vector.broadcast %86 : vector<9x1xf32> to vector<9x32xf32>
    %88 = arith.mulf %83, %87 : vector<9x32xf32>
    %89 = vector.broadcast %68 : vector<1x32xf32> to vector<9x32xf32>
    %90 = arith.mulf %88, %89 : vector<9x32xf32>
    %91 = vector.broadcast %70 : vector<1x32xf32> to vector<9x32xf32>
    %92 = arith.addf %90, %91 : vector<9x32xf32>
    %c0_59 = arith.constant 0 : index
    %c0_60 = arith.constant 0 : index
    %c0_61 = arith.constant 0 : index
    %93 = vector.load %arg19[%c0_59, %c0_60, %c0_61] : memref<2x32x96xf32, #tpu.memory_space<vmem>>, vector<1x32x96xf32>
    %94 = vector.shape_cast %93 : vector<1x32x96xf32> to vector<32x96xf32>
    %c0_62 = arith.constant 0 : index
    %c0_63 = arith.constant 0 : index
    %c0_64 = arith.constant 0 : index
    %95 = vector.load %arg20[%c0_62, %c0_63, %c0_64] : memref<2x1x96xf32, #tpu.memory_space<vmem>>, vector<1x1x96xf32>
    %96 = vector.shape_cast %95 : vector<1x1x96xf32> to vector<1x96xf32>
    %cst_65 = arith.constant dense<0.000000e+00> : vector<9x96xf32>
    %97 = tpu.matmul %92, %94, %cst_65 {dimension_numbers = #tpu.dot_dimension_numbers<[1], [0], [0], [1], [0, 0, 1, 1], [], []>} : vector<9x32xf32>, vector<32x96xf32>, vector<9x96xf32> -> vector<9x96xf32>
    %98 = vector.broadcast %96 : vector<1x96xf32> to vector<9x96xf32>
    %99 = arith.addf %97, %98 : vector<9x96xf32>
    %c0_66 = arith.constant 0 : index
    %c0_67 = arith.constant 0 : index
    %c0_68 = arith.constant 0 : index
    %100 = vector.load %arg21[%c0_66, %c0_67, %c0_68] : memref<2x32x32xf32, #tpu.memory_space<vmem>>, vector<1x32x32xf32>
    %101 = vector.shape_cast %100 : vector<1x32x32xf32> to vector<32x32xf32>
    %102 = vector.extract_strided_slice %99 {offsets = [0, 0], sizes = [9, 16], strides = [1, 1]} : vector<9x96xf32> to vector<9x16xf32>
    %103 = vector.extract_strided_slice %99 {offsets = [0, 32], sizes = [9, 16], strides = [1, 1]} : vector<9x96xf32> to vector<9x16xf32>
    %104 = vector.extract_strided_slice %99 {offsets = [0, 64], sizes = [9, 16], strides = [1, 1]} : vector<9x96xf32> to vector<9x16xf32>
    %cst_69 = arith.constant dense<0.000000e+00> : vector<9x9xf32>
    %105 = tpu.matmul %102, %103, %cst_69 {dimension_numbers = #tpu.dot_dimension_numbers<[1], [1], [0], [0], [0, 0, 1, 0], [], []>} : vector<9x16xf32>, vector<9x16xf32>, vector<9x9xf32> -> vector<9x9xf32>
    %cst_70 = arith.constant 2.500000e-01 : f32
    %106 = vector.broadcast %cst_70 : f32 to vector<9x9xf32>
    %107 = arith.mulf %105, %106 : vector<9x9xf32>
    %cst_71 = arith.constant dense<0xFF800000> : vector<9xf32>
    %108 = vector.multi_reduction <maximumf>, %107, %cst_71 [1] : vector<9x9xf32> to vector<9xf32>
    %109 = vector.shape_cast %108 : vector<9xf32> to vector<9x1xf32>
    %110 = vector.broadcast %109 : vector<9x1xf32> to vector<9x9xf32>
    %111 = arith.subf %107, %110 : vector<9x9xf32>
    %112 = math.exp %111 : vector<9x9xf32>
    %cst_72 = arith.constant dense<0.000000e+00> : vector<9xf32>
    %113 = vector.multi_reduction <add>, %112, %cst_72 [1] : vector<9x9xf32> to vector<9xf32>
    %114 = vector.shape_cast %113 : vector<9xf32> to vector<9x1xf32>
    %115 = tpu.reciprocal %114 {approx = true} : vector<9x1xf32> -> vector<9x1xf32>
    %116 = vector.broadcast %115 : vector<9x1xf32> to vector<9x9xf32>
    %117 = arith.mulf %112, %116 : vector<9x9xf32>
    %cst_73 = arith.constant dense<0.000000e+00> : vector<9x16xf32>
    %118 = tpu.matmul %117, %104, %cst_73 {dimension_numbers = #tpu.dot_dimension_numbers<[1], [0], [0], [1], [0, 0, 1, 1], [], []>} : vector<9x9xf32>, vector<9x16xf32>, vector<9x16xf32> -> vector<9x16xf32>
    %119 = vector.extract_strided_slice %101 {offsets = [0, 0], sizes = [16, 32], strides = [1, 1]} : vector<32x32xf32> to vector<16x32xf32>
    %cst_74 = arith.constant dense<0.000000e+00> : vector<9x32xf32>
    %120 = tpu.matmul %118, %119, %cst_74 {dimension_numbers = #tpu.dot_dimension_numbers<[1], [0], [0], [1], [0, 0, 1, 1], [], []>} : vector<9x16xf32>, vector<16x32xf32>, vector<9x32xf32> -> vector<9x32xf32>
    %121 = vector.extract_strided_slice %99 {offsets = [0, 16], sizes = [9, 16], strides = [1, 1]} : vector<9x96xf32> to vector<9x16xf32>
    %122 = vector.extract_strided_slice %99 {offsets = [0, 48], sizes = [9, 16], strides = [1, 1]} : vector<9x96xf32> to vector<9x16xf32>
    %123 = vector.extract_strided_slice %99 {offsets = [0, 80], sizes = [9, 16], strides = [1, 1]} : vector<9x96xf32> to vector<9x16xf32>
    %cst_75 = arith.constant dense<0.000000e+00> : vector<9x9xf32>
    %124 = tpu.matmul %121, %122, %cst_75 {dimension_numbers = #tpu.dot_dimension_numbers<[1], [1], [0], [0], [0, 0, 1, 0], [], []>} : vector<9x16xf32>, vector<9x16xf32>, vector<9x9xf32> -> vector<9x9xf32>
    %cst_76 = arith.constant 2.500000e-01 : f32
    %125 = vector.broadcast %cst_76 : f32 to vector<9x9xf32>
    %126 = arith.mulf %124, %125 : vector<9x9xf32>
    %cst_77 = arith.constant dense<0xFF800000> : vector<9xf32>
    %127 = vector.multi_reduction <maximumf>, %126, %cst_77 [1] : vector<9x9xf32> to vector<9xf32>
    %128 = vector.shape_cast %127 : vector<9xf32> to vector<9x1xf32>
    %129 = vector.broadcast %128 : vector<9x1xf32> to vector<9x9xf32>
    %130 = arith.subf %126, %129 : vector<9x9xf32>
    %131 = math.exp %130 : vector<9x9xf32>
    %cst_78 = arith.constant dense<0.000000e+00> : vector<9xf32>
    %132 = vector.multi_reduction <add>, %131, %cst_78 [1] : vector<9x9xf32> to vector<9xf32>
    %133 = vector.shape_cast %132 : vector<9xf32> to vector<9x1xf32>
    %134 = tpu.reciprocal %133 {approx = true} : vector<9x1xf32> -> vector<9x1xf32>
    %135 = vector.broadcast %134 : vector<9x1xf32> to vector<9x9xf32>
    %136 = arith.mulf %131, %135 : vector<9x9xf32>
    %cst_79 = arith.constant dense<0.000000e+00> : vector<9x16xf32>
    %137 = tpu.matmul %136, %123, %cst_79 {dimension_numbers = #tpu.dot_dimension_numbers<[1], [0], [0], [1], [0, 0, 1, 1], [], []>} : vector<9x9xf32>, vector<9x16xf32>, vector<9x16xf32> -> vector<9x16xf32>
    %138 = vector.extract_strided_slice %101 {offsets = [16, 0], sizes = [16, 32], strides = [1, 1]} : vector<32x32xf32> to vector<16x32xf32>
    %cst_80 = arith.constant dense<0.000000e+00> : vector<9x32xf32>
    %139 = tpu.matmul %137, %138, %cst_80 {dimension_numbers = #tpu.dot_dimension_numbers<[1], [0], [0], [1], [0, 0, 1, 1], [], []>} : vector<9x16xf32>, vector<16x32xf32>, vector<9x32xf32> -> vector<9x32xf32>
    %140 = arith.addf %120, %139 : vector<9x32xf32>
    %c0_81 = arith.constant 0 : index
    %c0_82 = arith.constant 0 : index
    %c0_83 = arith.constant 0 : index
    %141 = vector.load %arg22[%c0_81, %c0_82, %c0_83] : memref<2x1x32xf32, #tpu.memory_space<vmem>>, vector<1x1x32xf32>
    %142 = vector.shape_cast %141 : vector<1x1x32xf32> to vector<1x32xf32>
    %143 = vector.broadcast %142 : vector<1x32xf32> to vector<9x32xf32>
    %144 = arith.addf %140, %143 : vector<9x32xf32>
    %145 = arith.addf %66, %144 : vector<9x32xf32>
    %c0_84 = arith.constant 0 : index
    %c0_85 = arith.constant 0 : index
    %c0_86 = arith.constant 0 : index
    %146 = vector.load %arg23[%c0_84, %c0_85, %c0_86] : memref<2x1x32xf32, #tpu.memory_space<vmem>>, vector<1x1x32xf32>
    %147 = vector.shape_cast %146 : vector<1x1x32xf32> to vector<1x32xf32>
    %c0_87 = arith.constant 0 : index
    %c0_88 = arith.constant 0 : index
    %c0_89 = arith.constant 0 : index
    %148 = vector.load %arg24[%c0_87, %c0_88, %c0_89] : memref<2x1x32xf32, #tpu.memory_space<vmem>>, vector<1x1x32xf32>
    %149 = vector.shape_cast %148 : vector<1x1x32xf32> to vector<1x32xf32>
    %cst_90 = arith.constant dense<0.000000e+00> : vector<9xf32>
    %150 = vector.multi_reduction <add>, %145, %cst_90 [1] : vector<9x32xf32> to vector<9xf32>
    %151 = vector.shape_cast %150 : vector<9xf32> to vector<9x1xf32>
    %cst_91 = arith.constant 3.200000e+01 : f32
    %152 = vector.broadcast %cst_91 : f32 to vector<9x1xf32>
    %153 = arith.divf %151, %152 : vector<9x1xf32>
    %154 = vector.broadcast %153 : vector<9x1xf32> to vector<9x32xf32>
    %155 = arith.subf %145, %154 : vector<9x32xf32>
    %156 = arith.mulf %155, %155 : vector<9x32xf32>
    %cst_92 = arith.constant dense<0.000000e+00> : vector<9xf32>
    %157 = vector.multi_reduction <add>, %156, %cst_92 [1] : vector<9x32xf32> to vector<9xf32>
    %158 = vector.shape_cast %157 : vector<9xf32> to vector<9x1xf32>
    %cst_93 = arith.constant 3.200000e+01 : f32
    %159 = vector.broadcast %cst_93 : f32 to vector<9x1xf32>
    %160 = arith.divf %158, %159 : vector<9x1xf32>
    %161 = vector.broadcast %153 : vector<9x1xf32> to vector<9x32xf32>
    %162 = arith.subf %145, %161 : vector<9x32xf32>
    %cst_94 = arith.constant 9.99999974E-6 : f32
    %163 = vector.broadcast %cst_94 : f32 to vector<9x1xf32>
    %164 = arith.addf %160, %163 : vector<9x1xf32>
    %165 = math.rsqrt %164 : vector<9x1xf32>
    %166 = vector.broadcast %165 : vector<9x1xf32> to vector<9x32xf32>
    %167 = arith.mulf %162, %166 : vector<9x32xf32>
    %168 = vector.broadcast %147 : vector<1x32xf32> to vector<9x32xf32>
    %169 = arith.mulf %167, %168 : vector<9x32xf32>
    %170 = vector.broadcast %149 : vector<1x32xf32> to vector<9x32xf32>
    %171 = arith.addf %169, %170 : vector<9x32xf32>
    %c0_95 = arith.constant 0 : index
    %c0_96 = arith.constant 0 : index
    %c0_97 = arith.constant 0 : index
    %172 = vector.load %arg25[%c0_95, %c0_96, %c0_97] : memref<2x32x128xf32, #tpu.memory_space<vmem>>, vector<1x32x128xf32>
    %173 = vector.shape_cast %172 : vector<1x32x128xf32> to vector<32x128xf32>
    %c0_98 = arith.constant 0 : index
    %c0_99 = arith.constant 0 : index
    %c0_100 = arith.constant 0 : index
    %174 = vector.load %arg26[%c0_98, %c0_99, %c0_100] : memref<2x1x128xf32, #tpu.memory_space<vmem>>, vector<1x1x128xf32>
    %175 = vector.shape_cast %174 : vector<1x1x128xf32> to vector<1x128xf32>
    %cst_101 = arith.constant dense<0.000000e+00> : vector<9x128xf32>
    %176 = tpu.matmul %171, %173, %cst_101 {dimension_numbers = #tpu.dot_dimension_numbers<[1], [0], [0], [1], [0, 0, 1, 1], [], []>} : vector<9x32xf32>, vector<32x128xf32>, vector<9x128xf32> -> vector<9x128xf32>
    %177 = vector.broadcast %175 : vector<1x128xf32> to vector<9x128xf32>
    %178 = arith.addf %176, %177 : vector<9x128xf32>
    %cst_102 = arith.constant 5.000000e-01 : f32
    %179 = vector.broadcast %cst_102 : f32 to vector<9x128xf32>
    %180 = arith.mulf %179, %178 : vector<9x128xf32>
    %cst_103 = arith.constant 4.471500e-02 : f32
    %181 = vector.broadcast %cst_103 : f32 to vector<9x128xf32>
    %182 = arith.mulf %181, %178 : vector<9x128xf32>
    %183 = arith.mulf %182, %178 : vector<9x128xf32>
    %184 = arith.mulf %183, %178 : vector<9x128xf32>
    %185 = arith.addf %178, %184 : vector<9x128xf32>
    %cst_104 = arith.constant 0.797884583 : f32
    %186 = vector.broadcast %cst_104 : f32 to vector<9x128xf32>
    %187 = arith.mulf %186, %185 : vector<9x128xf32>
    %188 = math.tanh %187 : vector<9x128xf32>
    %cst_105 = arith.constant 1.000000e+00 : f32
    %189 = vector.broadcast %cst_105 : f32 to vector<9x128xf32>
    %190 = arith.addf %189, %188 : vector<9x128xf32>
    %191 = arith.mulf %180, %190 : vector<9x128xf32>
    %c0_106 = arith.constant 0 : index
    %c0_107 = arith.constant 0 : index
    %c0_108 = arith.constant 0 : index
    %192 = vector.load %arg27[%c0_106, %c0_107, %c0_108] : memref<2x128x32xf32, #tpu.memory_space<vmem>>, vector<1x128x32xf32>
    %193 = vector.shape_cast %192 : vector<1x128x32xf32> to vector<128x32xf32>
    %c0_109 = arith.constant 0 : index
    %c0_110 = arith.constant 0 : index
    %c0_111 = arith.constant 0 : index
    %194 = vector.load %arg28[%c0_109, %c0_110, %c0_111] : memref<2x1x32xf32, #tpu.memory_space<vmem>>, vector<1x1x32xf32>
    %195 = vector.shape_cast %194 : vector<1x1x32xf32> to vector<1x32xf32>
    %cst_112 = arith.constant dense<0.000000e+00> : vector<9x32xf32>
    %196 = tpu.matmul %191, %193, %cst_112 {dimension_numbers = #tpu.dot_dimension_numbers<[1], [0], [0], [1], [0, 0, 1, 1], [], []>} : vector<9x128xf32>, vector<128x32xf32>, vector<9x32xf32> -> vector<9x32xf32>
    %197 = vector.broadcast %195 : vector<1x32xf32> to vector<9x32xf32>
    %198 = arith.addf %196, %197 : vector<9x32xf32>
    %199 = arith.addf %145, %198 : vector<9x32xf32>
    %200 = arith.addf %199, %65 : vector<9x32xf32>
    %c1 = arith.constant 1 : index
    %c0_113 = arith.constant 0 : index
    %c0_114 = arith.constant 0 : index
    %201 = vector.load %arg17[%c1, %c0_113, %c0_114] : memref<2x1x32xf32, #tpu.memory_space<vmem>>, vector<1x1x32xf32>
    %202 = vector.shape_cast %201 : vector<1x1x32xf32> to vector<1x32xf32>
    %c1_115 = arith.constant 1 : index
    %c0_116 = arith.constant 0 : index
    %c0_117 = arith.constant 0 : index
    %203 = vector.load %arg18[%c1_115, %c0_116, %c0_117] : memref<2x1x32xf32, #tpu.memory_space<vmem>>, vector<1x1x32xf32>
    %204 = vector.shape_cast %203 : vector<1x1x32xf32> to vector<1x32xf32>
    %cst_118 = arith.constant dense<0.000000e+00> : vector<9xf32>
    %205 = vector.multi_reduction <add>, %200, %cst_118 [1] : vector<9x32xf32> to vector<9xf32>
    %206 = vector.shape_cast %205 : vector<9xf32> to vector<9x1xf32>
    %cst_119 = arith.constant 3.200000e+01 : f32
    %207 = vector.broadcast %cst_119 : f32 to vector<9x1xf32>
    %208 = arith.divf %206, %207 : vector<9x1xf32>
    %209 = vector.broadcast %208 : vector<9x1xf32> to vector<9x32xf32>
    %210 = arith.subf %200, %209 : vector<9x32xf32>
    %211 = arith.mulf %210, %210 : vector<9x32xf32>
    %cst_120 = arith.constant dense<0.000000e+00> : vector<9xf32>
    %212 = vector.multi_reduction <add>, %211, %cst_120 [1] : vector<9x32xf32> to vector<9xf32>
    %213 = vector.shape_cast %212 : vector<9xf32> to vector<9x1xf32>
    %cst_121 = arith.constant 3.200000e+01 : f32
    %214 = vector.broadcast %cst_121 : f32 to vector<9x1xf32>
    %215 = arith.divf %213, %214 : vector<9x1xf32>
    %216 = vector.broadcast %208 : vector<9x1xf32> to vector<9x32xf32>
    %217 = arith.subf %200, %216 : vector<9x32xf32>
    %cst_122 = arith.constant 9.99999974E-6 : f32
    %218 = vector.broadcast %cst_122 : f32 to vector<9x1xf32>
    %219 = arith.addf %215, %218 : vector<9x1xf32>
    %220 = math.rsqrt %219 : vector<9x1xf32>
    %221 = vector.broadcast %220 : vector<9x1xf32> to vector<9x32xf32>
    %222 = arith.mulf %217, %221 : vector<9x32xf32>
    %223 = vector.broadcast %202 : vector<1x32xf32> to vector<9x32xf32>
    %224 = arith.mulf %222, %223 : vector<9x32xf32>
    %225 = vector.broadcast %204 : vector<1x32xf32> to vector<9x32xf32>
    %226 = arith.addf %224, %225 : vector<9x32xf32>
    %c1_123 = arith.constant 1 : index
    %c0_124 = arith.constant 0 : index
    %c0_125 = arith.constant 0 : index
    %227 = vector.load %arg19[%c1_123, %c0_124, %c0_125] : memref<2x32x96xf32, #tpu.memory_space<vmem>>, vector<1x32x96xf32>
    %228 = vector.shape_cast %227 : vector<1x32x96xf32> to vector<32x96xf32>
    %c1_126 = arith.constant 1 : index
    %c0_127 = arith.constant 0 : index
    %c0_128 = arith.constant 0 : index
    %229 = vector.load %arg20[%c1_126, %c0_127, %c0_128] : memref<2x1x96xf32, #tpu.memory_space<vmem>>, vector<1x1x96xf32>
    %230 = vector.shape_cast %229 : vector<1x1x96xf32> to vector<1x96xf32>
    %cst_129 = arith.constant dense<0.000000e+00> : vector<9x96xf32>
    %231 = tpu.matmul %226, %228, %cst_129 {dimension_numbers = #tpu.dot_dimension_numbers<[1], [0], [0], [1], [0, 0, 1, 1], [], []>} : vector<9x32xf32>, vector<32x96xf32>, vector<9x96xf32> -> vector<9x96xf32>
    %232 = vector.broadcast %230 : vector<1x96xf32> to vector<9x96xf32>
    %233 = arith.addf %231, %232 : vector<9x96xf32>
    %c1_130 = arith.constant 1 : index
    %c0_131 = arith.constant 0 : index
    %c0_132 = arith.constant 0 : index
    %234 = vector.load %arg21[%c1_130, %c0_131, %c0_132] : memref<2x32x32xf32, #tpu.memory_space<vmem>>, vector<1x32x32xf32>
    %235 = vector.shape_cast %234 : vector<1x32x32xf32> to vector<32x32xf32>
    %236 = vector.extract_strided_slice %233 {offsets = [0, 0], sizes = [9, 16], strides = [1, 1]} : vector<9x96xf32> to vector<9x16xf32>
    %237 = vector.extract_strided_slice %233 {offsets = [0, 32], sizes = [9, 16], strides = [1, 1]} : vector<9x96xf32> to vector<9x16xf32>
    %238 = vector.extract_strided_slice %233 {offsets = [0, 64], sizes = [9, 16], strides = [1, 1]} : vector<9x96xf32> to vector<9x16xf32>
    %cst_133 = arith.constant dense<0.000000e+00> : vector<9x9xf32>
    %239 = tpu.matmul %236, %237, %cst_133 {dimension_numbers = #tpu.dot_dimension_numbers<[1], [1], [0], [0], [0, 0, 1, 0], [], []>} : vector<9x16xf32>, vector<9x16xf32>, vector<9x9xf32> -> vector<9x9xf32>
    %cst_134 = arith.constant 2.500000e-01 : f32
    %240 = vector.broadcast %cst_134 : f32 to vector<9x9xf32>
    %241 = arith.mulf %239, %240 : vector<9x9xf32>
    %cst_135 = arith.constant dense<0xFF800000> : vector<9xf32>
    %242 = vector.multi_reduction <maximumf>, %241, %cst_135 [1] : vector<9x9xf32> to vector<9xf32>
    %243 = vector.shape_cast %242 : vector<9xf32> to vector<9x1xf32>
    %244 = vector.broadcast %243 : vector<9x1xf32> to vector<9x9xf32>
    %245 = arith.subf %241, %244 : vector<9x9xf32>
    %246 = math.exp %245 : vector<9x9xf32>
    %cst_136 = arith.constant dense<0.000000e+00> : vector<9xf32>
    %247 = vector.multi_reduction <add>, %246, %cst_136 [1] : vector<9x9xf32> to vector<9xf32>
    %248 = vector.shape_cast %247 : vector<9xf32> to vector<9x1xf32>
    %249 = tpu.reciprocal %248 {approx = true} : vector<9x1xf32> -> vector<9x1xf32>
    %250 = vector.broadcast %249 : vector<9x1xf32> to vector<9x9xf32>
    %251 = arith.mulf %246, %250 : vector<9x9xf32>
    %cst_137 = arith.constant dense<0.000000e+00> : vector<9x16xf32>
    %252 = tpu.matmul %251, %238, %cst_137 {dimension_numbers = #tpu.dot_dimension_numbers<[1], [0], [0], [1], [0, 0, 1, 1], [], []>} : vector<9x9xf32>, vector<9x16xf32>, vector<9x16xf32> -> vector<9x16xf32>
    %253 = vector.extract_strided_slice %235 {offsets = [0, 0], sizes = [16, 32], strides = [1, 1]} : vector<32x32xf32> to vector<16x32xf32>
    %cst_138 = arith.constant dense<0.000000e+00> : vector<9x32xf32>
    %254 = tpu.matmul %252, %253, %cst_138 {dimension_numbers = #tpu.dot_dimension_numbers<[1], [0], [0], [1], [0, 0, 1, 1], [], []>} : vector<9x16xf32>, vector<16x32xf32>, vector<9x32xf32> -> vector<9x32xf32>
    %255 = vector.extract_strided_slice %233 {offsets = [0, 16], sizes = [9, 16], strides = [1, 1]} : vector<9x96xf32> to vector<9x16xf32>
    %256 = vector.extract_strided_slice %233 {offsets = [0, 48], sizes = [9, 16], strides = [1, 1]} : vector<9x96xf32> to vector<9x16xf32>
    %257 = vector.extract_strided_slice %233 {offsets = [0, 80], sizes = [9, 16], strides = [1, 1]} : vector<9x96xf32> to vector<9x16xf32>
    %cst_139 = arith.constant dense<0.000000e+00> : vector<9x9xf32>
    %258 = tpu.matmul %255, %256, %cst_139 {dimension_numbers = #tpu.dot_dimension_numbers<[1], [1], [0], [0], [0, 0, 1, 0], [], []>} : vector<9x16xf32>, vector<9x16xf32>, vector<9x9xf32> -> vector<9x9xf32>
    %cst_140 = arith.constant 2.500000e-01 : f32
    %259 = vector.broadcast %cst_140 : f32 to vector<9x9xf32>
    %260 = arith.mulf %258, %259 : vector<9x9xf32>
    %cst_141 = arith.constant dense<0xFF800000> : vector<9xf32>
    %261 = vector.multi_reduction <maximumf>, %260, %cst_141 [1] : vector<9x9xf32> to vector<9xf32>
    %262 = vector.shape_cast %261 : vector<9xf32> to vector<9x1xf32>
    %263 = vector.broadcast %262 : vector<9x1xf32> to vector<9x9xf32>
    %264 = arith.subf %260, %263 : vector<9x9xf32>
    %265 = math.exp %264 : vector<9x9xf32>
    %cst_142 = arith.constant dense<0.000000e+00> : vector<9xf32>
    %266 = vector.multi_reduction <add>, %265, %cst_142 [1] : vector<9x9xf32> to vector<9xf32>
    %267 = vector.shape_cast %266 : vector<9xf32> to vector<9x1xf32>
    %268 = tpu.reciprocal %267 {approx = true} : vector<9x1xf32> -> vector<9x1xf32>
    %269 = vector.broadcast %268 : vector<9x1xf32> to vector<9x9xf32>
    %270 = arith.mulf %265, %269 : vector<9x9xf32>
    %cst_143 = arith.constant dense<0.000000e+00> : vector<9x16xf32>
    %271 = tpu.matmul %270, %257, %cst_143 {dimension_numbers = #tpu.dot_dimension_numbers<[1], [0], [0], [1], [0, 0, 1, 1], [], []>} : vector<9x9xf32>, vector<9x16xf32>, vector<9x16xf32> -> vector<9x16xf32>
    %272 = vector.extract_strided_slice %235 {offsets = [16, 0], sizes = [16, 32], strides = [1, 1]} : vector<32x32xf32> to vector<16x32xf32>
    %cst_144 = arith.constant dense<0.000000e+00> : vector<9x32xf32>
    %273 = tpu.matmul %271, %272, %cst_144 {dimension_numbers = #tpu.dot_dimension_numbers<[1], [0], [0], [1], [0, 0, 1, 1], [], []>} : vector<9x16xf32>, vector<16x32xf32>, vector<9x32xf32> -> vector<9x32xf32>
    %274 = arith.addf %254, %273 : vector<9x32xf32>
    %c1_145 = arith.constant 1 : index
    %c0_146 = arith.constant 0 : index
    %c0_147 = arith.constant 0 : index
    %275 = vector.load %arg22[%c1_145, %c0_146, %c0_147] : memref<2x1x32xf32, #tpu.memory_space<vmem>>, vector<1x1x32xf32>
    %276 = vector.shape_cast %275 : vector<1x1x32xf32> to vector<1x32xf32>
    %277 = vector.broadcast %276 : vector<1x32xf32> to vector<9x32xf32>
    %278 = arith.addf %274, %277 : vector<9x32xf32>
    %279 = arith.addf %200, %278 : vector<9x32xf32>
    %c1_148 = arith.constant 1 : index
    %c0_149 = arith.constant 0 : index
    %c0_150 = arith.constant 0 : index
    %280 = vector.load %arg23[%c1_148, %c0_149, %c0_150] : memref<2x1x32xf32, #tpu.memory_space<vmem>>, vector<1x1x32xf32>
    %281 = vector.shape_cast %280 : vector<1x1x32xf32> to vector<1x32xf32>
    %c1_151 = arith.constant 1 : index
    %c0_152 = arith.constant 0 : index
    %c0_153 = arith.constant 0 : index
    %282 = vector.load %arg24[%c1_151, %c0_152, %c0_153] : memref<2x1x32xf32, #tpu.memory_space<vmem>>, vector<1x1x32xf32>
    %283 = vector.shape_cast %282 : vector<1x1x32xf32> to vector<1x32xf32>
    %cst_154 = arith.constant dense<0.000000e+00> : vector<9xf32>
    %284 = vector.multi_reduction <add>, %279, %cst_154 [1] : vector<9x32xf32> to vector<9xf32>
    %285 = vector.shape_cast %284 : vector<9xf32> to vector<9x1xf32>
    %cst_155 = arith.constant 3.200000e+01 : f32
    %286 = vector.broadcast %cst_155 : f32 to vector<9x1xf32>
    %287 = arith.divf %285, %286 : vector<9x1xf32>
    %288 = vector.broadcast %287 : vector<9x1xf32> to vector<9x32xf32>
    %289 = arith.subf %279, %288 : vector<9x32xf32>
    %290 = arith.mulf %289, %289 : vector<9x32xf32>
    %cst_156 = arith.constant dense<0.000000e+00> : vector<9xf32>
    %291 = vector.multi_reduction <add>, %290, %cst_156 [1] : vector<9x32xf32> to vector<9xf32>
    %292 = vector.shape_cast %291 : vector<9xf32> to vector<9x1xf32>
    %cst_157 = arith.constant 3.200000e+01 : f32
    %293 = vector.broadcast %cst_157 : f32 to vector<9x1xf32>
    %294 = arith.divf %292, %293 : vector<9x1xf32>
    %295 = vector.broadcast %287 : vector<9x1xf32> to vector<9x32xf32>
    %296 = arith.subf %279, %295 : vector<9x32xf32>
    %cst_158 = arith.constant 9.99999974E-6 : f32
    %297 = vector.broadcast %cst_158 : f32 to vector<9x1xf32>
    %298 = arith.addf %294, %297 : vector<9x1xf32>
    %299 = math.rsqrt %298 : vector<9x1xf32>
    %300 = vector.broadcast %299 : vector<9x1xf32> to vector<9x32xf32>
    %301 = arith.mulf %296, %300 : vector<9x32xf32>
    %302 = vector.broadcast %281 : vector<1x32xf32> to vector<9x32xf32>
    %303 = arith.mulf %301, %302 : vector<9x32xf32>
    %304 = vector.broadcast %283 : vector<1x32xf32> to vector<9x32xf32>
    %305 = arith.addf %303, %304 : vector<9x32xf32>
    %c1_159 = arith.constant 1 : index
    %c0_160 = arith.constant 0 : index
    %c0_161 = arith.constant 0 : index
    %306 = vector.load %arg25[%c1_159, %c0_160, %c0_161] : memref<2x32x128xf32, #tpu.memory_space<vmem>>, vector<1x32x128xf32>
    %307 = vector.shape_cast %306 : vector<1x32x128xf32> to vector<32x128xf32>
    %c1_162 = arith.constant 1 : index
    %c0_163 = arith.constant 0 : index
    %c0_164 = arith.constant 0 : index
    %308 = vector.load %arg26[%c1_162, %c0_163, %c0_164] : memref<2x1x128xf32, #tpu.memory_space<vmem>>, vector<1x1x128xf32>
    %309 = vector.shape_cast %308 : vector<1x1x128xf32> to vector<1x128xf32>
    %cst_165 = arith.constant dense<0.000000e+00> : vector<9x128xf32>
    %310 = tpu.matmul %305, %307, %cst_165 {dimension_numbers = #tpu.dot_dimension_numbers<[1], [0], [0], [1], [0, 0, 1, 1], [], []>} : vector<9x32xf32>, vector<32x128xf32>, vector<9x128xf32> -> vector<9x128xf32>
    %311 = vector.broadcast %309 : vector<1x128xf32> to vector<9x128xf32>
    %312 = arith.addf %310, %311 : vector<9x128xf32>
    %cst_166 = arith.constant 5.000000e-01 : f32
    %313 = vector.broadcast %cst_166 : f32 to vector<9x128xf32>
    %314 = arith.mulf %313, %312 : vector<9x128xf32>
    %cst_167 = arith.constant 4.471500e-02 : f32
    %315 = vector.broadcast %cst_167 : f32 to vector<9x128xf32>
    %316 = arith.mulf %315, %312 : vector<9x128xf32>
    %317 = arith.mulf %316, %312 : vector<9x128xf32>
    %318 = arith.mulf %317, %312 : vector<9x128xf32>
    %319 = arith.addf %312, %318 : vector<9x128xf32>
    %cst_168 = arith.constant 0.797884583 : f32
    %320 = vector.broadcast %cst_168 : f32 to vector<9x128xf32>
    %321 = arith.mulf %320, %319 : vector<9x128xf32>
    %322 = math.tanh %321 : vector<9x128xf32>
    %cst_169 = arith.constant 1.000000e+00 : f32
    %323 = vector.broadcast %cst_169 : f32 to vector<9x128xf32>
    %324 = arith.addf %323, %322 : vector<9x128xf32>
    %325 = arith.mulf %314, %324 : vector<9x128xf32>
    %c1_170 = arith.constant 1 : index
    %c0_171 = arith.constant 0 : index
    %c0_172 = arith.constant 0 : index
    %326 = vector.load %arg27[%c1_170, %c0_171, %c0_172] : memref<2x128x32xf32, #tpu.memory_space<vmem>>, vector<1x128x32xf32>
    %327 = vector.shape_cast %326 : vector<1x128x32xf32> to vector<128x32xf32>
    %c1_173 = arith.constant 1 : index
    %c0_174 = arith.constant 0 : index
    %c0_175 = arith.constant 0 : index
    %328 = vector.load %arg28[%c1_173, %c0_174, %c0_175] : memref<2x1x32xf32, #tpu.memory_space<vmem>>, vector<1x1x32xf32>
    %329 = vector.shape_cast %328 : vector<1x1x32xf32> to vector<1x32xf32>
    %cst_176 = arith.constant dense<0.000000e+00> : vector<9x32xf32>
    %330 = tpu.matmul %325, %327, %cst_176 {dimension_numbers = #tpu.dot_dimension_numbers<[1], [0], [0], [1], [0, 0, 1, 1], [], []>} : vector<9x128xf32>, vector<128x32xf32>, vector<9x32xf32> -> vector<9x32xf32>
    %331 = vector.broadcast %329 : vector<1x32xf32> to vector<9x32xf32>
    %332 = arith.addf %330, %331 : vector<9x32xf32>
    %333 = arith.addf %279, %332 : vector<9x32xf32>
    %c0_177 = arith.constant 0 : index
    %c0_178 = arith.constant 0 : index
    %334 = vector.load %arg29[%c0_177, %c0_178] : memref<1x32xf32, #tpu.memory_space<vmem>>, vector<1x32xf32>
    %c0_179 = arith.constant 0 : index
    %c0_180 = arith.constant 0 : index
    %335 = vector.load %arg30[%c0_179, %c0_180] : memref<1x32xf32, #tpu.memory_space<vmem>>, vector<1x32xf32>
    %cst_181 = arith.constant dense<0.000000e+00> : vector<9xf32>
    %336 = vector.multi_reduction <add>, %333, %cst_181 [1] : vector<9x32xf32> to vector<9xf32>
    %337 = vector.shape_cast %336 : vector<9xf32> to vector<9x1xf32>
    %cst_182 = arith.constant 3.200000e+01 : f32
    %338 = vector.broadcast %cst_182 : f32 to vector<9x1xf32>
    %339 = arith.divf %337, %338 : vector<9x1xf32>
    %340 = vector.broadcast %339 : vector<9x1xf32> to vector<9x32xf32>
    %341 = arith.subf %333, %340 : vector<9x32xf32>
    %342 = arith.mulf %341, %341 : vector<9x32xf32>
    %cst_183 = arith.constant dense<0.000000e+00> : vector<9xf32>
    %343 = vector.multi_reduction <add>, %342, %cst_183 [1] : vector<9x32xf32> to vector<9xf32>
    %344 = vector.shape_cast %343 : vector<9xf32> to vector<9x1xf32>
    %cst_184 = arith.constant 3.200000e+01 : f32
    %345 = vector.broadcast %cst_184 : f32 to vector<9x1xf32>
    %346 = arith.divf %344, %345 : vector<9x1xf32>
    %347 = vector.broadcast %339 : vector<9x1xf32> to vector<9x32xf32>
    %348 = arith.subf %333, %347 : vector<9x32xf32>
    %cst_185 = arith.constant 9.99999974E-6 : f32
    %349 = vector.broadcast %cst_185 : f32 to vector<9x1xf32>
    %350 = arith.addf %346, %349 : vector<9x1xf32>
    %351 = math.rsqrt %350 : vector<9x1xf32>
    %352 = vector.broadcast %351 : vector<9x1xf32> to vector<9x32xf32>
    %353 = arith.mulf %348, %352 : vector<9x32xf32>
    %354 = vector.broadcast %334 : vector<1x32xf32> to vector<9x32xf32>
    %355 = arith.mulf %353, %354 : vector<9x32xf32>
    %356 = vector.broadcast %335 : vector<1x32xf32> to vector<9x32xf32>
    %357 = arith.addf %355, %356 : vector<9x32xf32>
    %358 = vector.extract_strided_slice %357 {offsets = [0, 0], sizes = [1, 32], strides = [1, 1]} : vector<9x32xf32> to vector<1x32xf32>
    %359 = vector.extract_strided_slice %357 {offsets = [1, 0], sizes = [8, 32], strides = [1, 1]} : vector<9x32xf32> to vector<8x32xf32>
    %cst_186 = arith.constant dense<0xFF800000> : vector<32xf32>
    %360 = vector.multi_reduction <maximumf>, %359, %cst_186 [0] : vector<8x32xf32> to vector<32xf32>
    %361 = vector.shape_cast %360 : vector<32xf32> to vector<1x32xf32>
    %c0_187 = arith.constant 0 : index
    %c0_188 = arith.constant 0 : index
    %362 = vector.load %arg31[%c0_187, %c0_188] : memref<64x256xf32, #tpu.memory_space<vmem>>, vector<32x256xf32>
    %cst_189 = arith.constant dense<0.000000e+00> : vector<1x256xf32>
    %363 = tpu.matmul %358, %362, %cst_189 {dimension_numbers = #tpu.dot_dimension_numbers<[1], [0], [0], [1], [0, 0, 1, 1], [], []>} : vector<1x32xf32>, vector<32x256xf32>, vector<1x256xf32> -> vector<1x256xf32>
    %c32 = arith.constant 32 : index
    %c0_190 = arith.constant 0 : index
    %364 = vector.load %arg31[%c32, %c0_190] : memref<64x256xf32, #tpu.memory_space<vmem>>, vector<32x256xf32>
    %cst_191 = arith.constant dense<0.000000e+00> : vector<1x256xf32>
    %365 = tpu.matmul %361, %364, %cst_191 {dimension_numbers = #tpu.dot_dimension_numbers<[1], [0], [0], [1], [0, 0, 1, 1], [], []>} : vector<1x32xf32>, vector<32x256xf32>, vector<1x256xf32> -> vector<1x256xf32>
    %366 = arith.addf %363, %365 : vector<1x256xf32>
    %c0_192 = arith.constant 0 : index
    %c0_193 = arith.constant 0 : index
    %367 = vector.load %arg32[%c0_192, %c0_193] : memref<1x256xf32, #tpu.memory_space<vmem>>, vector<1x256xf32>
    %368 = arith.addf %366, %367 : vector<1x256xf32>
    %cst_194 = arith.constant 0.000000e+00 : f32
    %369 = vector.broadcast %cst_194 : f32 to vector<1x256xf32>
    %370 = arith.maximumf %368, %369 : vector<1x256xf32>
    %c0_195 = arith.constant 0 : index
    %c0_196 = arith.constant 0 : index
    %371 = vector.load %arg33[%c0_195, %c0_196] : memref<256x8xf32, #tpu.memory_space<vmem>>, vector<256x8xf32>
    %c0_197 = arith.constant 0 : index
    %c0_198 = arith.constant 0 : index
    %372 = vector.load %arg34[%c0_197, %c0_198] : memref<1x8xf32, #tpu.memory_space<vmem>>, vector<1x8xf32>
    %cst_199 = arith.constant dense<0.000000e+00> : vector<1x8xf32>
    %373 = tpu.matmul %370, %371, %cst_199 {dimension_numbers = #tpu.dot_dimension_numbers<[1], [0], [0], [1], [0, 0, 1, 1], [], []>} : vector<1x256xf32>, vector<256x8xf32>, vector<1x8xf32> -> vector<1x8xf32>
    %374 = arith.addf %373, %372 : vector<1x8xf32>
    %c0_200 = arith.constant 0 : index
    %c0_201 = arith.constant 0 : index
    %c0_202 = arith.constant 0 : index
    %375 = vector.load %arg35[%c0_200, %c0_201, %c0_202] : memref<1x1x8xf32, #tpu.memory_space<vmem>>, vector<1x1x8xf32>
    %376 = vector.shape_cast %375 : vector<1x1x8xf32> to vector<1x8xf32>
    %377 = vector.shape_cast %374 : vector<1x8xf32> to vector<1x1x8xf32>
    tpu.vector_store %arg35[%c0_200, %c0_201, %c0_202], %377 {strides = array<i32>} : memref<1x1x8xf32, #tpu.memory_space<vmem>>, vector<1x1x8xf32>,
    return
  }
  func.func @transform_0(%arg0: i32) -> (i32, i32, i32) {
    %c0_i32 = arith.constant 0 : i32
    %c0_i32_0 = arith.constant 0 : i32
    %c0_i32_1 = arith.constant 0 : i32
    return %arg0, %c0_i32, %c0_i32_0 : i32, i32, i32
  }
  func.func @transform_1(%arg0: i32) -> (i32, i32, i32) {
    %c0_i32 = arith.constant 0 : i32
    %c0_i32_0 = arith.constant 0 : i32
    %c0_i32_1 = arith.constant 0 : i32
    return %arg0, %c0_i32, %c0_i32_0 : i32, i32, i32
  }
  func.func @transform_2(%arg0: i32) -> (i32, i32) {
    %c0_i32 = arith.constant 0 : i32
    %c0_i32_0 = arith.constant 0 : i32
    %c0_i32_1 = arith.constant 0 : i32
    return %c0_i32, %c0_i32_0 : i32, i32
  }
  func.func @transform_3(%arg0: i32) -> (i32, i32) {
    %c0_i32 = arith.constant 0 : i32
    %c0_i32_0 = arith.constant 0 : i32
    %c0_i32_1 = arith.constant 0 : i32
    return %c0_i32, %c0_i32_0 : i32, i32
  }
  func.func @transform_4(%arg0: i32) -> (i32, i32) {
    %c0_i32 = arith.constant 0 : i32
    %c0_i32_0 = arith.constant 0 : i32
    %c0_i32_1 = arith.constant 0 : i32
    return %c0_i32, %c0_i32_0 : i32, i32
  }
  func.func @transform_5(%arg0: i32) -> (i32, i32) {
    %c0_i32 = arith.constant 0 : i32
    %c0_i32_0 = arith.constant 0 : i32
    %c0_i32_1 = arith.constant 0 : i32
    return %c0_i32, %c0_i32_0 : i32, i32
  }
  func.func @transform_6(%arg0: i32) -> (i32, i32) {
    %c0_i32 = arith.constant 0 : i32
    %c0_i32_0 = arith.constant 0 : i32
    %c0_i32_1 = arith.constant 0 : i32
    return %c0_i32, %c0_i32_0 : i32, i32
  }
  func.func @transform_7(%arg0: i32) -> (i32, i32) {
    %c0_i32 = arith.constant 0 : i32
    %c0_i32_0 = arith.constant 0 : i32
    %c0_i32_1 = arith.constant 0 : i32
    return %c0_i32, %c0_i32_0 : i32, i32
  }
  func.func @transform_8(%arg0: i32) -> (i32, i32) {
    %c0_i32 = arith.constant 0 : i32
    %c0_i32_0 = arith.constant 0 : i32
    %c0_i32_1 = arith.constant 0 : i32
    return %c0_i32, %c0_i32_0 : i32, i32
  }
  func.func @transform_9(%arg0: i32) -> (i32, i32) {
    %c0_i32 = arith.constant 0 : i32
    %c0_i32_0 = arith.constant 0 : i32
    %c0_i32_1 = arith.constant 0 : i32
    return %c0_i32, %c0_i32_0 : i32, i32
  }
  func.func @transform_10(%arg0: i32) -> (i32, i32) {
    %c0_i32 = arith.constant 0 : i32
    %c0_i32_0 = arith.constant 0 : i32
    %c0_i32_1 = arith.constant 0 : i32
    return %c0_i32, %c0_i32_0 : i32, i32
  }
  func.func @transform_11(%arg0: i32) -> (i32, i32) {
    %c0_i32 = arith.constant 0 : i32
    %c0_i32_0 = arith.constant 0 : i32
    %c0_i32_1 = arith.constant 0 : i32
    return %c0_i32, %c0_i32_0 : i32, i32
  }
  func.func @transform_12(%arg0: i32) -> (i32, i32) {
    %c0_i32 = arith.constant 0 : i32
    %c0_i32_0 = arith.constant 0 : i32
    %c0_i32_1 = arith.constant 0 : i32
    return %c0_i32, %c0_i32_0 : i32, i32
  }
  func.func @transform_13(%arg0: i32) -> (i32, i32) {
    %c0_i32 = arith.constant 0 : i32
    %c0_i32_0 = arith.constant 0 : i32
    %c0_i32_1 = arith.constant 0 : i32
    return %c0_i32, %c0_i32_0 : i32, i32
  }
  func.func @transform_14(%arg0: i32) -> (i32, i32) {
    %c0_i32 = arith.constant 0 : i32
    %c0_i32_0 = arith.constant 0 : i32
    %c0_i32_1 = arith.constant 0 : i32
    return %c0_i32, %c0_i32_0 : i32, i32
  }
  func.func @transform_15(%arg0: i32) -> (i32, i32) {
    %c0_i32 = arith.constant 0 : i32
    %c0_i32_0 = arith.constant 0 : i32
    %c0_i32_1 = arith.constant 0 : i32
    return %c0_i32, %c0_i32_0 : i32, i32
  }
  func.func @transform_16(%arg0: i32) -> (i32, i32, i32) {
    %c0_i32 = arith.constant 0 : i32
    %c0_i32_0 = arith.constant 0 : i32
    %c0_i32_1 = arith.constant 0 : i32
    %c0_i32_2 = arith.constant 0 : i32
    return %c0_i32, %c0_i32_0, %c0_i32_1 : i32, i32, i32
  }
  func.func @transform_17(%arg0: i32) -> (i32, i32, i32) {
    %c0_i32 = arith.constant 0 : i32
    %c0_i32_0 = arith.constant 0 : i32
    %c0_i32_1 = arith.constant 0 : i32
    %c0_i32_2 = arith.constant 0 : i32
    return %c0_i32, %c0_i32_0, %c0_i32_1 : i32, i32, i32
  }
  func.func @transform_18(%arg0: i32) -> (i32, i32, i32) {
    %c0_i32 = arith.constant 0 : i32
    %c0_i32_0 = arith.constant 0 : i32
    %c0_i32_1 = arith.constant 0 : i32
    %c0_i32_2 = arith.constant 0 : i32
    return %c0_i32, %c0_i32_0, %c0_i32_1 : i32, i32, i32
  }
  func.func @transform_19(%arg0: i32) -> (i32, i32, i32) {
    %c0_i32 = arith.constant 0 : i32
    %c0_i32_0 = arith.constant 0 : i32
    %c0_i32_1 = arith.constant 0 : i32
    %c0_i32_2 = arith.constant 0 : i32
    return %c0_i32, %c0_i32_0, %c0_i32_1 : i32, i32, i32
  }
  func.func @transform_20(%arg0: i32) -> (i32, i32, i32) {
    %c0_i32 = arith.constant 0 : i32
    %c0_i32_0 = arith.constant 0 : i32
    %c0_i32_1 = arith.constant 0 : i32
    %c0_i32_2 = arith.constant 0 : i32
    return %c0_i32, %c0_i32_0, %c0_i32_1 : i32, i32, i32
  }
  func.func @transform_21(%arg0: i32) -> (i32, i32, i32) {
    %c0_i32 = arith.constant 0 : i32
    %c0_i32_0 = arith.constant 0 : i32
    %c0_i32_1 = arith.constant 0 : i32
    %c0_i32_2 = arith.constant 0 : i32
    return %c0_i32, %c0_i32_0, %c0_i32_1 : i32, i32, i32
  }
  func.func @transform_22(%arg0: i32) -> (i32, i32, i32) {
    %c0_i32 = arith.constant 0 : i32
    %c0_i32_0 = arith.constant 0 : i32
    %c0_i32_1 = arith.constant 0 : i32
    %c0_i32_2 = arith.constant 0 : i32
    return %c0_i32, %c0_i32_0, %c0_i32_1 : i32, i32, i32
  }
  func.func @transform_23(%arg0: i32) -> (i32, i32, i32) {
    %c0_i32 = arith.constant 0 : i32
    %c0_i32_0 = arith.constant 0 : i32
    %c0_i32_1 = arith.constant 0 : i32
    %c0_i32_2 = arith.constant 0 : i32
    return %c0_i32, %c0_i32_0, %c0_i32_1 : i32, i32, i32
  }
  func.func @transform_24(%arg0: i32) -> (i32, i32, i32) {
    %c0_i32 = arith.constant 0 : i32
    %c0_i32_0 = arith.constant 0 : i32
    %c0_i32_1 = arith.constant 0 : i32
    %c0_i32_2 = arith.constant 0 : i32
    return %c0_i32, %c0_i32_0, %c0_i32_1 : i32, i32, i32
  }
  func.func @transform_25(%arg0: i32) -> (i32, i32, i32) {
    %c0_i32 = arith.constant 0 : i32
    %c0_i32_0 = arith.constant 0 : i32
    %c0_i32_1 = arith.constant 0 : i32
    %c0_i32_2 = arith.constant 0 : i32
    return %c0_i32, %c0_i32_0, %c0_i32_1 : i32, i32, i32
  }
  func.func @transform_26(%arg0: i32) -> (i32, i32, i32) {
    %c0_i32 = arith.constant 0 : i32
    %c0_i32_0 = arith.constant 0 : i32
    %c0_i32_1 = arith.constant 0 : i32
    %c0_i32_2 = arith.constant 0 : i32
    return %c0_i32, %c0_i32_0, %c0_i32_1 : i32, i32, i32
  }
  func.func @transform_27(%arg0: i32) -> (i32, i32, i32) {
    %c0_i32 = arith.constant 0 : i32
    %c0_i32_0 = arith.constant 0 : i32
    %c0_i32_1 = arith.constant 0 : i32
    %c0_i32_2 = arith.constant 0 : i32
    return %c0_i32, %c0_i32_0, %c0_i32_1 : i32, i32, i32
  }
  func.func @transform_28(%arg0: i32) -> (i32, i32) {
    %c0_i32 = arith.constant 0 : i32
    %c0_i32_0 = arith.constant 0 : i32
    %c0_i32_1 = arith.constant 0 : i32
    return %c0_i32, %c0_i32_0 : i32, i32
  }
  func.func @transform_29(%arg0: i32) -> (i32, i32) {
    %c0_i32 = arith.constant 0 : i32
    %c0_i32_0 = arith.constant 0 : i32
    %c0_i32_1 = arith.constant 0 : i32
    return %c0_i32, %c0_i32_0 : i32, i32
  }
  func.func @transform_30(%arg0: i32) -> (i32, i32) {
    %c0_i32 = arith.constant 0 : i32
    %c0_i32_0 = arith.constant 0 : i32
    %c0_i32_1 = arith.constant 0 : i32
    return %c0_i32, %c0_i32_0 : i32, i32
  }
  func.func @transform_31(%arg0: i32) -> (i32, i32) {
    %c0_i32 = arith.constant 0 : i32
    %c0_i32_0 = arith.constant 0 : i32
    %c0_i32_1 = arith.constant 0 : i32
    return %c0_i32, %c0_i32_0 : i32, i32
  }
  func.func @transform_32(%arg0: i32) -> (i32, i32) {
    %c0_i32 = arith.constant 0 : i32
    %c0_i32_0 = arith.constant 0 : i32
    %c0_i32_1 = arith.constant 0 : i32
    return %c0_i32, %c0_i32_0 : i32, i32
  }
  func.func @transform_33(%arg0: i32) -> (i32, i32) {
    %c0_i32 = arith.constant 0 : i32
    %c0_i32_0 = arith.constant 0 : i32
    %c0_i32_1 = arith.constant 0 : i32
    return %c0_i32, %c0_i32_0 : i32, i32
  }
  func.func @transform_34(%arg0: i32) -> (i32, i32, i32) {
    %c0_i32 = arith.constant 0 : i32
    %c0_i32_0 = arith.constant 0 : i32
    %c0_i32_1 = arith.constant 0 : i32
    return %arg0, %c0_i32, %c0_i32_0 : i32, i32, i32
  }
}

</mosaic_0001>

<llo_original>
// kernel: custom-call.6
$region0: #{custom-call.6}
  %s0 = inlined_call_operand.vmem [shape: f32[2,64], index: 0, kind: output, shape index: {}]

// kernel: neg.1
$region0: #{neg.1}
  #allocation0 [shape = 's32[1]{0}', space=sflag, size = 0x4, scoped, tag = 'scoped memory for neg.1']
  %s0 = inlined_call_operand.vmem [shape: f32[2,8,64], index: 0, kind: input, shape index: {}]
  %s1 = inlined_call_operand.vmem [shape: f32[2,8,64], index: 1, kind: output, shape index: {}]
  %v2 = vld [vmem:[%s0] sm:$0xff]
  %3 = xla_tuple %v2
  %4 = xla_tuple %3
  %v5 = vxor.u32 %v2, 2147483648
  %6 = xla_tuple %v5
  %7 = vst [vmem:[%s1] sm:$0xff] %v5
  %s8 = scalar_lea.vmem %s0, 8
  %v9 = vld [vmem:[%s8] sm:$0xff]
  %10 = xla_tuple %v9
  %11 = xla_tuple %10
  %v12 = vxor.u32 %v9, 2147483648
  %13 = xla_tuple %v12
  %s14 = scalar_lea.vmem %s1, 8
  %15 = vst [vmem:[%s14] sm:$0xff] %v12

// kernel: point_transformer_forward.1
$region0: #{point_transformer_forward.1}
  #allocation0 [shape = 'u32[]', space=smem, size = 0x4, offset = 0x4, fixed_abs, tag = 'smem constant byte address 0x4 - core index']
  #allocation1 [shape = 'u32[144,128]{1,0:T(1,128)}', space=vmem, size = 0x12000, scoped, tag = 'internal scratch']
  %s0 = inlined_call_operand.smem [shape: u32[35], index: -1, kind: input, shape index: {}]
  %s1 = sld [smem:[%s0]]
  %s2 = scalar_lea.smem %s0, 1
  %s3 = sld [smem:[%s2]]
  %s4 = scalar_lea.smem %s0, 2
  %s5 = sld [smem:[%s4]]
  %s6 = scalar_lea.smem %s0, 3
  %s7 = sld [smem:[%s6]]
  %s8 = scalar_lea.smem %s0, 4
  %s9 = sld [smem:[%s8]]
  %s10 = scalar_lea.smem %s0, 5
  %s11 = sld [smem:[%s10]]
  %s12 = scalar_lea.smem %s0, 6
  %s13 = sld [smem:[%s12]]
  %s14 = scalar_lea.smem %s0, 7
  %s15 = sld [smem:[%s14]]
  %s16 = scalar_lea.smem %s0, 8
  %s17 = sld [smem:[%s16]]
  %s18 = scalar_lea.smem %s0, 9
  %s19 = sld [smem:[%s18]]
  %s20 = scalar_lea.smem %s0, 10
  %s21 = sld [smem:[%s20]]
  %s22 = scalar_lea.smem %s0, 11
  %s23 = sld [smem:[%s22]]
  %s24 = scalar_lea.smem %s0, 12
  %s25 = sld [smem:[%s24]]
  %s26 = scalar_lea.smem %s0, 13
  %s27 = sld [smem:[%s26]]
  %s28 = scalar_lea.smem %s0, 14
  %s29 = sld [smem:[%s28]]
  %s30 = scalar_lea.smem %s0, 15
  %s31 = sld [smem:[%s30]]
  %s32 = scalar_lea.smem %s0, 16
  %s33 = sld [smem:[%s32]]
  %s34 = scalar_lea.smem %s0, 17
  %s35 = sld [smem:[%s34]]
  %s36 = scalar_lea.smem %s0, 18
  %s37 = sld [smem:[%s36]]
  %s38 = scalar_lea.smem %s0, 19
  %s39 = sld [smem:[%s38]]
  %s40 = scalar_lea.smem %s0, 20
  %s41 = sld [smem:[%s40]]
  %s42 = scalar_lea.smem %s0, 21
  %s43 = sld [smem:[%s42]]
  %s44 = scalar_lea.smem %s0, 22
  %s45 = sld [smem:[%s44]]
  %s46 = scalar_lea.smem %s0, 23
  %s47 = sld [smem:[%s46]]
  %s48 = scalar_lea.smem %s0, 24
  %s49 = sld [smem:[%s48]]
  %s50 = scalar_lea.smem %s0, 25
  %s51 = sld [smem:[%s50]]
  %s52 = scalar_lea.smem %s0, 26
  %s53 = sld [smem:[%s52]]
  %s54 = scalar_lea.smem %s0, 27
  %s55 = sld [smem:[%s54]]
  %s56 = scalar_lea.smem %s0, 28
  %s57 = sld [smem:[%s56]]
  %s58 = scalar_lea.smem %s0, 29
  %s59 = sld [smem:[%s58]]
  %s60 = scalar_lea.smem %s0, 30
  %s61 = sld [smem:[%s60]]
  %s62 = scalar_lea.smem %s0, 31
  %s63 = sld [smem:[%s62]]
  %s64 = scalar_lea.smem %s0, 32
  %s65 = sld [smem:[%s64]]
  %s66 = scalar_lea.smem %s0, 33
  %s67 = sld [smem:[%s66]]
  %s68 = scalar_lea.smem %s0, 34
  %s69 = sld [smem:[%s68]]
  %s70 = sld [smem:[#allocation0]]
  $region169: #{point_transformer_forward.1} parent=0
    _
  %s72 = ssub.s32 1, %s70
  %s73 = scalar_select 0, %s72, %s70
  $region1: #{point_transformer_forward.1} parent=0
    #allocation2 [shape = 'u8[1024]{0}', space=vmem, size = 0x400, scoped, tag = 'output window, operand 0']
    #allocation3 [shape = 's32[2]{0}', space=sflag, size = 0x8, scoped, tag = 'scoped memory for point_transformer_forward.1']
    %74 = vsyncpa [#allocation3], 0
    %s75 = scalar_lea.sflag [#allocation3], 1
    %76 = vsyncpa %s75, 0
    loop: start=0, step=1, limit=4
    $region2: #{point_transformer_forward.1} parent=1 // loop_pre_header
      _
    $region3: #{point_transformer_forward.1} parent=1 // loop_header
      %s78 = sphi 0, %s82
      %p79 = scmp.ge.s32.totalorder %s78, 4
      %s88 = sphi 0, %s90
      %s91 = sphi 0, %s88
      %s92 = sphi 0, %s91
      %s108 = sphi 0, %s92
      %s114 = sphi 0, %s116
      %s117 = sphi 0, %s114
      %s118 = sphi 0, %s117
      %s134 = sphi 0, %s118
      %s138 = sphi 0, %s138
      %s140 = sphi 0, %s138
      %s141 = sphi 0, %s140
      %s155 = sphi 0, %s141
      %s159 = sphi 0, %s159
      %s161 = sphi 0, %s159
      %s162 = sphi 0, %s161
      %s176 = sphi 0, %s162
      %s180 = sphi 0, %s180
      %s182 = sphi 0, %s180
      %s183 = sphi 0, %s182
      %s197 = sphi 0, %s183
      %s201 = sphi 0, %s201
      %s203 = sphi 0, %s201
      %s204 = sphi 0, %s203
      %s218 = sphi 0, %s204
      %s222 = sphi 0, %s222
      %s224 = sphi 0, %s222
      %s225 = sphi 0, %s224
      %s239 = sphi 0, %s225
      %s243 = sphi 0, %s243
      %s245 = sphi 0, %s243
      %s246 = sphi 0, %s245
      %s260 = sphi 0, %s246
      %s264 = sphi 0, %s264
      %s266 = sphi 0, %s264
      %s267 = sphi 0, %s266
      %s281 = sphi 0, %s267
      %s285 = sphi 0, %s285
      %s287 = sphi 0, %s285
      %s288 = sphi 0, %s287
      %s302 = sphi 0, %s288
      %s306 = sphi 0, %s306
      %s308 = sphi 0, %s306
      %s309 = sphi 0, %s308
      %s323 = sphi 0, %s309
      %s327 = sphi 0, %s327
      %s329 = sphi 0, %s327
      %s330 = sphi 0, %s329
      %s344 = sphi 0, %s330
      %s348 = sphi 0, %s348
      %s350 = sphi 0, %s348
      %s351 = sphi 0, %s350
      %s365 = sphi 0, %s351
      %s369 = sphi 0, %s369
      %s371 = sphi 0, %s369
      %s372 = sphi 0, %s371
      %s386 = sphi 0, %s372
      %s390 = sphi 0, %s390
      %s392 = sphi 0, %s390
      %s393 = sphi 0, %s392
      %s407 = sphi 0, %s393
      %s411 = sphi 0, %s411
      %s413 = sphi 0, %s411
      %s414 = sphi 0, %s413
      %s428 = sphi 0, %s414
      %s432 = sphi 0, %s432
      %s434 = sphi 0, %s432
      %s435 = sphi 0, %s434
      %s449 = sphi 0, %s435
      %s453 = sphi 0, %s453
      %s455 = sphi 0, %s453
      %s456 = sphi 0, %s455
      %s470 = sphi 0, %s456
      %s474 = sphi 0, %s474
      %s476 = sphi 0, %s474
      %s477 = sphi 0, %s476
      %s491 = sphi 0, %s477
      %s495 = sphi 0, %s495
      %s497 = sphi 0, %s495
      %s498 = sphi 0, %s497
      %s512 = sphi 0, %s498
      %s516 = sphi 0, %s516
      %s518 = sphi 0, %s516
      %s519 = sphi 0, %s518
      %s533 = sphi 0, %s519
      %s537 = sphi 0, %s537
      %s539 = sphi 0, %s537
      %s540 = sphi 0, %s539
      %s554 = sphi 0, %s540
      %s558 = sphi 0, %s558
      %s560 = sphi 0, %s558
      %s561 = sphi 0, %s560
      %s575 = sphi 0, %s561
      %s579 = sphi 0, %s579
      %s581 = sphi 0, %s579
      %s582 = sphi 0, %s581
      %s596 = sphi 0, %s582
      %s600 = sphi 0, %s600
      %s602 = sphi 0, %s600
      %s603 = sphi 0, %s602
      %s617 = sphi 0, %s603
      %s621 = sphi 0, %s621
      %s623 = sphi 0, %s621
      %s624 = sphi 0, %s623
      %s638 = sphi 0, %s624
      %s642 = sphi 0, %s642
      %s644 = sphi 0, %s642
      %s645 = sphi 0, %s644
      %s659 = sphi 0, %s645
      %s663 = sphi 0, %s663
      %s665 = sphi 0, %s663
      %s666 = sphi 0, %s665
      %s680 = sphi 0, %s666
      %s684 = sphi 0, %s684
      %s686 = sphi 0, %s684
      %s687 = sphi 0, %s686
      %s701 = sphi 0, %s687
      %s705 = sphi 0, %s705
      %s707 = sphi 0, %s705
      %s708 = sphi 0, %s707
      %s722 = sphi 0, %s708
      %s726 = sphi 0, %s726
      %s728 = sphi 0, %s726
      %s729 = sphi 0, %s728
      %s743 = sphi 0, %s729
      %s747 = sphi 0, %s747
      %s749 = sphi 0, %s747
      %s750 = sphi 0, %s749
      %s764 = sphi 0, %s750
      %s768 = sphi 0, %s768
      %s770 = sphi 0, %s768
      %s771 = sphi 0, %s770
      %s785 = sphi 0, %s771
      %s789 = sphi 0, %s789
      %s791 = sphi 0, %s789
      %s792 = sphi 0, %s791
      %s806 = sphi 0, %s792
      %s812 = sphi 0, %s814
      %s815 = sphi 0, %s812
      %s816 = sphi 0, %s815
      %s832 = sphi 0, %s816
    $region4: #{point_transformer_forward.1} parent=1 // loop_header_branch
      %81 = sbr.rel (%p79) target = $region8
    $region5: #{point_transformer_forward.1} parent=1 // loop_body
      %s83 = ssub.s32 %s78, 1
      %s84 = ssub.s32 %s78, 2
      %s85 = sadd.s32 %s78, 1
      %s86 = ssub.s32 %s78, %s85
      %p87 = scmp.eq.s32.totalorder %s86, 0
      %s89 = sadd.s32 %s88, 1
      %s90 = scalar_select %p87, %s88, %s89
      %p93 = pneg %p87
      %p94 = scmp.eq.s32.totalorder %s78, 1
      %p95 = por %p93, %p94
      %p96 = scmp.ne.s32.totalorder %s88, %s91
      %p97 = scmp.eq.s32.totalorder %s78, 0
      %p98 = por %p96, %p97
      %p99 = scmp.ne.s32.totalorder %s88, %s91
      %p100 = scmp.eq.s32.totalorder %s83, 1
      %p101 = por %p99, %p100
      %p102 = scmp.ne.s32.totalorder %s91, %s92
      %p103 = scmp.eq.s32.totalorder %s83, 0
      %p104 = por %p102, %p103
      %p105 = scmp.ne.s32.totalorder %s91, %s92
      %p106 = scmp.eq.s32.totalorder %s84, 1
      %p107 = por %p105, %p106
      %p109 = scmp.ne.s32.totalorder %s92, %s108
      %p110 = scmp.eq.s32.totalorder %s84, 0
      %p111 = por %p109, %p110
      %s112 = ssub.s32 %s78, %s85
      %p113 = scmp.eq.s32.totalorder %s112, 0
      %s115 = sadd.s32 %s114, 1
      %s116 = scalar_select %p113, %s114, %s115
      %p119 = pneg %p113
      %p120 = scmp.eq.s32.totalorder %s78, 1
      %p121 = por %p119, %p120
      %p122 = scmp.ne.s32.totalorder %s114, %s117
      %p123 = scmp.eq.s32.totalorder %s78, 0
      %p124 = por %p122, %p123
      %p125 = scmp.ne.s32.totalorder %s114, %s117
      %p126 = scmp.eq.s32.totalorder %s83, 1
      %p127 = por %p125, %p126
      %p128 = scmp.ne.s32.totalorder %s117, %s118
      %p129 = scmp.eq.s32.totalorder %s83, 0
      %p130 = por %p128, %p129
      %p131 = scmp.ne.s32.totalorder %s117, %s118
      %p132 = scmp.eq.s32.totalorder %s84, 1
      %p133 = por %p131, %p132
      %p135 = scmp.ne.s32.totalorder %s118, %s134
      %p136 = scmp.eq.s32.totalorder %s84, 0
      %p137 = por %p135, %p136
      %s139 = sadd.s32 %s138, 1
      %p142 = scmp.eq.s32.totalorder %s78, 1
      %p143 = scmp.ne.s32.totalorder %s138, %s140
      %p144 = scmp.eq.s32.totalorder %s78, 0
      %p145 = por %p143, %p144
      %p146 = scmp.ne.s32.totalorder %s138, %s140
      %p147 = scmp.eq.s32.totalorder %s83, 1
      %p148 = por %p146, %p147
      %p149 = scmp.ne.s32.totalorder %s140, %s141
      %p150 = scmp.eq.s32.totalorder %s83, 0
      %p151 = por %p149, %p150
      %p152 = scmp.ne.s32.totalorder %s140, %s141
      %p153 = scmp.eq.s32.totalorder %s84, 1
      %p154 = por %p152, %p153
      %p156 = scmp.ne.s32.totalorder %s141, %s155
      %p157 = scmp.eq.s32.totalorder %s84, 0
      %p158 = por %p156, %p157
      %s160 = sadd.s32 %s159, 1
      %p163 = scmp.eq.s32.totalorder %s78, 1
      %p164 = scmp.ne.s32.totalorder %s159, %s161
      %p165 = scmp.eq.s32.totalorder %s78, 0
      %p166 = por %p164, %p165
      %p167 = scmp.ne.s32.totalorder %s159, %s161
      %p168 = scmp.eq.s32.totalorder %s83, 1
      %p169 = por %p167, %p168
      %p170 = scmp.ne.s32.totalorder %s161, %s162
      %p171 = scmp.eq.s32.totalorder %s83, 0
      %p172 = por %p170, %p171
      %p173 = scmp.ne.s32.totalorder %s161, %s162
      %p174 = scmp.eq.s32.totalorder %s84, 1
      %p175 = por %p173, %p174
      %p177 = scmp.ne.s32.totalorder %s162, %s176
      %p178 = scmp.eq.s32.totalorder %s84, 0
      %p179 = por %p177, %p178
      %s181 = sadd.s32 %s180, 1
      %p184 = scmp.eq.s32.totalorder %s78, 1
      %p185 = scmp.ne.s32.totalorder %s180, %s182
      %p186 = scmp.eq.s32.totalorder %s78, 0
      %p187 = por %p185, %p186
      %p188 = scmp.ne.s32.totalorder %s180, %s182
      %p189 = scmp.eq.s32.totalorder %s83, 1
      %p190 = por %p188, %p189
      %p191 = scmp.ne.s32.totalorder %s182, %s183
      %p192 = scmp.eq.s32.totalorder %s83, 0
      %p193 = por %p191, %p192
      %p194 = scmp.ne.s32.totalorder %s182, %s183
      %p195 = scmp.eq.s32.totalorder %s84, 1
      %p196 = por %p194, %p195
      %p198 = scmp.ne.s32.totalorder %s183, %s197
      %p199 = scmp.eq.s32.totalorder %s84, 0
      %p200 = por %p198, %p199
      %s202 = sadd.s32 %s201, 1
      %p205 = scmp.eq.s32.totalorder %s78, 1
      %p206 = scmp.ne.s32.totalorder %s201, %s203
      %p207 = scmp.eq.s32.totalorder %s78, 0
      %p208 = por %p206, %p207
      %p209 = scmp.ne.s32.totalorder %s201, %s203
      %p210 = scmp.eq.s32.totalorder %s83, 1
      %p211 = por %p209, %p210
      %p212 = scmp.ne.s32.totalorder %s203, %s204
      %p213 = scmp.eq.s32.totalorder %s83, 0
      %p214 = por %p212, %p213
      %p215 = scmp.ne.s32.totalorder %s203, %s204
      %p216 = scmp.eq.s32.totalorder %s84, 1
      %p217 = por %p215, %p216
      %p219 = scmp.ne.s32.totalorder %s204, %s218
      %p220 = scmp.eq.s32.totalorder %s84, 0
      %p221 = por %p219, %p220
      %s223 = sadd.s32 %s222, 1
      %p226 = scmp.eq.s32.totalorder %s78, 1
      %p227 = scmp.ne.s32.totalorder %s222, %s224
      %p228 = scmp.eq.s32.totalorder %s78, 0
      %p229 = por %p227, %p228
      %p230 = scmp.ne.s32.totalorder %s222, %s224
      %p231 = scmp.eq.s32.totalorder %s83, 1
      %p232 = por %p230, %p231
      %p233 = scmp.ne.s32.totalorder %s224, %s225
      %p234 = scmp.eq.s32.totalorder %s83, 0
      %p235 = por %p233, %p234
      %p236 = scmp.ne.s32.totalorder %s224, %s225
      %p237 = scmp.eq.s32.totalorder %s84, 1
      %p238 = por %p236, %p237
      %p240 = scmp.ne.s32.totalorder %s225, %s239
      %p241 = scmp.eq.s32.totalorder %s84, 0
      %p242 = por %p240, %p241
      %s244 = sadd.s32 %s243, 1
      %p247 = scmp.eq.s32.totalorder %s78, 1
      %p248 = scmp.ne.s32.totalorder %s243, %s245
      %p249 = scmp.eq.s32.totalorder %s78, 0
      %p250 = por %p248, %p249
      %p251 = scmp.ne.s32.totalorder %s243, %s245
      %p252 = scmp.eq.s32.totalorder %s83, 1
      %p253 = por %p251, %p252
      %p254 = scmp.ne.s32.totalorder %s245, %s246
      %p255 = scmp.eq.s32.totalorder %s83, 0
      %p256 = por %p254, %p255
      %p257 = scmp.ne.s32.totalorder %s245, %s246
      %p258 = scmp.eq.s32.totalorder %s84, 1
      %p259 = por %p257, %p258
      %p261 = scmp.ne.s32.totalorder %s246, %s260
      %p262 = scmp.eq.s32.totalorder %s84, 0
      %p263 = por %p261, %p262
      %s265 = sadd.s32 %s264, 1
      %p268 = scmp.eq.s32.totalorder %s78, 1
      %p269 = scmp.ne.s32.totalorder %s264, %s266
      %p270 = scmp.eq.s32.totalorder %s78, 0
      %p271 = por %p269, %p270
      %p272 = scmp.ne.s32.totalorder %s264, %s266
      %p273 = scmp.eq.s32.totalorder %s83, 1
      %p274 = por %p272, %p273
      %p275 = scmp.ne.s32.totalorder %s266, %s267
      %p276 = scmp.eq.s32.totalorder %s83, 0
      %p277 = por %p275, %p276
      %p278 = scmp.ne.s32.totalorder %s266, %s267
      %p279 = scmp.eq.s32.totalorder %s84, 1
      %p280 = por %p278, %p279
      %p282 = scmp.ne.s32.totalorder %s267, %s281
      %p283 = scmp.eq.s32.totalorder %s84, 0
      %p284 = por %p282, %p283
      %s286 = sadd.s32 %s285, 1
      %p289 = scmp.eq.s32.totalorder %s78, 1
      %p290 = scmp.ne.s32.totalorder %s285, %s287
      %p291 = scmp.eq.s32.totalorder %s78, 0
      %p292 = por %p290, %p291
      %p293 = scmp.ne.s32.totalorder %s285, %s287
      %p294 = scmp.eq.s32.totalorder %s83, 1
      %p295 = por %p293, %p294
      %p296 = scmp.ne.s32.totalorder %s287, %s288
      %p297 = scmp.eq.s32.totalorder %s83, 0
      %p298 = por %p296, %p297
      %p299 = scmp.ne.s32.totalorder %s287, %s288
      %p300 = scmp.eq.s32.totalorder %s84, 1
      %p301 = por %p299, %p300
      %p303 = scmp.ne.s32.totalorder %s288, %s302
      %p304 = scmp.eq.s32.totalorder %s84, 0
      %p305 = por %p303, %p304
      %s307 = sadd.s32 %s306, 1
      %p310 = scmp.eq.s32.totalorder %s78, 1
      %p311 = scmp.ne.s32.totalorder %s306, %s308
      %p312 = scmp.eq.s32.totalorder %s78, 0
      %p313 = por %p311, %p312
      %p314 = scmp.ne.s32.totalorder %s306, %s308
      %p315 = scmp.eq.s32.totalorder %s83, 1
      %p316 = por %p314, %p315
      %p317 = scmp.ne.s32.totalorder %s308, %s309
      %p318 = scmp.eq.s32.totalorder %s83, 0
      %p319 = por %p317, %p318
      %p320 = scmp.ne.s32.totalorder %s308, %s309
      %p321 = scmp.eq.s32.totalorder %s84, 1
      %p322 = por %p320, %p321
      %p324 = scmp.ne.s32.totalorder %s309, %s323
      %p325 = scmp.eq.s32.totalorder %s84, 0
      %p326 = por %p324, %p325
      %s328 = sadd.s32 %s327, 1
      %p331 = scmp.eq.s32.totalorder %s78, 1
      %p332 = scmp.ne.s32.totalorder %s327, %s329
      %p333 = scmp.eq.s32.totalorder %s78, 0
      %p334 = por %p332, %p333
      %p335 = scmp.ne.s32.totalorder %s327, %s329
      %p336 = scmp.eq.s32.totalorder %s83, 1
      %p337 = por %p335, %p336
      %p338 = scmp.ne.s32.totalorder %s329, %s330
      %p339 = scmp.eq.s32.totalorder %s83, 0
      %p340 = por %p338, %p339
      %p341 = scmp.ne.s32.totalorder %s329, %s330
      %p342 = scmp.eq.s32.totalorder %s84, 1
      %p343 = por %p341, %p342
      %p345 = scmp.ne.s32.totalorder %s330, %s344
      %p346 = scmp.eq.s32.totalorder %s84, 0
      %p347 = por %p345, %p346
      %s349 = sadd.s32 %s348, 1
      %p352 = scmp.eq.s32.totalorder %s78, 1
      %p353 = scmp.ne.s32.totalorder %s348, %s350
      %p354 = scmp.eq.s32.totalorder %s78, 0
      %p355 = por %p353, %p354
      %p356 = scmp.ne.s32.totalorder %s348, %s350
      %p357 = scmp.eq.s32.totalorder %s83, 1
      %p358 = por %p356, %p357
      %p359 = scmp.ne.s32.totalorder %s350, %s351
      %p360 = scmp.eq.s32.totalorder %s83, 0
      %p361 = por %p359, %p360
      %p362 = scmp.ne.s32.totalorder %s350, %s351
      %p363 = scmp.eq.s32.totalorder %s84, 1
      %p364 = por %p362, %p363
      %p366 = scmp.ne.s32.totalorder %s351, %s365
      %p367 = scmp.eq.s32.totalorder %s84, 0
      %p368 = por %p366, %p367
      %s370 = sadd.s32 %s369, 1
      %p373 = scmp.eq.s32.totalorder %s78, 1
      %p374 = scmp.ne.s32.totalorder %s369, %s371
      %p375 = scmp.eq.s32.totalorder %s78, 0
      %p376 = por %p374, %p375
      %p377 = scmp.ne.s32.totalorder %s369, %s371
      %p378 = scmp.eq.s32.totalorder %s83, 1
      %p379 = por %p377, %p378
      %p380 = scmp.ne.s32.totalorder %s371, %s372
      %p381 = scmp.eq.s32.totalorder %s83, 0
      %p382 = por %p380, %p381
      %p383 = scmp.ne.s32.totalorder %s371, %s372
      %p384 = scmp.eq.s32.totalorder %s84, 1
      %p385 = por %p383, %p384
      %p387 = scmp.ne.s32.totalorder %s372, %s386
      %p388 = scmp.eq.s32.totalorder %s84, 0
      %p389 = por %p387, %p388
      %s391 = sadd.s32 %s390, 1
      %p394 = scmp.eq.s32.totalorder %s78, 1
      %p395 = scmp.ne.s32.totalorder %s390, %s392
      %p396 = scmp.eq.s32.totalorder %s78, 0
      %p397 = por %p395, %p396
      %p398 = scmp.ne.s32.totalorder %s390, %s392
      %p399 = scmp.eq.s32.totalorder %s83, 1
      %p400 = por %p398, %p399
      %p401 = scmp.ne.s32.totalorder %s392, %s393
      %p402 = scmp.eq.s32.totalorder %s83, 0
      %p403 = por %p401, %p402
      %p404 = scmp.ne.s32.totalorder %s392, %s393
      %p405 = scmp.eq.s32.totalorder %s84, 1
      %p406 = por %p404, %p405
      %p408 = scmp.ne.s32.totalorder %s393, %s407
      %p409 = scmp.eq.s32.totalorder %s84, 0
      %p410 = por %p408, %p409
      %s412 = sadd.s32 %s411, 1
      %p415 = scmp.eq.s32.totalorder %s78, 1
      %p416 = scmp.ne.s32.totalorder %s411, %s413
      %p417 = scmp.eq.s32.totalorder %s78, 0
      %p418 = por %p416, %p417
      %p419 = scmp.ne.s32.totalorder %s411, %s413
      %p420 = scmp.eq.s32.totalorder %s83, 1
      %p421 = por %p419, %p420
      %p422 = scmp.ne.s32.totalorder %s413, %s414
      %p423 = scmp.eq.s32.totalorder %s83, 0
      %p424 = por %p422, %p423
      %p425 = scmp.ne.s32.totalorder %s413, %s414
      %p426 = scmp.eq.s32.totalorder %s84, 1
      %p427 = por %p425, %p426
      %p429 = scmp.ne.s32.totalorder %s414, %s428
      %p430 = scmp.eq.s32.totalorder %s84, 0
      %p431 = por %p429, %p430
      %s433 = sadd.s32 %s432, 1
      %p436 = scmp.eq.s32.totalorder %s78, 1
      %p437 = scmp.ne.s32.totalorder %s432, %s434
      %p438 = scmp.eq.s32.totalorder %s78, 0
      %p439 = por %p437, %p438
      %p440 = scmp.ne.s32.totalorder %s432, %s434
      %p441 = scmp.eq.s32.totalorder %s83, 1
      %p442 = por %p440, %p441
      %p443 = scmp.ne.s32.totalorder %s434, %s435
      %p444 = scmp.eq.s32.totalorder %s83, 0
      %p445 = por %p443, %p444
      %p446 = scmp.ne.s32.totalorder %s434, %s435
      %p447 = scmp.eq.s32.totalorder %s84, 1
      %p448 = por %p446, %p447
      %p450 = scmp.ne.s32.totalorder %s435, %s449
      %p451 = scmp.eq.s32.totalorder %s84, 0
      %p452 = por %p450, %p451
      %s454 = sadd.s32 %s453, 1
      %p457 = scmp.eq.s32.totalorder %s78, 1
      %p458 = scmp.ne.s32.totalorder %s453, %s455
      %p459 = scmp.eq.s32.totalorder %s78, 0
      %p460 = por %p458, %p459
      %p461 = scmp.ne.s32.totalorder %s453, %s455
      %p462 = scmp.eq.s32.totalorder %s83, 1
      %p463 = por %p461, %p462
      %p464 = scmp.ne.s32.totalorder %s455, %s456
      %p465 = scmp.eq.s32.totalorder %s83, 0
      %p466 = por %p464, %p465
      %p467 = scmp.ne.s32.totalorder %s455, %s456
      %p468 = scmp.eq.s32.totalorder %s84, 1
      %p469 = por %p467, %p468
      %p471 = scmp.ne.s32.totalorder %s456, %s470
      %p472 = scmp.eq.s32.totalorder %s84, 0
      %p473 = por %p471, %p472
      %s475 = sadd.s32 %s474, 1
      %p478 = scmp.eq.s32.totalorder %s78, 1
      %p479 = scmp.ne.s32.totalorder %s474, %s476
      %p480 = scmp.eq.s32.totalorder %s78, 0
      %p481 = por %p479, %p480
      %p482 = scmp.ne.s32.totalorder %s474, %s476
      %p483 = scmp.eq.s32.totalorder %s83, 1
      %p484 = por %p482, %p483
      %p485 = scmp.ne.s32.totalorder %s476, %s477
      %p486 = scmp.eq.s32.totalorder %s83, 0
      %p487 = por %p485, %p486
      %p488 = scmp.ne.s32.totalorder %s476, %s477
      %p489 = scmp.eq.s32.totalorder %s84, 1
      %p490 = por %p488, %p489
      %p492 = scmp.ne.s32.totalorder %s477, %s491
      %p493 = scmp.eq.s32.totalorder %s84, 0
      %p494 = por %p492, %p493
      %s496 = sadd.s32 %s495, 1
      %p499 = scmp.eq.s32.totalorder %s78, 1
      %p500 = scmp.ne.s32.totalorder %s495, %s497
      %p501 = scmp.eq.s32.totalorder %s78, 0
      %p502 = por %p500, %p501
      %p503 = scmp.ne.s32.totalorder %s495, %s497
      %p504 = scmp.eq.s32.totalorder %s83, 1
      %p505 = por %p503, %p504
      %p506 = scmp.ne.s32.totalorder %s497, %s498
      %p507 = scmp.eq.s32.totalorder %s83, 0
      %p508 = por %p506, %p507
      %p509 = scmp.ne.s32.totalorder %s497, %s498
      %p510 = scmp.eq.s32.totalorder %s84, 1
      %p511 = por %p509, %p510
      %p513 = scmp.ne.s32.totalorder %s498, %s512
      %p514 = scmp.eq.s32.totalorder %s84, 0
      %p515 = por %p513, %p514
      %s517 = sadd.s32 %s516, 1
      %p520 = scmp.eq.s32.totalorder %s78, 1
      %p521 = scmp.ne.s32.totalorder %s516, %s518
      %p522 = scmp.eq.s32.totalorder %s78, 0
      %p523 = por %p521, %p522
      %p524 = scmp.ne.s32.totalorder %s516, %s518
      %p525 = scmp.eq.s32.totalorder %s83, 1
      %p526 = por %p524, %p525
      %p527 = scmp.ne.s32.totalorder %s518, %s519
      %p528 = scmp.eq.s32.totalorder %s83, 0
      %p529 = por %p527, %p528
      %p530 = scmp.ne.s32.totalorder %s518, %s519
      %p531 = scmp.eq.s32.totalorder %s84, 1
      %p532 = por %p530, %p531
      %p534 = scmp.ne.s32.totalorder %s519, %s533
      %p535 = scmp.eq.s32.totalorder %s84, 0
      %p536 = por %p534, %p535
      %s538 = sadd.s32 %s537, 1
      %p541 = scmp.eq.s32.totalorder %s78, 1
      %p542 = scmp.ne.s32.totalorder %s537, %s539
      %p543 = scmp.eq.s32.totalorder %s78, 0
      %p544 = por %p542, %p543
      %p545 = scmp.ne.s32.totalorder %s537, %s539
      %p546 = scmp.eq.s32.totalorder %s83, 1
      %p547 = por %p545, %p546
      %p548 = scmp.ne.s32.totalorder %s539, %s540
      %p549 = scmp.eq.s32.totalorder %s83, 0
      %p550 = por %p548, %p549
      %p551 = scmp.ne.s32.totalorder %s539, %s540
      %p552 = scmp.eq.s32.totalorder %s84, 1
      %p553 = por %p551, %p552
      %p555 = scmp.ne.s32.totalorder %s540, %s554
      %p556 = scmp.eq.s32.totalorder %s84, 0
      %p557 = por %p555, %p556
      %s559 = sadd.s32 %s558, 1
      %p562 = scmp.eq.s32.totalorder %s78, 1
      %p563 = scmp.ne.s32.totalorder %s558, %s560
      %p564 = scmp.eq.s32.totalorder %s78, 0
      %p565 = por %p563, %p564
      %p566 = scmp.ne.s32.totalorder %s558, %s560
      %p567 = scmp.eq.s32.totalorder %s83, 1
      %p568 = por %p566, %p567
      %p569 = scmp.ne.s32.totalorder %s560, %s561
      %p570 = scmp.eq.s32.totalorder %s83, 0
      %p571 = por %p569, %p570
      %p572 = scmp.ne.s32.totalorder %s560, %s561
      %p573 = scmp.eq.s32.totalorder %s84, 1
      %p574 = por %p572, %p573
      %p576 = scmp.ne.s32.totalorder %s561, %s575
      %p577 = scmp.eq.s32.totalorder %s84, 0
      %p578 = por %p576, %p577
      %s580 = sadd.s32 %s579, 1
      %p583 = scmp.eq.s32.totalorder %s78, 1
      %p584 = scmp.ne.s32.totalorder %s579, %s581
      %p585 = scmp.eq.s32.totalorder %s78, 0
      %p586 = por %p584, %p585
      %p587 = scmp.ne.s32.totalorder %s579, %s581
      %p588 = scmp.eq.s32.totalorder %s83, 1
      %p589 = por %p587, %p588
      %p590 = scmp.ne.s32.totalorder %s581, %s582
      %p591 = scmp.eq.s32.totalorder %s83, 0
      %p592 = por %p590, %p591
      %p593 = scmp.ne.s32.totalorder %s581, %s582
      %p594 = scmp.eq.s32.totalorder %s84, 1
      %p595 = por %p593, %p594
      %p597 = scmp.ne.s32.totalorder %s582, %s596
      %p598 = scmp.eq.s32.totalorder %s84, 0
      %p599 = por %p597, %p598
      %s601 = sadd.s32 %s600, 1
      %p604 = scmp.eq.s32.totalorder %s78, 1
      %p605 = scmp.ne.s32.totalorder %s600, %s602
      %p606 = scmp.eq.s32.totalorder %s78, 0
      %p607 = por %p605, %p606
      %p608 = scmp.ne.s32.totalorder %s600, %s602
      %p609 = scmp.eq.s32.totalorder %s83, 1
      %p610 = por %p608, %p609
      %p611 = scmp.ne.s32.totalorder %s602, %s603
      %p612 = scmp.eq.s32.totalorder %s83, 0
      %p613 = por %p611, %p612
      %p614 = scmp.ne.s32.totalorder %s602, %s603
      %p615 = scmp.eq.s32.totalorder %s84, 1
      %p616 = por %p614, %p615
      %p618 = scmp.ne.s32.totalorder %s603, %s617
      %p619 = scmp.eq.s32.totalorder %s84, 0
      %p620 = por %p618, %p619
      %s622 = sadd.s32 %s621, 1
      %p625 = scmp.eq.s32.totalorder %s78, 1
      %p626 = scmp.ne.s32.totalorder %s621, %s623
      %p627 = scmp.eq.s32.totalorder %s78, 0
      %p628 = por %p626, %p627
      %p629 = scmp.ne.s32.totalorder %s621, %s623
      %p630 = scmp.eq.s32.totalorder %s83, 1
      %p631 = por %p629, %p630
      %p632 = scmp.ne.s32.totalorder %s623, %s624
      %p633 = scmp.eq.s32.totalorder %s83, 0
      %p634 = por %p632, %p633
      %p635 = scmp.ne.s32.totalorder %s623, %s624
      %p636 = scmp.eq.s32.totalorder %s84, 1
      %p637 = por %p635, %p636
      %p639 = scmp.ne.s32.totalorder %s624, %s638
      %p640 = scmp.eq.s32.totalorder %s84, 0
      %p641 = por %p639, %p640
      %s643 = sadd.s32 %s642, 1
      %p646 = scmp.eq.s32.totalorder %s78, 1
      %p647 = scmp.ne.s32.totalorder %s642, %s644
      %p648 = scmp.eq.s32.totalorder %s78, 0
      %p649 = por %p647, %p648
      %p650 = scmp.ne.s32.totalorder %s642, %s644
      %p651 = scmp.eq.s32.totalorder %s83, 1
      %p652 = por %p650, %p651
      %p653 = scmp.ne.s32.totalorder %s644, %s645
      %p654 = scmp.eq.s32.totalorder %s83, 0
      %p655 = por %p653, %p654
      %p656 = scmp.ne.s32.totalorder %s644, %s645
      %p657 = scmp.eq.s32.totalorder %s84, 1
      %p658 = por %p656, %p657
      %p660 = scmp.ne.s32.totalorder %s645, %s659
      %p661 = scmp.eq.s32.totalorder %s84, 0
      %p662 = por %p660, %p661
      %s664 = sadd.s32 %s663, 1
      %p667 = scmp.eq.s32.totalorder %s78, 1
      %p668 = scmp.ne.s32.totalorder %s663, %s665
      %p669 = scmp.eq.s32.totalorder %s78, 0
      %p670 = por %p668, %p669
      %p671 = scmp.ne.s32.totalorder %s663, %s665
      %p672 = scmp.eq.s32.totalorder %s83, 1
      %p673 = por %p671, %p672
      %p674 = scmp.ne.s32.totalorder %s665, %s666
      %p675 = scmp.eq.s32.totalorder %s83, 0
      %p676 = por %p674, %p675
      %p677 = scmp.ne.s32.totalorder %s665, %s666
      %p678 = scmp.eq.s32.totalorder %s84, 1
      %p679 = por %p677, %p678
      %p681 = scmp.ne.s32.totalorder %s666, %s680
      %p682 = scmp.eq.s32.totalorder %s84, 0
      %p683 = por %p681, %p682
      %s685 = sadd.s32 %s684, 1
      %p688 = scmp.eq.s32.totalorder %s78, 1
      %p689 = scmp.ne.s32.totalorder %s684, %s686
      %p690 = scmp.eq.s32.totalorder %s78, 0
      %p691 = por %p689, %p690
      %p692 = scmp.ne.s32.totalorder %s684, %s686
      %p693 = scmp.eq.s32.totalorder %s83, 1
      %p694 = por %p692, %p693
      %p695 = scmp.ne.s32.totalorder %s686, %s687
      %p696 = scmp.eq.s32.totalorder %s83, 0
      %p697 = por %p695, %p696
      %p698 = scmp.ne.s32.totalorder %s686, %s687
      %p699 = scmp.eq.s32.totalorder %s84, 1
      %p700 = por %p698, %p699
      %p702 = scmp.ne.s32.totalorder %s687, %s701
      %p703 = scmp.eq.s32.totalorder %s84, 0
      %p704 = por %p702, %p703
      %s706 = sadd.s32 %s705, 1
      %p709 = scmp.eq.s32.totalorder %s78, 1
      %p710 = scmp.ne.s32.totalorder %s705, %s707
      %p711 = scmp.eq.s32.totalorder %s78, 0
      %p712 = por %p710, %p711
      %p713 = scmp.ne.s32.totalorder %s705, %s707
      %p714 = scmp.eq.s32.totalorder %s83, 1
      %p715 = por %p713, %p714
      %p716 = scmp.ne.s32.totalorder %s707, %s708
      %p717 = scmp.eq.s32.totalorder %s83, 0
      %p718 = por %p716, %p717
      %p719 = scmp.ne.s32.totalorder %s707, %s708
      %p720 = scmp.eq.s32.totalorder %s84, 1
      %p721 = por %p719, %p720
      %p723 = scmp.ne.s32.totalorder %s708, %s722
      %p724 = scmp.eq.s32.totalorder %s84, 0
      %p725 = por %p723, %p724
      %s727 = sadd.s32 %s726, 1
      %p730 = scmp.eq.s32.totalorder %s78, 1
      %p731 = scmp.ne.s32.totalorder %s726, %s728
      %p732 = scmp.eq.s32.totalorder %s78, 0
      %p733 = por %p731, %p732
      %p734 = scmp.ne.s32.totalorder %s726, %s728
      %p735 = scmp.eq.s32.totalorder %s83, 1
      %p736 = por %p734, %p735
      %p737 = scmp.ne.s32.totalorder %s728, %s729
      %p738 = scmp.eq.s32.totalorder %s83, 0
      %p739 = por %p737, %p738
      %p740 = scmp.ne.s32.totalorder %s728, %s729
      %p741 = scmp.eq.s32.totalorder %s84, 1
      %p742 = por %p740, %p741
      %p744 = scmp.ne.s32.totalorder %s729, %s743
      %p745 = scmp.eq.s32.totalorder %s84, 0
      %p746 = por %p744, %p745
      %s748 = sadd.s32 %s747, 1
      %p751 = scmp.eq.s32.totalorder %s78, 1
      %p752 = scmp.ne.s32.totalorder %s747, %s749
      %p753 = scmp.eq.s32.totalorder %s78, 0
      %p754 = por %p752, %p753
      %p755 = scmp.ne.s32.totalorder %s747, %s749
      %p756 = scmp.eq.s32.totalorder %s83, 1
      %p757 = por %p755, %p756
      %p758 = scmp.ne.s32.totalorder %s749, %s750
      %p759 = scmp.eq.s32.totalorder %s83, 0
      %p760 = por %p758, %p759
      %p761 = scmp.ne.s32.totalorder %s749, %s750
      %p762 = scmp.eq.s32.totalorder %s84, 1
      %p763 = por %p761, %p762
      %p765 = scmp.ne.s32.totalorder %s750, %s764
      %p766 = scmp.eq.s32.totalorder %s84, 0
      %p767 = por %p765, %p766
      %s769 = sadd.s32 %s768, 1
      %p772 = scmp.eq.s32.totalorder %s78, 1
      %p773 = scmp.ne.s32.totalorder %s768, %s770
      %p774 = scmp.eq.s32.totalorder %s78, 0
      %p775 = por %p773, %p774
      %p776 = scmp.ne.s32.totalorder %s768, %s770
      %p777 = scmp.eq.s32.totalorder %s83, 1
      %p778 = por %p776, %p777
      %p779 = scmp.ne.s32.totalorder %s770, %s771
      %p780 = scmp.eq.s32.totalorder %s83, 0
      %p781 = por %p779, %p780
      %p782 = scmp.ne.s32.totalorder %s770, %s771
      %p783 = scmp.eq.s32.totalorder %s84, 1
      %p784 = por %p782, %p783
      %p786 = scmp.ne.s32.totalorder %s771, %s785
      %p787 = scmp.eq.s32.totalorder %s84, 0
      %p788 = por %p786, %p787
      %s790 = sadd.s32 %s789, 1
      %p793 = scmp.eq.s32.totalorder %s78, 1
      %p794 = scmp.ne.s32.totalorder %s789, %s791
      %p795 = scmp.eq.s32.totalorder %s78, 0
      %p796 = por %p794, %p795
      %p797 = scmp.ne.s32.totalorder %s789, %s791
      %p798 = scmp.eq.s32.totalorder %s83, 1
      %p799 = por %p797, %p798
      %p800 = scmp.ne.s32.totalorder %s791, %s792
      %p801 = scmp.eq.s32.totalorder %s83, 0
      %p802 = por %p800, %p801
      %p803 = scmp.ne.s32.totalorder %s791, %s792
      %p804 = scmp.eq.s32.totalorder %s84, 1
      %p805 = por %p803, %p804
      %p807 = scmp.ne.s32.totalorder %s792, %s806
      %p808 = scmp.eq.s32.totalorder %s84, 0
      %p809 = por %p807, %p808
      %s810 = ssub.s32 %s78, %s85
      %p811 = scmp.eq.s32.totalorder %s810, 0
      %s813 = sadd.s32 %s812, 1
      %s814 = scalar_select %p811, %s812, %s813
      %p817 = pneg %p811
      %p818 = scmp.eq.s32.totalorder %s78, 1
      %p819 = por %p817, %p818
      %p820 = scmp.ne.s32.totalorder %s812, %s815
      %p821 = scmp.eq.s32.totalorder %s78, 0
      %p822 = por %p820, %p821
      %p823 = scmp.ne.s32.totalorder %s812, %s815
      %p824 = scmp.eq.s32.totalorder %s83, 1
      %p825 = por %p823, %p824
      %p826 = scmp.ne.s32.totalorder %s815, %s816
      %p827 = scmp.eq.s32.totalorder %s83, 0
      %p828 = por %p826, %p827
      %p829 = scmp.ne.s32.totalorder %s815, %s816
      %p830 = scmp.eq.s32.totalorder %s84, 1
      %p831 = por %p829, %p830
      %p833 = scmp.ne.s32.totalorder %s816, %s832
      %p834 = scmp.eq.s32.totalorder %s84, 0
      %p835 = por %p833, %p834
      %p836 = scmp.le.s32.totalorder 1, %s78
      %p837 = scmp.lt.s32.totalorder %s78, 3
      %p838 = pnand %p836, %p837
      %p839 = pneg %p838
      // Predicated region
      $region9: #{point_transformer_forward.1} parent=5 // pred_check
        _
      $region10: #{point_transformer_forward.1} parent=5 // pred_check_branch
        %841 = sbr.rel (%p838) target = $region12
      $region11: #{point_transformer_forward.1} parent=5 // pred_region
        %s842 = ssub.s32 %s78, 1
        // Predicated region
        $region13: #{point_transformer_forward.1} parent=11 // pred_check
          %p843 = pneg %p151
        $region14: #{point_transformer_forward.1} parent=11 // pred_check_branch
          %845 = sbr.rel (%p843) target = $region16
        $region15: #{point_transformer_forward.1} parent=11 // pred_region
          _
        $region16: #{point_transformer_forward.1} parent=11 // pred_fallthru
          _
        // Predicated region
        $region17: #{point_transformer_forward.1} parent=11 // pred_check
          %p846 = pneg %p172
        $region18: #{point_transformer_forward.1} parent=11 // pred_check_branch
          %848 = sbr.rel (%p846) target = $region20
        $region19: #{point_transformer_forward.1} parent=11 // pred_region
          _
        $region20: #{point_transformer_forward.1} parent=11 // pred_fallthru
          _
        // Predicated region
        $region21: #{point_transformer_forward.1} parent=11 // pred_check
          %p849 = pneg %p193
        $region22: #{point_transformer_forward.1} parent=11 // pred_check_branch
          %851 = sbr.rel (%p849) target = $region24
        $region23: #{point_transformer_forward.1} parent=11 // pred_region
          _
        $region24: #{point_transformer_forward.1} parent=11 // pred_fallthru
          _
        // Predicated region
        $region25: #{point_transformer_forward.1} parent=11 // pred_check
          %p852 = pneg %p214
        $region26: #{point_transformer_forward.1} parent=11 // pred_check_branch
          %854 = sbr.rel (%p852) target = $region28
        $region27: #{point_transformer_forward.1} parent=11 // pred_region
          _
        $region28: #{point_transformer_forward.1} parent=11 // pred_fallthru
          _
        // Predicated region
        $region29: #{point_transformer_forward.1} parent=11 // pred_check
          %p855 = pneg %p235
        $region30: #{point_transformer_forward.1} parent=11 // pred_check_branch
          %857 = sbr.rel (%p855) target = $region32
        $region31: #{point_transformer_forward.1} parent=11 // pred_region
          _
        $region32: #{point_transformer_forward.1} parent=11 // pred_fallthru
          _
        // Predicated region
        $region33: #{point_transformer_forward.1} parent=11 // pred_check
          %p858 = pneg %p256
        $region34: #{point_transformer_forward.1} parent=11 // pred_check_branch
          %860 = sbr.rel (%p858) target = $region36
        $region35: #{point_transformer_forward.1} parent=11 // pred_region
          _
        $region36: #{point_transformer_forward.1} parent=11 // pred_fallthru
          _
        // Predicated region
        $region37: #{point_transformer_forward.1} parent=11 // pred_check
          %p861 = pneg %p277
        $region38: #{point_transformer_forward.1} parent=11 // pred_check_branch
          %863 = sbr.rel (%p861) target = $region40
        $region39: #{point_transformer_forward.1} parent=11 // pred_region
          _
        $region40: #{point_transformer_forward.1} parent=11 // pred_fallthru
          _
        // Predicated region
        $region41: #{point_transformer_forward.1} parent=11 // pred_check
          %p864 = pneg %p298
        $region42: #{point_transformer_forward.1} parent=11 // pred_check_branch
          %866 = sbr.rel (%p864) target = $region44
        $region43: #{point_transformer_forward.1} parent=11 // pred_region
          _
        $region44: #{point_transformer_forward.1} parent=11 // pred_fallthru
          _
        // Predicated region
        $region45: #{point_transformer_forward.1} parent=11 // pred_check
          %p867 = pneg %p319
        $region46: #{point_transformer_forward.1} parent=11 // pred_check_branch
          %869 = sbr.rel (%p867) target = $region48
        $region47: #{point_transformer_forward.1} parent=11 // pred_region
          _
        $region48: #{point_transformer_forward.1} parent=11 // pred_fallthru
          _
        // Predicated region
        $region49: #{point_transformer_forward.1} parent=11 // pred_check
          %p870 = pneg %p340
        $region50: #{point_transformer_forward.1} parent=11 // pred_check_branch
          %872 = sbr.rel (%p870) target = $region52
        $region51: #{point_transformer_forward.1} parent=11 // pred_region
          _
        $region52: #{point_transformer_forward.1} parent=11 // pred_fallthru
          _
        // Predicated region
        $region53: #{point_transformer_forward.1} parent=11 // pred_check
          %p873 = pneg %p361
        $region54: #{point_transformer_forward.1} parent=11 // pred_check_branch
          %875 = sbr.rel (%p873) target = $region56
        $region55: #{point_transformer_forward.1} parent=11 // pred_region
          _
        $region56: #{point_transformer_forward.1} parent=11 // pred_fallthru
          _
        // Predicated region
        $region57: #{point_transformer_forward.1} parent=11 // pred_check
          %p876 = pneg %p382
        $region58: #{point_transformer_forward.1} parent=11 // pred_check_branch
          %878 = sbr.rel (%p876) target = $region60
        $region59: #{point_transformer_forward.1} parent=11 // pred_region
          _
        $region60: #{point_transformer_forward.1} parent=11 // pred_fallthru
          _
        // Predicated region
        $region61: #{point_transformer_forward.1} parent=11 // pred_check
          %p879 = pneg %p403
        $region62: #{point_transformer_forward.1} parent=11 // pred_check_branch
          %881 = sbr.rel (%p879) target = $region64
        $region63: #{point_transformer_forward.1} parent=11 // pred_region
          _
        $region64: #{point_transformer_forward.1} parent=11 // pred_fallthru
          _
        // Predicated region
        $region65: #{point_transformer_forward.1} parent=11 // pred_check
          %p882 = pneg %p424
        $region66: #{point_transformer_forward.1} parent=11 // pred_check_branch
          %884 = sbr.rel (%p882) target = $region68
        $region67: #{point_transformer_forward.1} parent=11 // pred_region
          _
        $region68: #{point_transformer_forward.1} parent=11 // pred_fallthru
          _
        // Predicated region
        $region69: #{point_transformer_forward.1} parent=11 // pred_check
          %p885 = pneg %p445
        $region70: #{point_transformer_forward.1} parent=11 // pred_check_branch
          %887 = sbr.rel (%p885) target = $region72
        $region71: #{point_transformer_forward.1} parent=11 // pred_region
          _
        $region72: #{point_transformer_forward.1} parent=11 // pred_fallthru
          _
        // Predicated region
        $region73: #{point_transformer_forward.1} parent=11 // pred_check
          %p888 = pneg %p466
        $region74: #{point_transformer_forward.1} parent=11 // pred_check_branch
          %890 = sbr.rel (%p888) target = $region76
        $region75: #{point_transformer_forward.1} parent=11 // pred_region
          _
        $region76: #{point_transformer_forward.1} parent=11 // pred_fallthru
          _
        // Predicated region
        $region77: #{point_transformer_forward.1} parent=11 // pred_check
          %p891 = pneg %p487
        $region78: #{point_transformer_forward.1} parent=11 // pred_check_branch
          %893 = sbr.rel (%p891) target = $region80
        $region79: #{point_transformer_forward.1} parent=11 // pred_region
          _
        $region80: #{point_transformer_forward.1} parent=11 // pred_fallthru
          _
        // Predicated region
        $region81: #{point_transformer_forward.1} parent=11 // pred_check
          %p894 = pneg %p508
        $region82: #{point_transformer_forward.1} parent=11 // pred_check_branch
          %896 = sbr.rel (%p894) target = $region84
        $region83: #{point_transformer_forward.1} parent=11 // pred_region
          _
        $region84: #{point_transformer_forward.1} parent=11 // pred_fallthru
          _
        // Predicated region
        $region85: #{point_transformer_forward.1} parent=11 // pred_check
          %p897 = pneg %p529
        $region86: #{point_transformer_forward.1} parent=11 // pred_check_branch
          %899 = sbr.rel (%p897) target = $region88
        $region87: #{point_transformer_forward.1} parent=11 // pred_region
          _
        $region88: #{point_transformer_forward.1} parent=11 // pred_fallthru
          _
        // Predicated region
        $region89: #{point_transformer_forward.1} parent=11 // pred_check
          %p900 = pneg %p550
        $region90: #{point_transformer_forward.1} parent=11 // pred_check_branch
          %902 = sbr.rel (%p900) target = $region92
        $region91: #{point_transformer_forward.1} parent=11 // pred_region
          _
        $region92: #{point_transformer_forward.1} parent=11 // pred_fallthru
          _
        // Predicated region
        $region93: #{point_transformer_forward.1} parent=11 // pred_check
          %p903 = pneg %p571
        $region94: #{point_transformer_forward.1} parent=11 // pred_check_branch
          %905 = sbr.rel (%p903) target = $region96
        $region95: #{point_transformer_forward.1} parent=11 // pred_region
          _
        $region96: #{point_transformer_forward.1} parent=11 // pred_fallthru
          _
        // Predicated region
        $region97: #{point_transformer_forward.1} parent=11 // pred_check
          %p906 = pneg %p592
        $region98: #{point_transformer_forward.1} parent=11 // pred_check_branch
          %908 = sbr.rel (%p906) target = $region100
        $region99: #{point_transformer_forward.1} parent=11 // pred_region
          _
        $region100: #{point_transformer_forward.1} parent=11 // pred_fallthru
          _
        // Predicated region
        $region101: #{point_transformer_forward.1} parent=11 // pred_check
          %p909 = pneg %p613
        $region102: #{point_transformer_forward.1} parent=11 // pred_check_branch
          %911 = sbr.rel (%p909) target = $region104
        $region103: #{point_transformer_forward.1} parent=11 // pred_region
          _
        $region104: #{point_transformer_forward.1} parent=11 // pred_fallthru
          _
        // Predicated region
        $region105: #{point_transformer_forward.1} parent=11 // pred_check
          %p912 = pneg %p634
        $region106: #{point_transformer_forward.1} parent=11 // pred_check_branch
          %914 = sbr.rel (%p912) target = $region108
        $region107: #{point_transformer_forward.1} parent=11 // pred_region
          _
        $region108: #{point_transformer_forward.1} parent=11 // pred_fallthru
          _
        // Predicated region
        $region109: #{point_transformer_forward.1} parent=11 // pred_check
          %p915 = pneg %p655
        $region110: #{point_transformer_forward.1} parent=11 // pred_check_branch
          %917 = sbr.rel (%p915) target = $region112
        $region111: #{point_transformer_forward.1} parent=11 // pred_region
          _
        $region112: #{point_transformer_forward.1} parent=11 // pred_fallthru
          _
        // Predicated region
        $region113: #{point_transformer_forward.1} parent=11 // pred_check
          %p918 = pneg %p676
        $region114: #{point_transformer_forward.1} parent=11 // pred_check_branch
          %920 = sbr.rel (%p918) target = $region116
        $region115: #{point_transformer_forward.1} parent=11 // pred_region
          _
        $region116: #{point_transformer_forward.1} parent=11 // pred_fallthru
          _
        // Predicated region
        $region117: #{point_transformer_forward.1} parent=11 // pred_check
          %p921 = pneg %p697
        $region118: #{point_transformer_forward.1} parent=11 // pred_check_branch
          %923 = sbr.rel (%p921) target = $region120
        $region119: #{point_transformer_forward.1} parent=11 // pred_region
          _
        $region120: #{point_transformer_forward.1} parent=11 // pred_fallthru
          _
        // Predicated region
        $region121: #{point_transformer_forward.1} parent=11 // pred_check
          %p924 = pneg %p718
        $region122: #{point_transformer_forward.1} parent=11 // pred_check_branch
          %926 = sbr.rel (%p924) target = $region124
        $region123: #{point_transformer_forward.1} parent=11 // pred_region
          _
        $region124: #{point_transformer_forward.1} parent=11 // pred_fallthru
          _
        // Predicated region
        $region125: #{point_transformer_forward.1} parent=11 // pred_check
          %p927 = pneg %p739
        $region126: #{point_transformer_forward.1} parent=11 // pred_check_branch
          %929 = sbr.rel (%p927) target = $region128
        $region127: #{point_transformer_forward.1} parent=11 // pred_region
          _
        $region128: #{point_transformer_forward.1} parent=11 // pred_fallthru
          _
        // Predicated region
        $region129: #{point_transformer_forward.1} parent=11 // pred_check
          %p930 = pneg %p760
        $region130: #{point_transformer_forward.1} parent=11 // pred_check_branch
          %932 = sbr.rel (%p930) target = $region132
        $region131: #{point_transformer_forward.1} parent=11 // pred_region
          _
        $region132: #{point_transformer_forward.1} parent=11 // pred_fallthru
          _
        // Predicated region
        $region133: #{point_transformer_forward.1} parent=11 // pred_check
          %p933 = pneg %p781
        $region134: #{point_transformer_forward.1} parent=11 // pred_check_branch
          %935 = sbr.rel (%p933) target = $region136
        $region135: #{point_transformer_forward.1} parent=11 // pred_region
          _
        $region136: #{point_transformer_forward.1} parent=11 // pred_fallthru
          _
        // Predicated region
        $region137: #{point_transformer_forward.1} parent=11 // pred_check
          %p936 = pneg %p802
        $region138: #{point_transformer_forward.1} parent=11 // pred_check_branch
          %938 = sbr.rel (%p936) target = $region140
        $region139: #{point_transformer_forward.1} parent=11 // pred_region
          _
        $region140: #{point_transformer_forward.1} parent=11 // pred_fallthru
          _
      $region12: #{point_transformer_forward.1} parent=5 // pred_fallthru
        _
      %p939 = scmp.lt.s32.totalorder %s78, 2
      // Predicated region
      $region141: #{point_transformer_forward.1} parent=5 // pred_check
        %p940 = pneg %p939
      $region142: #{point_transformer_forward.1} parent=5 // pred_check_branch
        %942 = sbr.rel (%p940) target = $region144
      $region143: #{point_transformer_forward.1} parent=5 // pred_region
        // Predicated region
        $region145: #{point_transformer_forward.1} parent=143 // pred_check
          %p943 = pneg %p98
        $region146: #{point_transformer_forward.1} parent=143 // pred_check_branch
          %945 = sbr.rel (%p943) target = $region148
        $region147: #{point_transformer_forward.1} parent=143 // pred_region
          %p946 = scmp.lt.s32.totalorder %s78, 1
          %s947 = scalar_select %p946, %s78, 1
          %s948 = smul.addr %s947, 8
          %s949 = smul.addr %s948, 8
          %s950 = scalar_lea.vmem %s1, %s949
        $region148: #{point_transformer_forward.1} parent=143 // pred_fallthru
          _
        // Predicated region
        $region149: #{point_transformer_forward.1} parent=143 // pred_check
          %p951 = pneg %p124
        $region150: #{point_transformer_forward.1} parent=143 // pred_check_branch
          %953 = sbr.rel (%p951) target = $region152
        $region151: #{point_transformer_forward.1} parent=143 // pred_region
          %p954 = scmp.lt.s32.totalorder %s78, 1
          %s955 = scalar_select %p954, %s78, 1
          %s956 = smul.addr %s955, 8
          %s957 = scalar_lea.vmem %s3, %s956
        $region152: #{point_transformer_forward.1} parent=143 // pred_fallthru
          _
      $region144: #{point_transformer_forward.1} parent=5 // pred_fallthru
        _
      %p958 = scmp.le.s32.totalorder 1, %s78
      %p959 = scmp.lt.s32.totalorder %s78, 3
      %p960 = pnand %p958, %p959
      %p961 = pneg %p960
      // Predicated region
      $region153: #{point_transformer_forward.1} parent=5 // pred_check
        _
      $region154: #{point_transformer_forward.1} parent=5 // pred_check_branch
        %963 = sbr.rel (%p960) target = $region156
      $region155: #{point_transformer_forward.1} parent=5 // pred_region
        %s964 = ssub.s32 %s78, 1
        %p965 = scmp.lt.s32.totalorder %s83, 1
        %s966 = scalar_select %p965, %s83, 1
        %s967 = smul.addr %s966, 8
        %s968 = smul.addr %s967, 8
        %s969 = scalar_lea.vmem %s1, %s968
        %p970 = pneg %p104
        %p971 = pneg %p101
        %p972 = scmp.lt.s32.totalorder %s83, 1
        %s973 = scalar_select %p972, %s83, 1
        %s974 = smul.addr %s973, 8
        %s975 = scalar_lea.vmem %s3, %s974
        %p976 = pneg %p130
        %p977 = pneg %p127
        %p978 = pneg %p151
        %p979 = pneg %p148
        %p980 = pneg %p172
        %p981 = pneg %p169
        %p982 = pneg %p193
        %p983 = pneg %p190
        %p984 = pneg %p214
        %p985 = pneg %p211
        %p986 = pneg %p235
        %p987 = pneg %p232
        %p988 = pneg %p256
        %p989 = pneg %p253
        %p990 = pneg %p277
        %p991 = pneg %p274
        %p992 = pneg %p298
        %p993 = pneg %p295
        %p994 = pneg %p319
        %p995 = pneg %p316
        %p996 = pneg %p340
        %p997 = pneg %p337
        %p998 = pneg %p361
        %p999 = pneg %p358
        %p1000 = pneg %p382
        %p1001 = pneg %p379
        %p1002 = pneg %p403
        %p1003 = pneg %p400
        %p1004 = pneg %p424
        %p1005 = pneg %p421
        %p1006 = pneg %p445
        %p1007 = pneg %p442
        %p1008 = pneg %p466
        %p1009 = pneg %p463
        %p1010 = pneg %p487
        %p1011 = pneg %p484
        %p1012 = pneg %p508
        %p1013 = pneg %p505
        %p1014 = pneg %p529
        %p1015 = pneg %p526
        %p1016 = pneg %p550
        %p1017 = pneg %p547
        %p1018 = pneg %p571
        %p1019 = pneg %p568
        %p1020 = pneg %p592
        %p1021 = pneg %p589
        %p1022 = pneg %p613
        %p1023 = pneg %p610
        %p1024 = pneg %p634
        %p1025 = pneg %p631
        %p1026 = pneg %p655
        %p1027 = pneg %p652
        %p1028 = pneg %p676
        %p1029 = pneg %p673
        %p1030 = pneg %p697
        %p1031 = pneg %p694
        %p1032 = pneg %p718
        %p1033 = pneg %p715
        %p1034 = pneg %p739
        %p1035 = pneg %p736
        %p1036 = pneg %p760
        %p1037 = pneg %p757
        %p1038 = pneg %p781
        %p1039 = pneg %p778
        %p1040 = pneg %p802
        %p1041 = pneg %p799
        %p1042 = pneg %p828
        %p1043 = pneg %p825
        %s1044 = sand.u32 %s815, 1
        %s1045 = scalar_lea.sflag [#allocation3], %s1044
        %s1046 = sand.u32 %s815, 1
        %s1047 = scalar_lea.vmem [#allocation2], %s1046
        %p1048 = scmp.lt.s32.totalorder %s83, 1
        %s1049 = scalar_select %p1048, %s83, 1
        %s1050 = smul.addr %s1049, 8
        %s1051 = smul.addr %s1050, 8
        %s1052 = scalar_lea.vmem %s1, %s1051
        %p1053 = scmp.lt.s32.totalorder %s83, 1
        %s1054 = scalar_select %p1053, %s83, 1
        %s1055 = smul.addr %s1054, 8
        %s1056 = scalar_lea.vmem %s3, %s1055
        %v1057 = vld [vmem:[%s1052] sm:$0xff]
        %v1058 = vld [vmem:[%s1052 + $0x8] sm:$0xff]
        %v1059 = vld [vmem:[%s1052 + $0x10] sm:$0xff]
        %v1060 = vld [vmem:[%s1052 + $0x18] sm:$0xff]
        %v1061 = vld [vmem:[%s1052 + $0x20] sm:$0xff]
        %v1062 = vld [vmem:[%s1052 + $0x28] sm:$0xff]
        %v1063 = vld [vmem:[%s1052 + $0x30] sm:$0xff]
        %v1064 = vld [vmem:[%s1052 + $0x38] sm:$0xff]
        %v1065 = vld [vmem:[%s5] sm:$0x7]
        %v1066 = vld [vmem:[%s7] sm:$0x1]
        %v1068 = vlaneseq
        %v1069 = vshrl.u32 %v1068, 7
        %v1070 = vsub.s32 0, %v1069
        %v1071 = vrot.slane %v1066, %v1070
        %vm1073 = vcmask 23552
        %v1075 = vsel %vm1073, %v1057, 0
        %v1078 = vsel %vm1073, %v1058, 0
        %v1081 = vsel %vm1073, %v1059, 0
        %v1084 = vsel %vm1073, %v1060, 0
        %v1087 = vsel %vm1073, %v1061, 0
        %v1090 = vsel %vm1073, %v1062, 0
        %v1093 = vsel %vm1073, %v1063, 0
        %v1096 = vsel %vm1073, %v1064, 0
        %vm1098 = vcmask 1042432
        %v1100 = vsel %vm1098, %v1065, 0
        %1102 = vmatprep.subr.mxu0 0.0
        %1103 = vmatpush1.msra.mxu0 %v1100
        %1104 = vmatprep.subr.mxu0 0.0
        %1105 = vmatpush1.msra.mxu0 0.0
        %1106 = vmatprep.subr.mxu0 0.0
        %1107 = vmatpush1.msra.mxu0 0.0
        %1108 = vmatprep.subr.mxu0 0.0
        %1109 = vmatpush1.msra.mxu0 0.0
        %1110 = vmatprep.subr.mxu0 0.0
        %1111 = vmatpush1.msra.mxu0 0.0
        %1112 = vmatprep.subr.mxu0 0.0
        %1113 = vmatpush1.msra.mxu0 0.0
        %1114 = vmatprep.subr.mxu0 0.0
        %1115 = vmatpush1.msra.mxu0 0.0
        %1116 = vmatprep.subr.mxu0 0.0
        %1117 = vmatpush1.msra.mxu0 0.0
        %1118 = vmatprep.subr.mxu0 0.0
        %1119 = vmatpush1.msra.mxu0 0.0
        %1120 = vmatprep.subr.mxu0 0.0
        %1121 = vmatpush1.msra.mxu0 0.0
        %1122 = vmatprep.subr.mxu0 0.0
        %1123 = vmatpush1.msra.mxu0 0.0
        %1124 = vmatprep.subr.mxu0 0.0
        %1125 = vmatpush1.msra.mxu0 0.0
        %1126 = vmatprep.subr.mxu0 0.0
        %1127 = vmatpush1.msra.mxu0 0.0
        %1128 = vmatprep.subr.mxu0 0.0
        %1129 = vmatpush1.msra.mxu0 0.0
        %1130 = vmatprep.subr.mxu0 0.0
        %1131 = vmatpush1.msra.mxu0 0.0
        %1132 = vmatprep.subr.mxu0 0.0
        %1133 = vmatpush1.msra.mxu0 0.0
        %1134 = vmatprep.subr.mxu0 0.0
        %1135 = vmatpush1.msra.mxu0 0.0
        %1136 = vmatprep.subr.mxu0 0.0
        %1137 = vmatpush1.msra.mxu0 0.0
        %1138 = vmatprep.subr.mxu0 0.0
        %1139 = vmatpush1.msra.mxu0 0.0
        %1140 = vmatprep.subr.mxu0 0.0
        %1141 = vmatpush1.msra.mxu0 0.0
        %1142 = vmatprep.subr.mxu0 0.0
        %1143 = vmatpush1.msra.mxu0 0.0
        %1144 = vmatprep.subr.mxu0 0.0
        %1145 = vmatpush1.msra.mxu0 0.0
        %1146 = vmatprep.subr.mxu0 0.0
        %1147 = vmatpush1.msra.mxu0 0.0
        %1148 = vmatprep.subr.mxu0 0.0
        %1149 = vmatpush1.msra.mxu0 0.0
        %1150 = vmatprep.subr.mxu0 0.0
        %1151 = vmatpush1.msra.mxu0 0.0
        %1152 = vmatprep.subr.mxu0 0.0
        %1153 = vmatpush1.msra.mxu0 0.0
        %1154 = vmatprep.subr.mxu0 0.0
        %1155 = vmatpush1.msra.mxu0 0.0
        %1156 = vmatprep.subr.mxu0 0.0
        %1157 = vmatpush1.msra.mxu0 0.0
        %1158 = vmatprep.subr.mxu0 0.0
        %1159 = vmatpush1.msra.mxu0 0.0
        %1160 = vmatprep.subr.mxu0 0.0
        %1161 = vmatpush1.msra.mxu0 0.0
        %1162 = vmatprep.subr.mxu0 0.0
        %1163 = vmatpush1.msra.mxu0 0.0
        %1164 = vmatprep.subr.mxu0 0.0
        %1165 = vmatpush1.msra.mxu0 0.0
        %1166 = vmatprep.mubr.f32.mxu0 0.0
        %1167 = vmatmul.mubr.f32.gmra.mrb[0].mxu0 %v1075
        %v1168 = vpop.f32.mrb[0].mxu0
        %v1169 = vadd.f32 %v1071, %v1168
        %v1170 = vpop.f32.mrb[0].mxu0
        %1171 = vmatprep.mubr.f32.mxu0 0.0
        %1172 = vmatmul.mubr.f32.gmra.mrb[0].mxu0 %v1078
        %v1173 = vpop.f32.mrb[0].mxu0
        %v1174 = vadd.f32 %v1071, %v1173
        %v1175 = vpop.f32.mrb[0].mxu0
        %1176 = vmatprep.mubr.f32.mxu0 0.0
        %1177 = vmatmul.mubr.f32.gmra.mrb[0].mxu0 %v1081
        %v1178 = vpop.f32.mrb[0].mxu0
        %v1179 = vadd.f32 %v1071, %v1178
        %v1180 = vpop.f32.mrb[0].mxu0
        %1181 = vmatprep.mubr.f32.mxu0 0.0
        %1182 = vmatmul.mubr.f32.gmra.mrb[0].mxu0 %v1084
        %v1183 = vpop.f32.mrb[0].mxu0
        %v1184 = vadd.f32 %v1071, %v1183
        %v1185 = vpop.f32.mrb[0].mxu0
        %1186 = vmatprep.mubr.f32.mxu0 0.0
        %1187 = vmatmul.mubr.f32.gmra.mrb[0].mxu0 %v1087
        %v1188 = vpop.f32.mrb[0].mxu0
        %v1189 = vadd.f32 %v1071, %v1188
        %v1190 = vpop.f32.mrb[0].mxu0
        %1191 = vmatprep.mubr.f32.mxu0 0.0
        %1192 = vmatmul.mubr.f32.gmra.mrb[0].mxu0 %v1090
        %v1193 = vpop.f32.mrb[0].mxu0
        %v1194 = vadd.f32 %v1071, %v1193
        %v1195 = vpop.f32.mrb[0].mxu0
        %1196 = vmatprep.mubr.f32.mxu0 0.0
        %1197 = vmatmul.mubr.f32.gmra.mrb[0].mxu0 %v1093
        %v1198 = vpop.f32.mrb[0].mxu0
        %v1199 = vadd.f32 %v1071, %v1198
        %v1200 = vpop.f32.mrb[0].mxu0
        %1201 = vmatprep.mubr.f32.mxu0 0.0
        %1202 = vmatmul.mubr.f32.gmra.mrb[0].mxu0 %v1096
        %v1203 = vpop.f32.mrb[0].mxu0
        %v1204 = vadd.f32 %v1071, %v1203
        %v1205 = vpop.f32.mrb[0].mxu0
        %1206 = vdwg.mxu0
        %v1207 = vmax.f32 %v1169, 0.0
        %v1208 = vmax.f32 %v1174, 0.0
        %v1209 = vmax.f32 %v1179, 0.0
        %v1210 = vmax.f32 %v1184, 0.0
        %v1211 = vmax.f32 %v1189, 0.0
        %v1212 = vmax.f32 %v1194, 0.0
        %v1213 = vmax.f32 %v1199, 0.0
        %v1214 = vmax.f32 %v1204, 0.0
        %v1215 = vld [vmem:[%s9] sm:$0xff]
        %v1216 = vld [vmem:[%s9 + $0x8] sm:$0xff]
        %v1217 = vld [vmem:[%s9 + $0x10] sm:$0xff]
        %v1218 = vld [vmem:[%s9 + $0x18] sm:$0xff]
        %v1219 = vld [vmem:[%s9 + $0x20] sm:$0xff]
        %v1220 = vld [vmem:[%s9 + $0x28] sm:$0xff]
        %v1221 = vld [vmem:[%s9 + $0x30] sm:$0xff]
        %v1222 = vld [vmem:[%s9 + $0x38] sm:$0xff]
        %v1223 = vld [vmem:[%s9 + $0x40] sm:$0xff]
        %v1224 = vld [vmem:[%s9 + $0x48] sm:$0xff]
        %v1225 = vld [vmem:[%s9 + $0x50] sm:$0xff]
        %v1226 = vld [vmem:[%s9 + $0x58] sm:$0xff]
        %v1227 = vld [vmem:[%s9 + $0x60] sm:$0xff]
        %v1228 = vld [vmem:[%s9 + $0x68] sm:$0xff]
        %v1229 = vld [vmem:[%s9 + $0x70] sm:$0xff]
        %v1230 = vld [vmem:[%s9 + $0x78] sm:$0xff]
        %v1231 = vld [vmem:[%s9 + $0x80] sm:$0xff]
        %v1232 = vld [vmem:[%s9 + $0x88] sm:$0xff]
        %v1233 = vld [vmem:[%s9 + $0x90] sm:$0xff]
        %v1234 = vld [vmem:[%s9 + $0x98] sm:$0xff]
        %v1235 = vld [vmem:[%s9 + $0xa0] sm:$0xff]
        %v1236 = vld [vmem:[%s9 + $0xa8] sm:$0xff]
        %v1237 = vld [vmem:[%s9 + $0xb0] sm:$0xff]
        %v1238 = vld [vmem:[%s9 + $0xb8] sm:$0xff]
        %v1239 = vld [vmem:[%s9 + $0xc0] sm:$0xff]
        %v1240 = vld [vmem:[%s9 + $0xc8] sm:$0xff]
        %v1241 = vld [vmem:[%s9 + $0xd0] sm:$0xff]
        %v1242 = vld [vmem:[%s9 + $0xd8] sm:$0xff]
        %v1243 = vld [vmem:[%s9 + $0xe0] sm:$0xff]
        %v1244 = vld [vmem:[%s9 + $0xe8] sm:$0xff]
        %v1245 = vld [vmem:[%s9 + $0xf0] sm:$0xff]
        %v1246 = vld [vmem:[%s9 + $0xf8] sm:$0xff]
        %v1247 = vld [vmem:[%s11] sm:$0x3]
        %v1249 = vlaneseq
        %v1250 = vshrl.u32 %v1249, 7
        %v1251 = vsub.s32 0, %v1250
        %v1252 = vrot.slane %v1247, %v1251
        %v1253 = vlaneseq
        %v1254 = vshrl.u32 %v1253, 7
        %v1255 = vsub.s32 1, %v1254
        %v1256 = vrot.slane %v1247, %v1255
        %1259 = vmatprep.subr.mxu0 %v1216
        %1260 = vmatpush1.msra.mxu0 %v1215
        %1261 = vmatprep.subr.mxu0 %v1218
        %1262 = vmatpush1.msra.mxu0 %v1217
        %1263 = vmatprep.subr.mxu0 %v1220
        %1264 = vmatpush1.msra.mxu0 %v1219
        %1265 = vmatprep.subr.mxu0 %v1222
        %1266 = vmatpush1.msra.mxu0 %v1221
        %1267 = vmatprep.subr.mxu0 %v1224
        %1268 = vmatpush1.msra.mxu0 %v1223
        %1269 = vmatprep.subr.mxu0 %v1226
        %1270 = vmatpush1.msra.mxu0 %v1225
        %1271 = vmatprep.subr.mxu0 %v1228
        %1272 = vmatpush1.msra.mxu0 %v1227
        %1273 = vmatprep.subr.mxu0 %v1230
        %1274 = vmatpush1.msra.mxu0 %v1229
        %1275 = vmatprep.subr.mxu0 %v1232
        %1276 = vmatpush1.msra.mxu0 %v1231
        %1277 = vmatprep.subr.mxu0 %v1234
        %1278 = vmatpush1.msra.mxu0 %v1233
        %1279 = vmatprep.subr.mxu0 %v1236
        %1280 = vmatpush1.msra.mxu0 %v1235
        %1281 = vmatprep.subr.mxu0 %v1238
        %1282 = vmatpush1.msra.mxu0 %v1237
        %1283 = vmatprep.subr.mxu0 %v1240
        %1284 = vmatpush1.msra.mxu0 %v1239
        %1285 = vmatprep.subr.mxu0 %v1242
        %1286 = vmatpush1.msra.mxu0 %v1241
        %1287 = vmatprep.subr.mxu0 %v1244
        %1288 = vmatpush1.msra.mxu0 %v1243
        %1289 = vmatprep.subr.mxu0 %v1246
        %1290 = vmatpush1.msra.mxu0 %v1245
        %1291 = vmatprep.subr.mxu0 0.0
        %1292 = vmatpush1.msra.mxu0 0.0
        %1293 = vmatprep.subr.mxu0 0.0
        %1294 = vmatpush1.msra.mxu0 0.0
        %1295 = vmatprep.subr.mxu0 0.0
        %1296 = vmatpush1.msra.mxu0 0.0
        %1297 = vmatprep.subr.mxu0 0.0
        %1298 = vmatpush1.msra.mxu0 0.0
        %1299 = vmatprep.subr.mxu0 0.0
        %1300 = vmatpush1.msra.mxu0 0.0
        %1301 = vmatprep.subr.mxu0 0.0
        %1302 = vmatpush1.msra.mxu0 0.0
        %1303 = vmatprep.subr.mxu0 0.0
        %1304 = vmatpush1.msra.mxu0 0.0
        %1305 = vmatprep.subr.mxu0 0.0
        %1306 = vmatpush1.msra.mxu0 0.0
        %1307 = vmatprep.subr.mxu0 0.0
        %1308 = vmatpush1.msra.mxu0 0.0
        %1309 = vmatprep.subr.mxu0 0.0
        %1310 = vmatpush1.msra.mxu0 0.0
        %1311 = vmatprep.subr.mxu0 0.0
        %1312 = vmatpush1.msra.mxu0 0.0
        %1313 = vmatprep.subr.mxu0 0.0
        %1314 = vmatpush1.msra.mxu0 0.0
        %1315 = vmatprep.subr.mxu0 0.0
        %1316 = vmatpush1.msra.mxu0 0.0
        %1317 = vmatprep.subr.mxu0 0.0
        %1318 = vmatpush1.msra.mxu0 0.0
        %1319 = vmatprep.subr.mxu0 0.0
        %1320 = vmatpush1.msra.mxu0 0.0
        %1321 = vmatprep.subr.mxu0 0.0
        %1322 = vmatpush1.msra.mxu0 0.0
        %1323 = vmatprep.mubr.f32.mxu0 0.0
        %1324 = vmatmul.mubr.f32.gmra.mrb[0].mxu0 %v1207
        %v1325 = vpop.f32.mrb[0].mxu0
        %v1326 = vadd.f32 %v1252, %v1325
        %v1327 = vpop.f32.mrb[0].mxu0
        %v1328 = vadd.f32 %v1256, %v1327
        %1329 = vmatprep.mubr.f32.mxu0 0.0
        %1330 = vmatmul.mubr.f32.gmra.mrb[0].mxu0 %v1208
        %v1331 = vpop.f32.mrb[0].mxu0
        %v1332 = vadd.f32 %v1252, %v1331
        %v1333 = vpop.f32.mrb[0].mxu0
        %v1334 = vadd.f32 %v1256, %v1333
        %1335 = vmatprep.mubr.f32.mxu0 0.0
        %1336 = vmatmul.mubr.f32.gmra.mrb[0].mxu0 %v1209
        %v1337 = vpop.f32.mrb[0].mxu0
        %v1338 = vadd.f32 %v1252, %v1337
        %v1339 = vpop.f32.mrb[0].mxu0
        %v1340 = vadd.f32 %v1256, %v1339
        %1341 = vmatprep.mubr.f32.mxu0 0.0
        %1342 = vmatmul.mubr.f32.gmra.mrb[0].mxu0 %v1210
        %v1343 = vpop.f32.mrb[0].mxu0
        %v1344 = vadd.f32 %v1252, %v1343
        %v1345 = vpop.f32.mrb[0].mxu0
        %v1346 = vadd.f32 %v1256, %v1345
        %1347 = vmatprep.mubr.f32.mxu0 0.0
        %1348 = vmatmul.mubr.f32.gmra.mrb[0].mxu0 %v1211
        %v1349 = vpop.f32.mrb[0].mxu0
        %v1350 = vadd.f32 %v1252, %v1349
        %v1351 = vpop.f32.mrb[0].mxu0
        %v1352 = vadd.f32 %v1256, %v1351
        %1353 = vmatprep.mubr.f32.mxu0 0.0
        %1354 = vmatmul.mubr.f32.gmra.mrb[0].mxu0 %v1212
        %v1355 = vpop.f32.mrb[0].mxu0
        %v1356 = vadd.f32 %v1252, %v1355
        %v1357 = vpop.f32.mrb[0].mxu0
        %v1358 = vadd.f32 %v1256, %v1357
        %1359 = vmatprep.mubr.f32.mxu0 0.0
        %1360 = vmatmul.mubr.f32.gmra.mrb[0].mxu0 %v1213
        %v1361 = vpop.f32.mrb[0].mxu0
        %v1362 = vadd.f32 %v1252, %v1361
        %v1363 = vpop.f32.mrb[0].mxu0
        %v1364 = vadd.f32 %v1256, %v1363
        %1365 = vmatprep.mubr.f32.mxu0 0.0
        %1366 = vmatmul.mubr.f32.gmra.mrb[0].mxu0 %v1214
        %v1367 = vpop.f32.mrb[0].mxu0
        %v1368 = vadd.f32 %v1252, %v1367
        %v1369 = vpop.f32.mrb[0].mxu0
        %v1370 = vadd.f32 %v1256, %v1369
        %1371 = vdwg.mxu0
        %v1372 = vrot.slane %v1326, 4
        %v1373 = vmax.f32 %v1326, %v1372
        %v1374 = vrot.slane %v1373, 2
        %v1375 = vmax.f32 %v1373, %v1374
        %v1376 = vrot.slane %v1375, 1
        %v1377 = vmax.f32 %v1375, %v1376
        %v1378 = vrot.slane %v1328, 4
        %v1379 = vmax.f32 %v1328, %v1378
        %v1380 = vrot.slane %v1379, 2
        %v1381 = vmax.f32 %v1379, %v1380
        %v1382 = vrot.slane %v1381, 1
        %v1383 = vmax.f32 %v1381, %v1382
        %v1384 = vrot.slane %v1332, 4
        %v1385 = vmax.f32 %v1332, %v1384
        %v1386 = vrot.slane %v1385, 2
        %v1387 = vmax.f32 %v1385, %v1386
        %v1388 = vrot.slane %v1387, 1
        %v1389 = vmax.f32 %v1387, %v1388
        %v1390 = vrot.slane %v1334, 4
        %v1391 = vmax.f32 %v1334, %v1390
        %v1392 = vrot.slane %v1391, 2
        %v1393 = vmax.f32 %v1391, %v1392
        %v1394 = vrot.slane %v1393, 1
        %v1395 = vmax.f32 %v1393, %v1394
        %v1396 = vrot.slane %v1338, 4
        %v1397 = vmax.f32 %v1338, %v1396
        %v1398 = vrot.slane %v1397, 2
        %v1399 = vmax.f32 %v1397, %v1398
        %v1400 = vrot.slane %v1399, 1
        %v1401 = vmax.f32 %v1399, %v1400
        %v1402 = vrot.slane %v1340, 4
        %v1403 = vmax.f32 %v1340, %v1402
        %v1404 = vrot.slane %v1403, 2
        %v1405 = vmax.f32 %v1403, %v1404
        %v1406 = vrot.slane %v1405, 1
        %v1407 = vmax.f32 %v1405, %v1406
        %v1408 = vrot.slane %v1344, 4
        %v1409 = vmax.f32 %v1344, %v1408
        %v1410 = vrot.slane %v1409, 2
        %v1411 = vmax.f32 %v1409, %v1410
        %v1412 = vrot.slane %v1411, 1
        %v1413 = vmax.f32 %v1411, %v1412
        %v1414 = vrot.slane %v1346, 4
        %v1415 = vmax.f32 %v1346, %v1414
        %v1416 = vrot.slane %v1415, 2
        %v1417 = vmax.f32 %v1415, %v1416
        %v1418 = vrot.slane %v1417, 1
        %v1419 = vmax.f32 %v1417, %v1418
        %v1420 = vrot.slane %v1350, 4
        %v1421 = vmax.f32 %v1350, %v1420
        %v1422 = vrot.slane %v1421, 2
        %v1423 = vmax.f32 %v1421, %v1422
        %v1424 = vrot.slane %v1423, 1
        %v1425 = vmax.f32 %v1423, %v1424
        %v1426 = vrot.slane %v1352, 4
        %v1427 = vmax.f32 %v1352, %v1426
        %v1428 = vrot.slane %v1427, 2
        %v1429 = vmax.f32 %v1427, %v1428
        %v1430 = vrot.slane %v1429, 1
        %v1431 = vmax.f32 %v1429, %v1430
        %v1432 = vrot.slane %v1356, 4
        %v1433 = vmax.f32 %v1356, %v1432
        %v1434 = vrot.slane %v1433, 2
        %v1435 = vmax.f32 %v1433, %v1434
        %v1436 = vrot.slane %v1435, 1
        %v1437 = vmax.f32 %v1435, %v1436
        %v1438 = vrot.slane %v1358, 4
        %v1439 = vmax.f32 %v1358, %v1438
        %v1440 = vrot.slane %v1439, 2
        %v1441 = vmax.f32 %v1439, %v1440
        %v1442 = vrot.slane %v1441, 1
        %v1443 = vmax.f32 %v1441, %v1442
        %v1444 = vrot.slane %v1362, 4
        %v1445 = vmax.f32 %v1362, %v1444
        %v1446 = vrot.slane %v1445, 2
        %v1447 = vmax.f32 %v1445, %v1446
        %v1448 = vrot.slane %v1447, 1
        %v1449 = vmax.f32 %v1447, %v1448
        %v1450 = vrot.slane %v1364, 4
        %v1451 = vmax.f32 %v1364, %v1450
        %v1452 = vrot.slane %v1451, 2
        %v1453 = vmax.f32 %v1451, %v1452
        %v1454 = vrot.slane %v1453, 1
        %v1455 = vmax.f32 %v1453, %v1454
        %v1456 = vrot.slane %v1368, 4
        %v1457 = vmax.f32 %v1368, %v1456
        %v1458 = vrot.slane %v1457, 2
        %v1459 = vmax.f32 %v1457, %v1458
        %v1460 = vrot.slane %v1459, 1
        %v1461 = vmax.f32 %v1459, %v1460
        %v1462 = vrot.slane %v1370, 4
        %v1463 = vmax.f32 %v1370, %v1462
        %v1464 = vrot.slane %v1463, 2
        %v1465 = vmax.f32 %v1463, %v1464
        %v1466 = vrot.slane %v1465, 1
        %v1467 = vmax.f32 %v1465, %v1466
        %v1468 = vld [vmem:[%s13] sm:$0xff]
        %v1469 = vld [vmem:[%s13 + $0x8] sm:$0xff]
        %v1470 = vld [vmem:[%s13 + $0x10] sm:$0xff]
        %v1471 = vld [vmem:[%s13 + $0x18] sm:$0xff]
        %v1472 = vld [vmem:[%s13 + $0x20] sm:$0xff]
        %v1473 = vld [vmem:[%s13 + $0x28] sm:$0xff]
        %v1474 = vld [vmem:[%s13 + $0x30] sm:$0xff]
        %v1475 = vld [vmem:[%s13 + $0x38] sm:$0xff]
        %v1476 = vld [vmem:[%s13 + $0x40] sm:$0xff]
        %v1477 = vld [vmem:[%s13 + $0x48] sm:$0xff]
        %v1478 = vld [vmem:[%s13 + $0x50] sm:$0xff]
        %v1479 = vld [vmem:[%s13 + $0x58] sm:$0xff]
        %v1480 = vld [vmem:[%s13 + $0x60] sm:$0xff]
        %v1481 = vld [vmem:[%s13 + $0x68] sm:$0xff]
        %v1482 = vld [vmem:[%s13 + $0x70] sm:$0xff]
        %v1483 = vld [vmem:[%s13 + $0x78] sm:$0xff]
        %v1484 = vld [vmem:[%s13 + $0x80] sm:$0xff]
        %v1485 = vld [vmem:[%s13 + $0x88] sm:$0xff]
        %v1486 = vld [vmem:[%s13 + $0x90] sm:$0xff]
        %v1487 = vld [vmem:[%s13 + $0x98] sm:$0xff]
        %v1488 = vld [vmem:[%s13 + $0xa0] sm:$0xff]
        %v1489 = vld [vmem:[%s13 + $0xa8] sm:$0xff]
        %v1490 = vld [vmem:[%s13 + $0xb0] sm:$0xff]
        %v1491 = vld [vmem:[%s13 + $0xb8] sm:$0xff]
        %v1492 = vld [vmem:[%s13 + $0xc0] sm:$0xff]
        %v1493 = vld [vmem:[%s13 + $0xc8] sm:$0xff]
        %v1494 = vld [vmem:[%s13 + $0xd0] sm:$0xff]
        %v1495 = vld [vmem:[%s13 + $0xd8] sm:$0xff]
        %v1496 = vld [vmem:[%s13 + $0xe0] sm:$0xff]
        %v1497 = vld [vmem:[%s13 + $0xe8] sm:$0xff]
        %v1498 = vld [vmem:[%s13 + $0xf0] sm:$0xff]
        %v1499 = vld [vmem:[%s13 + $0xf8] sm:$0xff]
        %v1500 = vld [vmem:[%s13 + $0x100] sm:$0xff]
        %v1501 = vld [vmem:[%s13 + $0x108] sm:$0xff]
        %v1502 = vld [vmem:[%s13 + $0x110] sm:$0xff]
        %v1503 = vld [vmem:[%s13 + $0x118] sm:$0xff]
        %v1504 = vld [vmem:[%s13 + $0x120] sm:$0xff]
        %v1505 = vld [vmem:[%s13 + $0x128] sm:$0xff]
        %v1506 = vld [vmem:[%s13 + $0x130] sm:$0xff]
        %v1507 = vld [vmem:[%s13 + $0x138] sm:$0xff]
        %v1508 = vld [vmem:[%s13 + $0x140] sm:$0xff]
        %v1509 = vld [vmem:[%s13 + $0x148] sm:$0xff]
        %v1510 = vld [vmem:[%s13 + $0x150] sm:$0xff]
        %v1511 = vld [vmem:[%s13 + $0x158] sm:$0xff]
        %v1512 = vld [vmem:[%s13 + $0x160] sm:$0xff]
        %v1513 = vld [vmem:[%s13 + $0x168] sm:$0xff]
        %v1514 = vld [vmem:[%s13 + $0x170] sm:$0xff]
        %v1515 = vld [vmem:[%s13 + $0x178] sm:$0xff]
        %v1516 = vld [vmem:[%s13 + $0x180] sm:$0xff]
        %v1517 = vld [vmem:[%s13 + $0x188] sm:$0xff]
        %v1518 = vld [vmem:[%s13 + $0x190] sm:$0xff]
        %v1519 = vld [vmem:[%s13 + $0x198] sm:$0xff]
        %v1520 = vld [vmem:[%s13 + $0x1a0] sm:$0xff]
        %v1521 = vld [vmem:[%s13 + $0x1a8] sm:$0xff]
        %v1522 = vld [vmem:[%s13 + $0x1b0] sm:$0xff]
        %v1523 = vld [vmem:[%s13 + $0x1b8] sm:$0xff]
        %v1524 = vld [vmem:[%s13 + $0x1c0] sm:$0xff]
        %v1525 = vld [vmem:[%s13 + $0x1c8] sm:$0xff]
        %v1526 = vld [vmem:[%s13 + $0x1d0] sm:$0xff]
        %v1527 = vld [vmem:[%s13 + $0x1d8] sm:$0xff]
        %v1528 = vld [vmem:[%s13 + $0x1e0] sm:$0xff]
        %v1529 = vld [vmem:[%s13 + $0x1e8] sm:$0xff]
        %v1530 = vld [vmem:[%s13 + $0x1f0] sm:$0xff]
        %v1531 = vld [vmem:[%s13 + $0x1f8] sm:$0xff]
        %v1532 = vld [vmem:[%s13 + $0x200] sm:$0xff]
        %v1533 = vld [vmem:[%s13 + $0x208] sm:$0xff]
        %v1534 = vld [vmem:[%s13 + $0x210] sm:$0xff]
        %v1535 = vld [vmem:[%s13 + $0x218] sm:$0xff]
        %v1536 = vld [vmem:[%s13 + $0x220] sm:$0xff]
        %v1537 = vld [vmem:[%s13 + $0x228] sm:$0xff]
        %v1538 = vld [vmem:[%s13 + $0x230] sm:$0xff]
        %v1539 = vld [vmem:[%s13 + $0x238] sm:$0xff]
        %v1540 = vld [vmem:[%s13 + $0x240] sm:$0xff]
        %v1541 = vld [vmem:[%s13 + $0x248] sm:$0xff]
        %v1542 = vld [vmem:[%s13 + $0x250] sm:$0xff]
        %v1543 = vld [vmem:[%s13 + $0x258] sm:$0xff]
        %v1544 = vld [vmem:[%s13 + $0x260] sm:$0xff]
        %v1545 = vld [vmem:[%s13 + $0x268] sm:$0xff]
        %v1546 = vld [vmem:[%s13 + $0x270] sm:$0xff]
        %v1547 = vld [vmem:[%s13 + $0x278] sm:$0xff]
        %v1548 = vld [vmem:[%s13 + $0x280] sm:$0xff]
        %v1549 = vld [vmem:[%s13 + $0x288] sm:$0xff]
        %v1550 = vld [vmem:[%s13 + $0x290] sm:$0xff]
        %v1551 = vld [vmem:[%s13 + $0x298] sm:$0xff]
        %v1552 = vld [vmem:[%s13 + $0x2a0] sm:$0xff]
        %v1553 = vld [vmem:[%s13 + $0x2a8] sm:$0xff]
        %v1554 = vld [vmem:[%s13 + $0x2b0] sm:$0xff]
        %v1555 = vld [vmem:[%s13 + $0x2b8] sm:$0xff]
        %v1556 = vld [vmem:[%s13 + $0x2c0] sm:$0xff]
        %v1557 = vld [vmem:[%s13 + $0x2c8] sm:$0xff]
        %v1558 = vld [vmem:[%s13 + $0x2d0] sm:$0xff]
        %v1559 = vld [vmem:[%s13 + $0x2d8] sm:$0xff]
        %v1560 = vld [vmem:[%s13 + $0x2e0] sm:$0xff]
        %v1561 = vld [vmem:[%s13 + $0x2e8] sm:$0xff]
        %v1562 = vld [vmem:[%s13 + $0x2f0] sm:$0xff]
        %v1563 = vld [vmem:[%s13 + $0x2f8] sm:$0xff]
        %v1564 = vld [vmem:[%s13 + $0x300] sm:$0xff]
        %v1565 = vld [vmem:[%s13 + $0x308] sm:$0xff]
        %v1566 = vld [vmem:[%s13 + $0x310] sm:$0xff]
        %v1567 = vld [vmem:[%s13 + $0x318] sm:$0xff]
        %v1568 = vld [vmem:[%s13 + $0x320] sm:$0xff]
        %v1569 = vld [vmem:[%s13 + $0x328] sm:$0xff]
        %v1570 = vld [vmem:[%s13 + $0x330] sm:$0xff]
        %v1571 = vld [vmem:[%s13 + $0x338] sm:$0xff]
        %v1572 = vld [vmem:[%s13 + $0x340] sm:$0xff]
        %v1573 = vld [vmem:[%s13 + $0x348] sm:$0xff]
        %v1574 = vld [vmem:[%s13 + $0x350] sm:$0xff]
        %v1575 = vld [vmem:[%s13 + $0x358] sm:$0xff]
        %v1576 = vld [vmem:[%s13 + $0x360] sm:$0xff]
        %v1577 = vld [vmem:[%s13 + $0x368] sm:$0xff]
        %v1578 = vld [vmem:[%s13 + $0x370] sm:$0xff]
        %v1579 = vld [vmem:[%s13 + $0x378] sm:$0xff]
        %v1580 = vld [vmem:[%s13 + $0x380] sm:$0xff]
        %v1581 = vld [vmem:[%s13 + $0x388] sm:$0xff]
        %v1582 = vld [vmem:[%s13 + $0x390] sm:$0xff]
        %v1583 = vld [vmem:[%s13 + $0x398] sm:$0xff]
        %v1584 = vld [vmem:[%s13 + $0x3a0] sm:$0xff]
        %v1585 = vld [vmem:[%s13 + $0x3a8] sm:$0xff]
        %v1586 = vld [vmem:[%s13 + $0x3b0] sm:$0xff]
        %v1587 = vld [vmem:[%s13 + $0x3b8] sm:$0xff]
        %v1588 = vld [vmem:[%s13 + $0x3c0] sm:$0xff]
        %v1589 = vld [vmem:[%s13 + $0x3c8] sm:$0xff]
        %v1590 = vld [vmem:[%s13 + $0x3d0] sm:$0xff]
        %v1591 = vld [vmem:[%s13 + $0x3d8] sm:$0xff]
        %v1592 = vld [vmem:[%s13 + $0x3e0] sm:$0xff]
        %v1593 = vld [vmem:[%s13 + $0x3e8] sm:$0xff]
        %v1594 = vld [vmem:[%s13 + $0x3f0] sm:$0xff]
        %v1595 = vld [vmem:[%s13 + $0x3f8] sm:$0xff]
        %v1596 = vld [vmem:[%s13 + $0x400] sm:$0xff]
        %v1597 = vld [vmem:[%s13 + $0x408] sm:$0xff]
        %v1598 = vld [vmem:[%s13 + $0x410] sm:$0xff]
        %v1599 = vld [vmem:[%s13 + $0x418] sm:$0xff]
        %v1600 = vld [vmem:[%s13 + $0x420] sm:$0xff]
        %v1601 = vld [vmem:[%s13 + $0x428] sm:$0xff]
        %v1602 = vld [vmem:[%s13 + $0x430] sm:$0xff]
        %v1603 = vld [vmem:[%s13 + $0x438] sm:$0xff]
        %v1604 = vld [vmem:[%s13 + $0x440] sm:$0xff]
        %v1605 = vld [vmem:[%s13 + $0x448] sm:$0xff]
        %v1606 = vld [vmem:[%s13 + $0x450] sm:$0xff]
        %v1607 = vld [vmem:[%s13 + $0x458] sm:$0xff]
        %v1608 = vld [vmem:[%s13 + $0x460] sm:$0xff]
        %v1609 = vld [vmem:[%s13 + $0x468] sm:$0xff]
        %v1610 = vld [vmem:[%s13 + $0x470] sm:$0xff]
        %v1611 = vld [vmem:[%s13 + $0x478] sm:$0xff]
        %v1612 = vld [vmem:[%s13 + $0x480] sm:$0xff]
        %v1613 = vld [vmem:[%s13 + $0x488] sm:$0xff]
        %v1614 = vld [vmem:[%s13 + $0x490] sm:$0xff]
        %v1615 = vld [vmem:[%s13 + $0x498] sm:$0xff]
        %v1616 = vld [vmem:[%s13 + $0x4a0] sm:$0xff]
        %v1617 = vld [vmem:[%s13 + $0x4a8] sm:$0xff]
        %v1618 = vld [vmem:[%s13 + $0x4b0] sm:$0xff]
        %v1619 = vld [vmem:[%s13 + $0x4b8] sm:$0xff]
        %v1620 = vld [vmem:[%s13 + $0x4c0] sm:$0xff]
        %v1621 = vld [vmem:[%s13 + $0x4c8] sm:$0xff]
        %v1622 = vld [vmem:[%s13 + $0x4d0] sm:$0xff]
        %v1623 = vld [vmem:[%s13 + $0x4d8] sm:$0xff]
        %v1624 = vld [vmem:[%s13 + $0x4e0] sm:$0xff]
        %v1625 = vld [vmem:[%s13 + $0x4e8] sm:$0xff]
        %v1626 = vld [vmem:[%s13 + $0x4f0] sm:$0xff]
        %v1627 = vld [vmem:[%s13 + $0x4f8] sm:$0xff]
        %v1628 = vld [vmem:[%s13 + $0x500] sm:$0xff]
        %v1629 = vld [vmem:[%s13 + $0x508] sm:$0xff]
        %v1630 = vld [vmem:[%s13 + $0x510] sm:$0xff]
        %v1631 = vld [vmem:[%s13 + $0x518] sm:$0xff]
        %v1632 = vld [vmem:[%s13 + $0x520] sm:$0xff]
        %v1633 = vld [vmem:[%s13 + $0x528] sm:$0xff]
        %v1634 = vld [vmem:[%s13 + $0x530] sm:$0xff]
        %v1635 = vld [vmem:[%s13 + $0x538] sm:$0xff]
        %v1636 = vld [vmem:[%s13 + $0x540] sm:$0xff]
        %v1637 = vld [vmem:[%s13 + $0x548] sm:$0xff]
        %v1638 = vld [vmem:[%s13 + $0x550] sm:$0xff]
        %v1639 = vld [vmem:[%s13 + $0x558] sm:$0xff]
        %v1640 = vld [vmem:[%s13 + $0x560] sm:$0xff]
        %v1641 = vld [vmem:[%s13 + $0x568] sm:$0xff]
        %v1642 = vld [vmem:[%s13 + $0x570] sm:$0xff]
        %v1643 = vld [vmem:[%s13 + $0x578] sm:$0xff]
        %v1644 = vld [vmem:[%s13 + $0x580] sm:$0xff]
        %v1645 = vld [vmem:[%s13 + $0x588] sm:$0xff]
        %v1646 = vld [vmem:[%s13 + $0x590] sm:$0xff]
        %v1647 = vld [vmem:[%s13 + $0x598] sm:$0xff]
        %v1648 = vld [vmem:[%s13 + $0x5a0] sm:$0xff]
        %v1649 = vld [vmem:[%s13 + $0x5a8] sm:$0xff]
        %v1650 = vld [vmem:[%s13 + $0x5b0] sm:$0xff]
        %v1651 = vld [vmem:[%s13 + $0x5b8] sm:$0xff]
        %v1652 = vld [vmem:[%s13 + $0x5c0] sm:$0xff]
        %v1653 = vld [vmem:[%s13 + $0x5c8] sm:$0xff]
        %v1654 = vld [vmem:[%s13 + $0x5d0] sm:$0xff]
        %v1655 = vld [vmem:[%s13 + $0x5d8] sm:$0xff]
        %v1656 = vld [vmem:[%s13 + $0x5e0] sm:$0xff]
        %v1657 = vld [vmem:[%s13 + $0x5e8] sm:$0xff]
        %v1658 = vld [vmem:[%s13 + $0x5f0] sm:$0xff]
        %v1659 = vld [vmem:[%s13 + $0x5f8] sm:$0xff]
        %v1660 = vld [vmem:[%s13 + $0x600] sm:$0xff]
        %v1661 = vld [vmem:[%s13 + $0x608] sm:$0xff]
        %v1662 = vld [vmem:[%s13 + $0x610] sm:$0xff]
        %v1663 = vld [vmem:[%s13 + $0x618] sm:$0xff]
        %v1664 = vld [vmem:[%s13 + $0x620] sm:$0xff]
        %v1665 = vld [vmem:[%s13 + $0x628] sm:$0xff]
        %v1666 = vld [vmem:[%s13 + $0x630] sm:$0xff]
        %v1667 = vld [vmem:[%s13 + $0x638] sm:$0xff]
        %v1668 = vld [vmem:[%s13 + $0x640] sm:$0xff]
        %v1669 = vld [vmem:[%s13 + $0x648] sm:$0xff]
        %v1670 = vld [vmem:[%s13 + $0x650] sm:$0xff]
        %v1671 = vld [vmem:[%s13 + $0x658] sm:$0xff]
        %v1672 = vld [vmem:[%s13 + $0x660] sm:$0xff]
        %v1673 = vld [vmem:[%s13 + $0x668] sm:$0xff]
        %v1674 = vld [vmem:[%s13 + $0x670] sm:$0xff]
        %v1675 = vld [vmem:[%s13 + $0x678] sm:$0xff]
        %v1676 = vld [vmem:[%s13 + $0x680] sm:$0xff]
        %v1677 = vld [vmem:[%s13 + $0x688] sm:$0xff]
        %v1678 = vld [vmem:[%s13 + $0x690] sm:$0xff]
        %v1679 = vld [vmem:[%s13 + $0x698] sm:$0xff]
        %v1680 = vld [vmem:[%s13 + $0x6a0] sm:$0xff]
        %v1681 = vld [vmem:[%s13 + $0x6a8] sm:$0xff]
        %v1682 = vld [vmem:[%s13 + $0x6b0] sm:$0xff]
        %v1683 = vld [vmem:[%s13 + $0x6b8] sm:$0xff]
        %v1684 = vld [vmem:[%s13 + $0x6c0] sm:$0xff]
        %v1685 = vld [vmem:[%s13 + $0x6c8] sm:$0xff]
        %v1686 = vld [vmem:[%s13 + $0x6d0] sm:$0xff]
        %v1687 = vld [vmem:[%s13 + $0x6d8] sm:$0xff]
        %v1688 = vld [vmem:[%s13 + $0x6e0] sm:$0xff]
        %v1689 = vld [vmem:[%s13 + $0x6e8] sm:$0xff]
        %v1690 = vld [vmem:[%s13 + $0x6f0] sm:$0xff]
        %v1691 = vld [vmem:[%s13 + $0x6f8] sm:$0xff]
        %v1692 = vld [vmem:[%s13 + $0x700] sm:$0xff]
        %v1693 = vld [vmem:[%s13 + $0x708] sm:$0xff]
        %v1694 = vld [vmem:[%s13 + $0x710] sm:$0xff]
        %v1695 = vld [vmem:[%s13 + $0x718] sm:$0xff]
        %v1696 = vld [vmem:[%s13 + $0x720] sm:$0xff]
        %v1697 = vld [vmem:[%s13 + $0x728] sm:$0xff]
        %v1698 = vld [vmem:[%s13 + $0x730] sm:$0xff]
        %v1699 = vld [vmem:[%s13 + $0x738] sm:$0xff]
        %v1700 = vld [vmem:[%s13 + $0x740] sm:$0xff]
        %v1701 = vld [vmem:[%s13 + $0x748] sm:$0xff]
        %v1702 = vld [vmem:[%s13 + $0x750] sm:$0xff]
        %v1703 = vld [vmem:[%s13 + $0x758] sm:$0xff]
        %v1704 = vld [vmem:[%s13 + $0x760] sm:$0xff]
        %v1705 = vld [vmem:[%s13 + $0x768] sm:$0xff]
        %v1706 = vld [vmem:[%s13 + $0x770] sm:$0xff]
        %v1707 = vld [vmem:[%s13 + $0x778] sm:$0xff]
        %v1708 = vld [vmem:[%s13 + $0x780] sm:$0xff]
        %v1709 = vld [vmem:[%s13 + $0x788] sm:$0xff]
        %v1710 = vld [vmem:[%s13 + $0x790] sm:$0xff]
        %v1711 = vld [vmem:[%s13 + $0x798] sm:$0xff]
        %v1712 = vld [vmem:[%s13 + $0x7a0] sm:$0xff]
        %v1713 = vld [vmem:[%s13 + $0x7a8] sm:$0xff]
        %v1714 = vld [vmem:[%s13 + $0x7b0] sm:$0xff]
        %v1715 = vld [vmem:[%s13 + $0x7b8] sm:$0xff]
        %v1716 = vld [vmem:[%s13 + $0x7c0] sm:$0xff]
        %v1717 = vld [vmem:[%s13 + $0x7c8] sm:$0xff]
        %v1718 = vld [vmem:[%s13 + $0x7d0] sm:$0xff]
        %v1719 = vld [vmem:[%s13 + $0x7d8] sm:$0xff]
        %v1720 = vld [vmem:[%s13 + $0x7e0] sm:$0xff]
        %v1721 = vld [vmem:[%s13 + $0x7e8] sm:$0xff]
        %v1722 = vld [vmem:[%s13 + $0x7f0] sm:$0xff]
        %v1723 = vld [vmem:[%s13 + $0x7f8] sm:$0xff]
        %1724 = vmatprep.subr.mxu0 %v1597
        %1725 = vmatpush1.msra.mxu0 %v1596
        %1726 = vmatprep.subr.mxu0 %v1601
        %1727 = vmatpush1.msra.mxu0 %v1600
        %1728 = vmatprep.subr.mxu0 %v1605
        %1729 = vmatpush1.msra.mxu0 %v1604
        %1730 = vmatprep.subr.mxu0 %v1609
        %1731 = vmatpush1.msra.mxu0 %v1608
        %1732 = vmatprep.subr.mxu0 %v1613
        %1733 = vmatpush1.msra.mxu0 %v1612
        %1734 = vmatprep.subr.mxu0 %v1617
        %1735 = vmatpush1.msra.mxu0 %v1616
        %1736 = vmatprep.subr.mxu0 %v1621
        %1737 = vmatpush1.msra.mxu0 %v1620
        %1738 = vmatprep.subr.mxu0 %v1625
        %1739 = vmatpush1.msra.mxu0 %v1624
        %1740 = vmatprep.subr.mxu0 %v1629
        %1741 = vmatpush1.msra.mxu0 %v1628
        %1742 = vmatprep.subr.mxu0 %v1633
        %1743 = vmatpush1.msra.mxu0 %v1632
        %1744 = vmatprep.subr.mxu0 %v1637
        %1745 = vmatpush1.msra.mxu0 %v1636
        %1746 = vmatprep.subr.mxu0 %v1641
        %1747 = vmatpush1.msra.mxu0 %v1640
        %1748 = vmatprep.subr.mxu0 %v1645
        %1749 = vmatpush1.msra.mxu0 %v1644
        %1750 = vmatprep.subr.mxu0 %v1649
        %1751 = vmatpush1.msra.mxu0 %v1648
        %1752 = vmatprep.subr.mxu0 %v1653
        %1753 = vmatpush1.msra.mxu0 %v1652
        %1754 = vmatprep.subr.mxu0 %v1657
        %1755 = vmatpush1.msra.mxu0 %v1656
        %1756 = vmatprep.subr.mxu0 %v1661
        %1757 = vmatpush1.msra.mxu0 %v1660
        %1758 = vmatprep.subr.mxu0 %v1665
        %1759 = vmatpush1.msra.mxu0 %v1664
        %1760 = vmatprep.subr.mxu0 %v1669
        %1761 = vmatpush1.msra.mxu0 %v1668
        %1762 = vmatprep.subr.mxu0 %v1673
        %1763 = vmatpush1.msra.mxu0 %v1672
        %1764 = vmatprep.subr.mxu0 %v1677
        %1765 = vmatpush1.msra.mxu0 %v1676
        %1766 = vmatprep.subr.mxu0 %v1681
        %1767 = vmatpush1.msra.mxu0 %v1680
        %1768 = vmatprep.subr.mxu0 %v1685
        %1769 = vmatpush1.msra.mxu0 %v1684
        %1770 = vmatprep.subr.mxu0 %v1689
        %1771 = vmatpush1.msra.mxu0 %v1688
        %1772 = vmatprep.subr.mxu0 %v1693
        %1773 = vmatpush1.msra.mxu0 %v1692
        %1774 = vmatprep.subr.mxu0 %v1697
        %1775 = vmatpush1.msra.mxu0 %v1696
        %1776 = vmatprep.subr.mxu0 %v1701
        %1777 = vmatpush1.msra.mxu0 %v1700
        %1778 = vmatprep.subr.mxu0 %v1705
        %1779 = vmatpush1.msra.mxu0 %v1704
        %1780 = vmatprep.subr.mxu0 %v1709
        %1781 = vmatpush1.msra.mxu0 %v1708
        %1782 = vmatprep.subr.mxu0 %v1713
        %1783 = vmatpush1.msra.mxu0 %v1712
        %1784 = vmatprep.subr.mxu0 %v1717
        %1785 = vmatpush1.msra.mxu0 %v1716
        %1786 = vmatprep.subr.mxu0 %v1721
        %1787 = vmatpush1.msra.mxu0 %v1720
        %1788 = vmatprep.mubr.f32.mxu0 %v1328
        %1789 = vmatmul.mubr.f32.gmra.mrb[0].mxu0 %v1326
        %v1790 = vpop.f32.mrb[0].mxu0
        %v1791 = vadd.f32 0.0, %v1790
        %v1792 = vpop.f32.mrb[0].mxu0
        %v1793 = vadd.f32 0.0, %v1792
        %1794 = vmatprep.mubr.f32.mxu0 %v1334
        %1795 = vmatmul.mubr.f32.gmra.mrb[0].mxu0 %v1332
        %v1796 = vpop.f32.mrb[0].mxu0
        %v1797 = vadd.f32 0.0, %v1796
        %v1798 = vpop.f32.mrb[0].mxu0
        %v1799 = vadd.f32 0.0, %v1798
        %1800 = vmatprep.mubr.f32.mxu0 %v1340
        %1801 = vmatmul.mubr.f32.gmra.mrb[0].mxu0 %v1338
        %v1802 = vpop.f32.mrb[0].mxu0
        %v1803 = vadd.f32 0.0, %v1802
        %v1804 = vpop.f32.mrb[0].mxu0
        %v1805 = vadd.f32 0.0, %v1804
        %1806 = vmatprep.mubr.f32.mxu0 %v1346
        %1807 = vmatmul.mubr.f32.gmra.mrb[0].mxu0 %v1344
        %v1808 = vpop.f32.mrb[0].mxu0
        %v1809 = vadd.f32 0.0, %v1808
        %v1810 = vpop.f32.mrb[0].mxu0
        %v1811 = vadd.f32 0.0, %v1810
        %1812 = vmatprep.mubr.f32.mxu0 %v1352
        %1813 = vmatmul.mubr.f32.gmra.mrb[0].mxu0 %v1350
        %v1814 = vpop.f32.mrb[0].mxu0
        %v1815 = vadd.f32 0.0, %v1814
        %v1816 = vpop.f32.mrb[0].mxu0
        %v1817 = vadd.f32 0.0, %v1816
        %1818 = vmatprep.mubr.f32.mxu0 %v1358
        %1819 = vmatmul.mubr.f32.gmra.mrb[0].mxu0 %v1356
        %v1820 = vpop.f32.mrb[0].mxu0
        %v1821 = vadd.f32 0.0, %v1820
        %v1822 = vpop.f32.mrb[0].mxu0
        %v1823 = vadd.f32 0.0, %v1822
        %1824 = vmatprep.mubr.f32.mxu0 %v1364
        %1825 = vmatmul.mubr.f32.gmra.mrb[0].mxu0 %v1362
        %v1826 = vpop.f32.mrb[0].mxu0
        %v1827 = vadd.f32 0.0, %v1826
        %v1828 = vpop.f32.mrb[0].mxu0
        %v1829 = vadd.f32 0.0, %v1828
        %1830 = vmatprep.mubr.f32.mxu0 %v1370
        %1831 = vmatmul.mubr.f32.gmra.mrb[0].mxu0 %v1368
        %v1832 = vpop.f32.mrb[0].mxu0
        %v1833 = vadd.f32 0.0, %v1832
        %v1834 = vpop.f32.mrb[0].mxu0
        %v1835 = vadd.f32 0.0, %v1834
        %1836 = vdwg.mxu0
        %1837 = vmatprep.subr.mxu0 %v1599
        %1838 = vmatpush1.msra.mxu0 %v1598
        %1839 = vmatprep.subr.mxu0 %v1603
        %1840 = vmatpush1.msra.mxu0 %v1602
        %1841 = vmatprep.subr.mxu0 %v1607
        %1842 = vmatpush1.msra.mxu0 %v1606
        %1843 = vmatprep.subr.mxu0 %v1611
        %1844 = vmatpush1.msra.mxu0 %v1610
        %1845 = vmatprep.subr.mxu0 %v1615
        %1846 = vmatpush1.msra.mxu0 %v1614
        %1847 = vmatprep.subr.mxu0 %v1619
        %1848 = vmatpush1.msra.mxu0 %v1618
        %1849 = vmatprep.subr.mxu0 %v1623
        %1850 = vmatpush1.msra.mxu0 %v1622
        %1851 = vmatprep.subr.mxu0 %v1627
        %1852 = vmatpush1.msra.mxu0 %v1626
        %1853 = vmatprep.subr.mxu0 %v1631
        %1854 = vmatpush1.msra.mxu0 %v1630
        %1855 = vmatprep.subr.mxu0 %v1635
        %1856 = vmatpush1.msra.mxu0 %v1634
        %1857 = vmatprep.subr.mxu0 %v1639
        %1858 = vmatpush1.msra.mxu0 %v1638
        %1859 = vmatprep.subr.mxu0 %v1643
        %1860 = vmatpush1.msra.mxu0 %v1642
        %1861 = vmatprep.subr.mxu0 %v1647
        %1862 = vmatpush1.msra.mxu0 %v1646
        %1863 = vmatprep.subr.mxu0 %v1651
        %1864 = vmatpush1.msra.mxu0 %v1650
        %1865 = vmatprep.subr.mxu0 %v1655
        %1866 = vmatpush1.msra.mxu0 %v1654
        %1867 = vmatprep.subr.mxu0 %v1659
        %1868 = vmatpush1.msra.mxu0 %v1658
        %1869 = vmatprep.subr.mxu0 %v1663
        %1870 = vmatpush1.msra.mxu0 %v1662
        %1871 = vmatprep.subr.mxu0 %v1667
        %1872 = vmatpush1.msra.mxu0 %v1666
        %1873 = vmatprep.subr.mxu0 %v1671
        %1874 = vmatpush1.msra.mxu0 %v1670
        %1875 = vmatprep.subr.mxu0 %v1675
        %1876 = vmatpush1.msra.mxu0 %v1674
        %1877 = vmatprep.subr.mxu0 %v1679
        %1878 = vmatpush1.msra.mxu0 %v1678
        %1879 = vmatprep.subr.mxu0 %v1683
        %1880 = vmatpush1.msra.mxu0 %v1682
        %1881 = vmatprep.subr.mxu0 %v1687
        %1882 = vmatpush1.msra.mxu0 %v1686
        %1883 = vmatprep.subr.mxu0 %v1691
        %1884 = vmatpush1.msra.mxu0 %v1690
        %1885 = vmatprep.subr.mxu0 %v1695
        %1886 = vmatpush1.msra.mxu0 %v1694
        %1887 = vmatprep.subr.mxu0 %v1699
        %1888 = vmatpush1.msra.mxu0 %v1698
        %1889 = vmatprep.subr.mxu0 %v1703
        %1890 = vmatpush1.msra.mxu0 %v1702
        %1891 = vmatprep.subr.mxu0 %v1707
        %1892 = vmatpush1.msra.mxu0 %v1706
        %1893 = vmatprep.subr.mxu0 %v1711
        %1894 = vmatpush1.msra.mxu0 %v1710
        %1895 = vmatprep.subr.mxu0 %v1715
        %1896 = vmatpush1.msra.mxu0 %v1714
        %1897 = vmatprep.subr.mxu0 %v1719
        %1898 = vmatpush1.msra.mxu0 %v1718
        %1899 = vmatprep.subr.mxu0 %v1723
        %1900 = vmatpush1.msra.mxu0 %v1722
        %1901 = vmatprep.mubr.f32.mxu0 %v1328
        %1902 = vmatmul.mubr.f32.gmra.mrb[0].mxu0 %v1326
        %v1903 = vpop.f32.mrb[0].mxu0
        %v1904 = vadd.f32 0.0, %v1903
        %v1905 = vpop.f32.mrb[0].mxu0
        %v1906 = vadd.f32 0.0, %v1905
        %1907 = vmatprep.mubr.f32.mxu0 %v1334
        %1908 = vmatmul.mubr.f32.gmra.mrb[0].mxu0 %v1332
        %v1909 = vpop.f32.mrb[0].mxu0
        %v1910 = vadd.f32 0.0, %v1909
        %v1911 = vpop.f32.mrb[0].mxu0
        %v1912 = vadd.f32 0.0, %v1911
        %1913 = vmatprep.mubr.f32.mxu0 %v1340
        %1914 = vmatmul.mubr.f32.gmra.mrb[0].mxu0 %v1338
        %v1915 = vpop.f32.mrb[0].mxu0
        %v1916 = vadd.f32 0.0, %v1915
        %v1917 = vpop.f32.mrb[0].mxu0
        %v1918 = vadd.f32 0.0, %v1917
        %1919 = vmatprep.mubr.f32.mxu0 %v1346
        %1920 = vmatmul.mubr.f32.gmra.mrb[0].mxu0 %v1344
        %v1921 = vpop.f32.mrb[0].mxu0
        %v1922 = vadd.f32 0.0, %v1921
        %v1923 = vpop.f32.mrb[0].mxu0
        %v1924 = vadd.f32 0.0, %v1923
        %1925 = vmatprep.mubr.f32.mxu0 %v1352
        %1926 = vmatmul.mubr.f32.gmra.mrb[0].mxu0 %v1350
        %v1927 = vpop.f32.mrb[0].mxu0
        %v1928 = vadd.f32 0.0, %v1927
        %v1929 = vpop.f32.mrb[0].mxu0
        %v1930 = vadd.f32 0.0, %v1929
        %1931 = vmatprep.mubr.f32.mxu0 %v1358
        %1932 = vmatmul.mubr.f32.gmra.mrb[0].mxu0 %v1356
        %v1933 = vpop.f32.mrb[0].mxu0
        %v1934 = vadd.f32 0.0, %v1933
        %v1935 = vpop.f32.mrb[0].mxu0
        %v1936 = vadd.f32 0.0, %v1935
        %1937 = vmatprep.mubr.f32.mxu0 %v1364
        %1938 = vmatmul.mubr.f32.gmra.mrb[0].mxu0 %v1362
        %v1939 = vpop.f32.mrb[0].mxu0
        %v1940 = vadd.f32 0.0, %v1939
        %v1941 = vpop.f32.mrb[0].mxu0
        %v1942 = vadd.f32 0.0, %v1941
        %1943 = vmatprep.mubr.f32.mxu0 %v1370
        %1944 = vmatmul.mubr.f32.gmra.mrb[0].mxu0 %v1368
        %v1945 = vpop.f32.mrb[0].mxu0
        %v1946 = vadd.f32 0.0, %v1945
        %v1947 = vpop.f32.mrb[0].mxu0
        %v1948 = vadd.f32 0.0, %v1947
        %1949 = vdwg.mxu0
        %1950 = vmatprep.subr.mxu0 %v1469
        %1951 = vmatpush1.msra.mxu0 %v1468
        %1952 = vmatprep.subr.mxu0 %v1473
        %1953 = vmatpush1.msra.mxu0 %v1472
        %1954 = vmatprep.subr.mxu0 %v1477
        %1955 = vmatpush1.msra.mxu0 %v1476
        %1956 = vmatprep.subr.mxu0 %v1481
        %1957 = vmatpush1.msra.mxu0 %v1480
        %1958 = vmatprep.subr.mxu0 %v1485
        %1959 = vmatpush1.msra.mxu0 %v1484
        %1960 = vmatprep.subr.mxu0 %v1489
        %1961 = vmatpush1.msra.mxu0 %v1488
        %1962 = vmatprep.subr.mxu0 %v1493
        %1963 = vmatpush1.msra.mxu0 %v1492
        %1964 = vmatprep.subr.mxu0 %v1497
        %1965 = vmatpush1.msra.mxu0 %v1496
        %1966 = vmatprep.subr.mxu0 %v1501
        %1967 = vmatpush1.msra.mxu0 %v1500
        %1968 = vmatprep.subr.mxu0 %v1505
        %1969 = vmatpush1.msra.mxu0 %v1504
        %1970 = vmatprep.subr.mxu0 %v1509
        %1971 = vmatpush1.msra.mxu0 %v1508
        %1972 = vmatprep.subr.mxu0 %v1513
        %1973 = vmatpush1.msra.mxu0 %v1512
        %1974 = vmatprep.subr.mxu0 %v1517
        %1975 = vmatpush1.msra.mxu0 %v1516
        %1976 = vmatprep.subr.mxu0 %v1521
        %1977 = vmatpush1.msra.mxu0 %v1520
        %1978 = vmatprep.subr.mxu0 %v1525
        %1979 = vmatpush1.msra.mxu0 %v1524
        %1980 = vmatprep.subr.mxu0 %v1529
        %1981 = vmatpush1.msra.mxu0 %v1528
        %1982 = vmatprep.subr.mxu0 %v1533
        %1983 = vmatpush1.msra.mxu0 %v1532
        %1984 = vmatprep.subr.mxu0 %v1537
        %1985 = vmatpush1.msra.mxu0 %v1536
        %1986 = vmatprep.subr.mxu0 %v1541
        %1987 = vmatpush1.msra.mxu0 %v1540
        %1988 = vmatprep.subr.mxu0 %v1545
        %1989 = vmatpush1.msra.mxu0 %v1544
        %1990 = vmatprep.subr.mxu0 %v1549
        %1991 = vmatpush1.msra.mxu0 %v1548
        %1992 = vmatprep.subr.mxu0 %v1553
        %1993 = vmatpush1.msra.mxu0 %v1552
        %1994 = vmatprep.subr.mxu0 %v1557
        %1995 = vmatpush1.msra.mxu0 %v1556
        %1996 = vmatprep.subr.mxu0 %v1561
        %1997 = vmatpush1.msra.mxu0 %v1560
        %1998 = vmatprep.subr.mxu0 %v1565
        %1999 = vmatpush1.msra.mxu0 %v1564
        %2000 = vmatprep.subr.mxu0 %v1569
        %2001 = vmatpush1.msra.mxu0 %v1568
        %2002 = vmatprep.subr.mxu0 %v1573
        %2003 = vmatpush1.msra.mxu0 %v1572
        %2004 = vmatprep.subr.mxu0 %v1577
        %2005 = vmatpush1.msra.mxu0 %v1576
        %2006 = vmatprep.subr.mxu0 %v1581
        %2007 = vmatpush1.msra.mxu0 %v1580
        %2008 = vmatprep.subr.mxu0 %v1585
        %2009 = vmatpush1.msra.mxu0 %v1584
        %2010 = vmatprep.subr.mxu0 %v1589
        %2011 = vmatpush1.msra.mxu0 %v1588
        %2012 = vmatprep.subr.mxu0 %v1593
        %2013 = vmatpush1.msra.mxu0 %v1592
        %2014 = vmatprep.mubr.f32.mxu0 %v1383
        %2015 = vmatmul.mubr.f32.gmra.mrb[0].mxu0 %v1377
        %v2016 = vpop.f32.mrb[0].mxu0
        %v2017 = vadd.f32 %v1791, %v2016
        %v2018 = vpop.f32.mrb[0].mxu0
        %v2019 = vadd.f32 %v1793, %v2018
        %2020 = vmatprep.mubr.f32.mxu0 %v1395
        %2021 = vmatmul.mubr.f32.gmra.mrb[0].mxu0 %v1389
        %v2022 = vpop.f32.mrb[0].mxu0
        %v2023 = vadd.f32 %v1797, %v2022
        %v2024 = vpop.f32.mrb[0].mxu0
        %v2025 = vadd.f32 %v1799, %v2024
        %2026 = vmatprep.mubr.f32.mxu0 %v1407
        %2027 = vmatmul.mubr.f32.gmra.mrb[0].mxu0 %v1401
        %v2028 = vpop.f32.mrb[0].mxu0
        %v2029 = vadd.f32 %v1803, %v2028
        %v2030 = vpop.f32.mrb[0].mxu0
        %v2031 = vadd.f32 %v1805, %v2030
        %2032 = vmatprep.mubr.f32.mxu0 %v1419
        %2033 = vmatmul.mubr.f32.gmra.mrb[0].mxu0 %v1413
        %v2034 = vpop.f32.mrb[0].mxu0
        %v2035 = vadd.f32 %v1809, %v2034
        %v2036 = vpop.f32.mrb[0].mxu0
        %v2037 = vadd.f32 %v1811, %v2036
        %2038 = vmatprep.mubr.f32.mxu0 %v1431
        %2039 = vmatmul.mubr.f32.gmra.mrb[0].mxu0 %v1425
        %v2040 = vpop.f32.mrb[0].mxu0
        %v2041 = vadd.f32 %v1815, %v2040
        %v2042 = vpop.f32.mrb[0].mxu0
        %v2043 = vadd.f32 %v1817, %v2042
        %2044 = vmatprep.mubr.f32.mxu0 %v1443
        %2045 = vmatmul.mubr.f32.gmra.mrb[0].mxu0 %v1437
        %v2046 = vpop.f32.mrb[0].mxu0
        %v2047 = vadd.f32 %v1821, %v2046
        %v2048 = vpop.f32.mrb[0].mxu0
        %v2049 = vadd.f32 %v1823, %v2048
        %2050 = vmatprep.mubr.f32.mxu0 %v1455
        %2051 = vmatmul.mubr.f32.gmra.mrb[0].mxu0 %v1449
        %v2052 = vpop.f32.mrb[0].mxu0
        %v2053 = vadd.f32 %v1827, %v2052
        %v2054 = vpop.f32.mrb[0].mxu0
        %v2055 = vadd.f32 %v1829, %v2054
        %2056 = vmatprep.mubr.f32.mxu0 %v1467
        %2057 = vmatmul.mubr.f32.gmra.mrb[0].mxu0 %v1461
        %v2058 = vpop.f32.mrb[0].mxu0
        %v2059 = vadd.f32 %v1833, %v2058
        %v2060 = vpop.f32.mrb[0].mxu0
        %v2061 = vadd.f32 %v1835, %v2060
        %2062 = vdwg.mxu0
        %2063 = vmatprep.subr.mxu0 %v1471
        %2064 = vmatpush1.msra.mxu0 %v1470
        %2065 = vmatprep.subr.mxu0 %v1475
        %2066 = vmatpush1.msra.mxu0 %v1474
        %2067 = vmatprep.subr.mxu0 %v1479
        %2068 = vmatpush1.msra.mxu0 %v1478
        %2069 = vmatprep.subr.mxu0 %v1483
        %2070 = vmatpush1.msra.mxu0 %v1482
        %2071 = vmatprep.subr.mxu0 %v1487
        %2072 = vmatpush1.msra.mxu0 %v1486
        %2073 = vmatprep.subr.mxu0 %v1491
        %2074 = vmatpush1.msra.mxu0 %v1490
        %2075 = vmatprep.subr.mxu0 %v1495
        %2076 = vmatpush1.msra.mxu0 %v1494
        %2077 = vmatprep.subr.mxu0 %v1499
        %2078 = vmatpush1.msra.mxu0 %v1498
        %2079 = vmatprep.subr.mxu0 %v1503
        %2080 = vmatpush1.msra.mxu0 %v1502
        %2081 = vmatprep.subr.mxu0 %v1507
        %2082 = vmatpush1.msra.mxu0 %v1506
        %2083 = vmatprep.subr.mxu0 %v1511
        %2084 = vmatpush1.msra.mxu0 %v1510
        %2085 = vmatprep.subr.mxu0 %v1515
        %2086 = vmatpush1.msra.mxu0 %v1514
        %2087 = vmatprep.subr.mxu0 %v1519
        %2088 = vmatpush1.msra.mxu0 %v1518
        %2089 = vmatprep.subr.mxu0 %v1523
        %2090 = vmatpush1.msra.mxu0 %v1522
        %2091 = vmatprep.subr.mxu0 %v1527
        %2092 = vmatpush1.msra.mxu0 %v1526
        %2093 = vmatprep.subr.mxu0 %v1531
        %2094 = vmatpush1.msra.mxu0 %v1530
        %2095 = vmatprep.subr.mxu0 %v1535
        %2096 = vmatpush1.msra.mxu0 %v1534
        %2097 = vmatprep.subr.mxu0 %v1539
        %2098 = vmatpush1.msra.mxu0 %v1538
        %2099 = vmatprep.subr.mxu0 %v1543
        %2100 = vmatpush1.msra.mxu0 %v1542
        %2101 = vmatprep.subr.mxu0 %v1547
        %2102 = vmatpush1.msra.mxu0 %v1546
        %2103 = vmatprep.subr.mxu0 %v1551
        %2104 = vmatpush1.msra.mxu0 %v1550
        %2105 = vmatprep.subr.mxu0 %v1555
        %2106 = vmatpush1.msra.mxu0 %v1554
        %2107 = vmatprep.subr.mxu0 %v1559
        %2108 = vmatpush1.msra.mxu0 %v1558
        %2109 = vmatprep.subr.mxu0 %v1563
        %2110 = vmatpush1.msra.mxu0 %v1562
        %2111 = vmatprep.subr.mxu0 %v1567
        %2112 = vmatpush1.msra.mxu0 %v1566
        %2113 = vmatprep.subr.mxu0 %v1571
        %2114 = vmatpush1.msra.mxu0 %v1570
        %2115 = vmatprep.subr.mxu0 %v1575
        %2116 = vmatpush1.msra.mxu0 %v1574
        %2117 = vmatprep.subr.mxu0 %v1579
        %2118 = vmatpush1.msra.mxu0 %v1578
        %2119 = vmatprep.subr.mxu0 %v1583
        %2120 = vmatpush1.msra.mxu0 %v1582
        %2121 = vmatprep.subr.mxu0 %v1587
        %2122 = vmatpush1.msra.mxu0 %v1586
        %2123 = vmatprep.subr.mxu0 %v1591
        %2124 = vmatpush1.msra.mxu0 %v1590
        %2125 = vmatprep.subr.mxu0 %v1595
        %2126 = vmatpush1.msra.mxu0 %v1594
        %2127 = vmatprep.mubr.f32.mxu0 %v1383
        %2128 = vmatmul.mubr.f32.gmra.mrb[0].mxu0 %v1377
        %v2129 = vpop.f32.mrb[0].mxu0
        %v2130 = vadd.f32 %v1904, %v2129
        %v2131 = vpop.f32.mrb[0].mxu0
        %v2132 = vadd.f32 %v1906, %v2131
        %2133 = vmatprep.mubr.f32.mxu0 %v1395
        %2134 = vmatmul.mubr.f32.gmra.mrb[0].mxu0 %v1389
        %v2135 = vpop.f32.mrb[0].mxu0
        %v2136 = vadd.f32 %v1910, %v2135
        %v2137 = vpop.f32.mrb[0].mxu0
        %v2138 = vadd.f32 %v1912, %v2137
        %2139 = vmatprep.mubr.f32.mxu0 %v1407
        %2140 = vmatmul.mubr.f32.gmra.mrb[0].mxu0 %v1401
        %v2141 = vpop.f32.mrb[0].mxu0
        %v2142 = vadd.f32 %v1916, %v2141
        %v2143 = vpop.f32.mrb[0].mxu0
        %v2144 = vadd.f32 %v1918, %v2143
        %2145 = vmatprep.mubr.f32.mxu0 %v1419
        %2146 = vmatmul.mubr.f32.gmra.mrb[0].mxu0 %v1413
        %v2147 = vpop.f32.mrb[0].mxu0
        %v2148 = vadd.f32 %v1922, %v2147
        %v2149 = vpop.f32.mrb[0].mxu0
        %v2150 = vadd.f32 %v1924, %v2149
        %2151 = vmatprep.mubr.f32.mxu0 %v1431
        %2152 = vmatmul.mubr.f32.gmra.mrb[0].mxu0 %v1425
        %v2153 = vpop.f32.mrb[0].mxu0
        %v2154 = vadd.f32 %v1928, %v2153
        %v2155 = vpop.f32.mrb[0].mxu0
        %v2156 = vadd.f32 %v1930, %v2155
        %2157 = vmatprep.mubr.f32.mxu0 %v1443
        %2158 = vmatmul.mubr.f32.gmra.mrb[0].mxu0 %v1437
        %v2159 = vpop.f32.mrb[0].mxu0
        %v2160 = vadd.f32 %v1934, %v2159
        %v2161 = vpop.f32.mrb[0].mxu0
        %v2162 = vadd.f32 %v1936, %v2161
        %2163 = vmatprep.mubr.f32.mxu0 %v1455
        %2164 = vmatmul.mubr.f32.gmra.mrb[0].mxu0 %v1449
        %v2165 = vpop.f32.mrb[0].mxu0
        %v2166 = vadd.f32 %v1940, %v2165
        %v2167 = vpop.f32.mrb[0].mxu0
        %v2168 = vadd.f32 %v1942, %v2167
        %2169 = vmatprep.mubr.f32.mxu0 %v1467
        %2170 = vmatmul.mubr.f32.gmra.mrb[0].mxu0 %v1461
        %v2171 = vpop.f32.mrb[0].mxu0
        %v2172 = vadd.f32 %v1946, %v2171
        %v2173 = vpop.f32.mrb[0].mxu0
        %v2174 = vadd.f32 %v1948, %v2173
        %2175 = vdwg.mxu0
        %v2176 = vld [vmem:[%s15] sm:$0xf]
        %v2178 = vlaneseq
        %v2179 = vshrl.u32 %v2178, 7
        %v2180 = vsub.s32 0, %v2179
        %v2181 = vrot.slane %v2176, %v2180
        %v2182 = vlaneseq
        %v2183 = vshrl.u32 %v2182, 7
        %v2184 = vsub.s32 1, %v2183
        %v2185 = vrot.slane %v2176, %v2184
        %v2186 = vlaneseq
        %v2187 = vshrl.u32 %v2186, 7
        %v2188 = vsub.s32 2, %v2187
        %v2189 = vrot.slane %v2176, %v2188
        %v2190 = vlaneseq
        %v2191 = vshrl.u32 %v2190, 7
        %v2192 = vsub.s32 3, %v2191
        %v2193 = vrot.slane %v2176, %v2192
        %v2198 = vadd.f32 %v2017, %v2181
        %v2199 = vadd.f32 %v2019, %v2185
        %v2200 = vadd.f32 %v2130, %v2189
        %v2201 = vadd.f32 %v2132, %v2193
        %v2202 = vadd.f32 %v2023, %v2181
        %v2203 = vadd.f32 %v2025, %v2185
        %v2204 = vadd.f32 %v2136, %v2189
        %v2205 = vadd.f32 %v2138, %v2193
        %v2206 = vadd.f32 %v2029, %v2181
        %v2207 = vadd.f32 %v2031, %v2185
        %v2208 = vadd.f32 %v2142, %v2189
        %v2209 = vadd.f32 %v2144, %v2193
        %v2210 = vadd.f32 %v2035, %v2181
        %v2211 = vadd.f32 %v2037, %v2185
        %v2212 = vadd.f32 %v2148, %v2189
        %v2213 = vadd.f32 %v2150, %v2193
        %v2214 = vadd.f32 %v2041, %v2181
        %v2215 = vadd.f32 %v2043, %v2185
        %v2216 = vadd.f32 %v2154, %v2189
        %v2217 = vadd.f32 %v2156, %v2193
        %v2218 = vadd.f32 %v2047, %v2181
        %v2219 = vadd.f32 %v2049, %v2185
        %v2220 = vadd.f32 %v2160, %v2189
        %v2221 = vadd.f32 %v2162, %v2193
        %v2222 = vadd.f32 %v2053, %v2181
        %v2223 = vadd.f32 %v2055, %v2185
        %v2224 = vadd.f32 %v2166, %v2189
        %v2225 = vadd.f32 %v2168, %v2193
        %v2226 = vadd.f32 %v2059, %v2181
        %v2227 = vadd.f32 %v2061, %v2185
        %v2228 = vadd.f32 %v2172, %v2189
        %v2229 = vadd.f32 %v2174, %v2193
        %v2230 = vmax.f32 %v2198, 0.0
        %v2231 = vmax.f32 %v2199, 0.0
        %v2232 = vmax.f32 %v2200, 0.0
        %v2233 = vmax.f32 %v2201, 0.0
        %v2234 = vmax.f32 %v2202, 0.0
        %v2235 = vmax.f32 %v2203, 0.0
        %v2236 = vmax.f32 %v2204, 0.0
        %v2237 = vmax.f32 %v2205, 0.0
        %v2238 = vmax.f32 %v2206, 0.0
        %v2239 = vmax.f32 %v2207, 0.0
        %v2240 = vmax.f32 %v2208, 0.0
        %v2241 = vmax.f32 %v2209, 0.0
        %v2242 = vmax.f32 %v2210, 0.0
        %v2243 = vmax.f32 %v2211, 0.0
        %v2244 = vmax.f32 %v2212, 0.0
        %v2245 = vmax.f32 %v2213, 0.0
        %v2246 = vmax.f32 %v2214, 0.0
        %v2247 = vmax.f32 %v2215, 0.0
        %v2248 = vmax.f32 %v2216, 0.0
        %v2249 = vmax.f32 %v2217, 0.0
        %v2250 = vmax.f32 %v2218, 0.0
        %v2251 = vmax.f32 %v2219, 0.0
        %v2252 = vmax.f32 %v2220, 0.0
        %v2253 = vmax.f32 %v2221, 0.0
        %v2254 = vmax.f32 %v2222, 0.0
        %v2255 = vmax.f32 %v2223, 0.0
        %v2256 = vmax.f32 %v2224, 0.0
        %v2257 = vmax.f32 %v2225, 0.0
        %v2258 = vmax.f32 %v2226, 0.0
        %v2259 = vmax.f32 %v2227, 0.0
        %v2260 = vmax.f32 %v2228, 0.0
        %v2261 = vmax.f32 %v2229, 0.0
        %v2262 = vld [vmem:[%s17] sm:$0xff]
        %v2263 = vld [vmem:[%s17 + $0x8] sm:$0xff]
        %v2264 = vld [vmem:[%s17 + $0x10] sm:$0xff]
        %v2265 = vld [vmem:[%s17 + $0x18] sm:$0xff]
        %v2266 = vld [vmem:[%s17 + $0x20] sm:$0xff]
        %v2267 = vld [vmem:[%s17 + $0x28] sm:$0xff]
        %v2268 = vld [vmem:[%s17 + $0x30] sm:$0xff]
        %v2269 = vld [vmem:[%s17 + $0x38] sm:$0xff]
        %v2270 = vld [vmem:[%s17 + $0x40] sm:$0xff]
        %v2271 = vld [vmem:[%s17 + $0x48] sm:$0xff]
        %v2272 = vld [vmem:[%s17 + $0x50] sm:$0xff]
        %v2273 = vld [vmem:[%s17 + $0x58] sm:$0xff]
        %v2274 = vld [vmem:[%s17 + $0x60] sm:$0xff]
        %v2275 = vld [vmem:[%s17 + $0x68] sm:$0xff]
        %v2276 = vld [vmem:[%s17 + $0x70] sm:$0xff]
        %v2277 = vld [vmem:[%s17 + $0x78] sm:$0xff]
        %v2278 = vld [vmem:[%s17 + $0x80] sm:$0xff]
        %v2279 = vld [vmem:[%s17 + $0x88] sm:$0xff]
        %v2280 = vld [vmem:[%s17 + $0x90] sm:$0xff]
        %v2281 = vld [vmem:[%s17 + $0x98] sm:$0xff]
        %v2282 = vld [vmem:[%s17 + $0xa0] sm:$0xff]
        %v2283 = vld [vmem:[%s17 + $0xa8] sm:$0xff]
        %v2284 = vld [vmem:[%s17 + $0xb0] sm:$0xff]
        %v2285 = vld [vmem:[%s17 + $0xb8] sm:$0xff]
        %v2286 = vld [vmem:[%s17 + $0xc0] sm:$0xff]
        %v2287 = vld [vmem:[%s17 + $0xc8] sm:$0xff]
        %v2288 = vld [vmem:[%s17 + $0xd0] sm:$0xff]
        %v2289 = vld [vmem:[%s17 + $0xd8] sm:$0xff]
        %v2290 = vld [vmem:[%s17 + $0xe0] sm:$0xff]
        %v2291 = vld [vmem:[%s17 + $0xe8] sm:$0xff]
        %v2292 = vld [vmem:[%s17 + $0xf0] sm:$0xff]
        %v2293 = vld [vmem:[%s17 + $0xf8] sm:$0xff]
        %v2294 = vld [vmem:[%s17 + $0x100] sm:$0xff]
        %v2295 = vld [vmem:[%s17 + $0x108] sm:$0xff]
        %v2296 = vld [vmem:[%s17 + $0x110] sm:$0xff]
        %v2297 = vld [vmem:[%s17 + $0x118] sm:$0xff]
        %v2298 = vld [vmem:[%s17 + $0x120] sm:$0xff]
        %v2299 = vld [vmem:[%s17 + $0x128] sm:$0xff]
        %v2300 = vld [vmem:[%s17 + $0x130] sm:$0xff]
        %v2301 = vld [vmem:[%s17 + $0x138] sm:$0xff]
        %v2302 = vld [vmem:[%s17 + $0x140] sm:$0xff]
        %v2303 = vld [vmem:[%s17 + $0x148] sm:$0xff]
        %v2304 = vld [vmem:[%s17 + $0x150] sm:$0xff]
        %v2305 = vld [vmem:[%s17 + $0x158] sm:$0xff]
        %v2306 = vld [vmem:[%s17 + $0x160] sm:$0xff]
        %v2307 = vld [vmem:[%s17 + $0x168] sm:$0xff]
        %v2308 = vld [vmem:[%s17 + $0x170] sm:$0xff]
        %v2309 = vld [vmem:[%s17 + $0x178] sm:$0xff]
        %v2310 = vld [vmem:[%s17 + $0x180] sm:$0xff]
        %v2311 = vld [vmem:[%s17 + $0x188] sm:$0xff]
        %v2312 = vld [vmem:[%s17 + $0x190] sm:$0xff]
        %v2313 = vld [vmem:[%s17 + $0x198] sm:$0xff]
        %v2314 = vld [vmem:[%s17 + $0x1a0] sm:$0xff]
        %v2315 = vld [vmem:[%s17 + $0x1a8] sm:$0xff]
        %v2316 = vld [vmem:[%s17 + $0x1b0] sm:$0xff]
        %v2317 = vld [vmem:[%s17 + $0x1b8] sm:$0xff]
        %v2318 = vld [vmem:[%s17 + $0x1c0] sm:$0xff]
        %v2319 = vld [vmem:[%s17 + $0x1c8] sm:$0xff]
        %v2320 = vld [vmem:[%s17 + $0x1d0] sm:$0xff]
        %v2321 = vld [vmem:[%s17 + $0x1d8] sm:$0xff]
        %v2322 = vld [vmem:[%s17 + $0x1e0] sm:$0xff]
        %v2323 = vld [vmem:[%s17 + $0x1e8] sm:$0xff]
        %v2324 = vld [vmem:[%s17 + $0x1f0] sm:$0xff]
        %v2325 = vld [vmem:[%s17 + $0x1f8] sm:$0xff]
        %v2326 = vld [vmem:[%s19] sm:$0x1]
        %v2328 = vlaneseq
        %v2329 = vshrl.u32 %v2328, 7
        %v2330 = vsub.s32 0, %v2329
        %v2331 = vrot.slane %v2326, %v2330
        %2333 = vmatprep.subr.mxu0 0.0
        %2334 = vmatpush1.msra.mxu0 %v2262
        %2335 = vmatprep.subr.mxu0 0.0
        %2336 = vmatpush1.msra.mxu0 %v2263
        %2337 = vmatprep.subr.mxu0 0.0
        %2338 = vmatpush1.msra.mxu0 %v2264
        %2339 = vmatprep.subr.mxu0 0.0
        %2340 = vmatpush1.msra.mxu0 %v2265
        %2341 = vmatprep.subr.mxu0 0.0
        %2342 = vmatpush1.msra.mxu0 %v2266
        %2343 = vmatprep.subr.mxu0 0.0
        %2344 = vmatpush1.msra.mxu0 %v2267
        %2345 = vmatprep.subr.mxu0 0.0
        %2346 = vmatpush1.msra.mxu0 %v2268
        %2347 = vmatprep.subr.mxu0 0.0
        %2348 = vmatpush1.msra.mxu0 %v2269
        %2349 = vmatprep.subr.mxu0 0.0
        %2350 = vmatpush1.msra.mxu0 %v2270
        %2351 = vmatprep.subr.mxu0 0.0
        %2352 = vmatpush1.msra.mxu0 %v2271
        %2353 = vmatprep.subr.mxu0 0.0
        %2354 = vmatpush1.msra.mxu0 %v2272
        %2355 = vmatprep.subr.mxu0 0.0
        %2356 = vmatpush1.msra.mxu0 %v2273
        %2357 = vmatprep.subr.mxu0 0.0
        %2358 = vmatpush1.msra.mxu0 %v2274
        %2359 = vmatprep.subr.mxu0 0.0
        %2360 = vmatpush1.msra.mxu0 %v2275
        %2361 = vmatprep.subr.mxu0 0.0
        %2362 = vmatpush1.msra.mxu0 %v2276
        %2363 = vmatprep.subr.mxu0 0.0
        %2364 = vmatpush1.msra.mxu0 %v2277
        %2365 = vmatprep.subr.mxu0 0.0
        %2366 = vmatpush1.msra.mxu0 %v2278
        %2367 = vmatprep.subr.mxu0 0.0
        %2368 = vmatpush1.msra.mxu0 %v2279
        %2369 = vmatprep.subr.mxu0 0.0
        %2370 = vmatpush1.msra.mxu0 %v2280
        %2371 = vmatprep.subr.mxu0 0.0
        %2372 = vmatpush1.msra.mxu0 %v2281
        %2373 = vmatprep.subr.mxu0 0.0
        %2374 = vmatpush1.msra.mxu0 %v2282
        %2375 = vmatprep.subr.mxu0 0.0
        %2376 = vmatpush1.msra.mxu0 %v2283
        %2377 = vmatprep.subr.mxu0 0.0
        %2378 = vmatpush1.msra.mxu0 %v2284
        %2379 = vmatprep.subr.mxu0 0.0
        %2380 = vmatpush1.msra.mxu0 %v2285
        %2381 = vmatprep.subr.mxu0 0.0
        %2382 = vmatpush1.msra.mxu0 %v2286
        %2383 = vmatprep.subr.mxu0 0.0
        %2384 = vmatpush1.msra.mxu0 %v2287
        %2385 = vmatprep.subr.mxu0 0.0
        %2386 = vmatpush1.msra.mxu0 %v2288
        %2387 = vmatprep.subr.mxu0 0.0
        %2388 = vmatpush1.msra.mxu0 %v2289
        %2389 = vmatprep.subr.mxu0 0.0
        %2390 = vmatpush1.msra.mxu0 %v2290
        %2391 = vmatprep.subr.mxu0 0.0
        %2392 = vmatpush1.msra.mxu0 %v2291
        %2393 = vmatprep.subr.mxu0 0.0
        %2394 = vmatpush1.msra.mxu0 %v2292
        %2395 = vmatprep.subr.mxu0 0.0
        %2396 = vmatpush1.msra.mxu0 %v2293
        %2397 = vmatprep.mubr.f32.mxu0 %v2231
        %2398 = vmatmul.mubr.f32.gmra.mrb[0].mxu0 %v2230
        %v2399 = vpop.f32.mrb[0].mxu0
        %v2400 = vadd.f32 %v2331, %v2399
        %v2401 = vpop.f32.mrb[0].mxu0
        %2402 = vmatprep.mubr.f32.mxu0 %v2235
        %2403 = vmatmul.mubr.f32.gmra.mrb[0].mxu0 %v2234
        %v2404 = vpop.f32.mrb[0].mxu0
        %v2405 = vadd.f32 %v2331, %v2404
        %v2406 = vpop.f32.mrb[0].mxu0
        %2407 = vmatprep.mubr.f32.mxu0 %v2239
        %2408 = vmatmul.mubr.f32.gmra.mrb[0].mxu0 %v2238
        %v2409 = vpop.f32.mrb[0].mxu0
        %v2410 = vadd.f32 %v2331, %v2409
        %v2411 = vpop.f32.mrb[0].mxu0
        %2412 = vmatprep.mubr.f32.mxu0 %v2243
        %2413 = vmatmul.mubr.f32.gmra.mrb[0].mxu0 %v2242
        %v2414 = vpop.f32.mrb[0].mxu0
        %v2415 = vadd.f32 %v2331, %v2414
        %v2416 = vpop.f32.mrb[0].mxu0
        %2417 = vmatprep.mubr.f32.mxu0 %v2247
        %2418 = vmatmul.mubr.f32.gmra.mrb[0].mxu0 %v2246
        %v2419 = vpop.f32.mrb[0].mxu0
        %v2420 = vadd.f32 %v2331, %v2419
        %v2421 = vpop.f32.mrb[0].mxu0
        %2422 = vmatprep.mubr.f32.mxu0 %v2251
        %2423 = vmatmul.mubr.f32.gmra.mrb[0].mxu0 %v2250
        %v2424 = vpop.f32.mrb[0].mxu0
        %v2425 = vadd.f32 %v2331, %v2424
        %v2426 = vpop.f32.mrb[0].mxu0
        %2427 = vmatprep.mubr.f32.mxu0 %v2255
        %2428 = vmatmul.mubr.f32.gmra.mrb[0].mxu0 %v2254
        %v2429 = vpop.f32.mrb[0].mxu0
        %v2430 = vadd.f32 %v2331, %v2429
        %v2431 = vpop.f32.mrb[0].mxu0
        %2432 = vmatprep.mubr.f32.mxu0 %v2259
        %2433 = vmatmul.mubr.f32.gmra.mrb[0].mxu0 %v2258
        %v2434 = vpop.f32.mrb[0].mxu0
        %v2435 = vadd.f32 %v2331, %v2434
        %v2436 = vpop.f32.mrb[0].mxu0
        %2437 = vdwg.mxu0
        %2438 = vmatprep.subr.mxu0 0.0
        %2439 = vmatpush1.msra.mxu0 %v2294
        %2440 = vmatprep.subr.mxu0 0.0
        %2441 = vmatpush1.msra.mxu0 %v2295
        %2442 = vmatprep.subr.mxu0 0.0
        %2443 = vmatpush1.msra.mxu0 %v2296
        %2444 = vmatprep.subr.mxu0 0.0
        %2445 = vmatpush1.msra.mxu0 %v2297
        %2446 = vmatprep.subr.mxu0 0.0
        %2447 = vmatpush1.msra.mxu0 %v2298
        %2448 = vmatprep.subr.mxu0 0.0
        %2449 = vmatpush1.msra.mxu0 %v2299
        %2450 = vmatprep.subr.mxu0 0.0
        %2451 = vmatpush1.msra.mxu0 %v2300
        %2452 = vmatprep.subr.mxu0 0.0
        %2453 = vmatpush1.msra.mxu0 %v2301
        %2454 = vmatprep.subr.mxu0 0.0
        %2455 = vmatpush1.msra.mxu0 %v2302
        %2456 = vmatprep.subr.mxu0 0.0
        %2457 = vmatpush1.msra.mxu0 %v2303
        %2458 = vmatprep.subr.mxu0 0.0
        %2459 = vmatpush1.msra.mxu0 %v2304
        %2460 = vmatprep.subr.mxu0 0.0
        %2461 = vmatpush1.msra.mxu0 %v2305
        %2462 = vmatprep.subr.mxu0 0.0
        %2463 = vmatpush1.msra.mxu0 %v2306
        %2464 = vmatprep.subr.mxu0 0.0
        %2465 = vmatpush1.msra.mxu0 %v2307
        %2466 = vmatprep.subr.mxu0 0.0
        %2467 = vmatpush1.msra.mxu0 %v2308
        %2468 = vmatprep.subr.mxu0 0.0
        %2469 = vmatpush1.msra.mxu0 %v2309
        %2470 = vmatprep.subr.mxu0 0.0
        %2471 = vmatpush1.msra.mxu0 %v2310
        %2472 = vmatprep.subr.mxu0 0.0
        %2473 = vmatpush1.msra.mxu0 %v2311
        %2474 = vmatprep.subr.mxu0 0.0
        %2475 = vmatpush1.msra.mxu0 %v2312
        %2476 = vmatprep.subr.mxu0 0.0
        %2477 = vmatpush1.msra.mxu0 %v2313
        %2478 = vmatprep.subr.mxu0 0.0
        %2479 = vmatpush1.msra.mxu0 %v2314
        %2480 = vmatprep.subr.mxu0 0.0
        %2481 = vmatpush1.msra.mxu0 %v2315
        %2482 = vmatprep.subr.mxu0 0.0
        %2483 = vmatpush1.msra.mxu0 %v2316
        %2484 = vmatprep.subr.mxu0 0.0
        %2485 = vmatpush1.msra.mxu0 %v2317
        %2486 = vmatprep.subr.mxu0 0.0
        %2487 = vmatpush1.msra.mxu0 %v2318
        %2488 = vmatprep.subr.mxu0 0.0
        %2489 = vmatpush1.msra.mxu0 %v2319
        %2490 = vmatprep.subr.mxu0 0.0
        %2491 = vmatpush1.msra.mxu0 %v2320
        %2492 = vmatprep.subr.mxu0 0.0
        %2493 = vmatpush1.msra.mxu0 %v2321
        %2494 = vmatprep.subr.mxu0 0.0
        %2495 = vmatpush1.msra.mxu0 %v2322
        %2496 = vmatprep.subr.mxu0 0.0
        %2497 = vmatpush1.msra.mxu0 %v2323
        %2498 = vmatprep.subr.mxu0 0.0
        %2499 = vmatpush1.msra.mxu0 %v2324
        %2500 = vmatprep.subr.mxu0 0.0
        %2501 = vmatpush1.msra.mxu0 %v2325
        %2502 = vmatprep.mubr.f32.mxu0 %v2233
        %2503 = vmatmul.mubr.f32.gmra.mrb[0].mxu0 %v2232
        %v2504 = vpop.f32.mrb[0].mxu0
        %v2505 = vadd.f32 %v2400, %v2504
        %v2506 = vpop.f32.mrb[0].mxu0
        %2507 = vmatprep.mubr.f32.mxu0 %v2237
        %2508 = vmatmul.mubr.f32.gmra.mrb[0].mxu0 %v2236
        %v2509 = vpop.f32.mrb[0].mxu0
        %v2510 = vadd.f32 %v2405, %v2509
        %v2511 = vpop.f32.mrb[0].mxu0
        %2512 = vmatprep.mubr.f32.mxu0 %v2241
        %2513 = vmatmul.mubr.f32.gmra.mrb[0].mxu0 %v2240
        %v2514 = vpop.f32.mrb[0].mxu0
        %v2515 = vadd.f32 %v2410, %v2514
        %v2516 = vpop.f32.mrb[0].mxu0
        %2517 = vmatprep.mubr.f32.mxu0 %v2245
        %2518 = vmatmul.mubr.f32.gmra.mrb[0].mxu0 %v2244
        %v2519 = vpop.f32.mrb[0].mxu0
        %v2520 = vadd.f32 %v2415, %v2519
        %v2521 = vpop.f32.mrb[0].mxu0
        %2522 = vmatprep.mubr.f32.mxu0 %v2249
        %2523 = vmatmul.mubr.f32.gmra.mrb[0].mxu0 %v2248
        %v2524 = vpop.f32.mrb[0].mxu0
        %v2525 = vadd.f32 %v2420, %v2524
        %v2526 = vpop.f32.mrb[0].mxu0
        %2527 = vmatprep.mubr.f32.mxu0 %v2253
        %2528 = vmatmul.mubr.f32.gmra.mrb[0].mxu0 %v2252
        %v2529 = vpop.f32.mrb[0].mxu0
        %v2530 = vadd.f32 %v2425, %v2529
        %v2531 = vpop.f32.mrb[0].mxu0
        %2532 = vmatprep.mubr.f32.mxu0 %v2257
        %2533 = vmatmul.mubr.f32.gmra.mrb[0].mxu0 %v2256
        %v2534 = vpop.f32.mrb[0].mxu0
        %v2535 = vadd.f32 %v2430, %v2534
        %v2536 = vpop.f32.mrb[0].mxu0
        %2537 = vmatprep.mubr.f32.mxu0 %v2261
        %2538 = vmatmul.mubr.f32.gmra.mrb[0].mxu0 %v2260
        %v2539 = vpop.f32.mrb[0].mxu0
        %v2540 = vadd.f32 %v2435, %v2539
        %v2541 = vpop.f32.mrb[0].mxu0
        %2542 = vdwg.mxu0
        %vm2543 = vcmask 261120
        %v2544 = vsel %vm2543, %v2505, -inf
        %v2545 = vrot.slane %v2544, 4
        %v2546 = vmax.f32 %v2544, %v2545
        %v2547 = vrot.slane %v2546, 2
        %v2548 = vmax.f32 %v2546, %v2547
        %v2549 = vrot.slane %v2548, 1
        %v2550 = vmax.f32 %v2548, %v2549
        %v2551 = vsel %vm2543, %v2510, -inf
        %v2552 = vrot.slane %v2551, 4
        %v2553 = vmax.f32 %v2551, %v2552
        %v2554 = vrot.slane %v2553, 2
        %v2555 = vmax.f32 %v2553, %v2554
        %v2556 = vrot.slane %v2555, 1
        %v2557 = vmax.f32 %v2555, %v2556
        %v2558 = vsel %vm2543, %v2515, -inf
        %v2559 = vrot.slane %v2558, 4
        %v2560 = vmax.f32 %v2558, %v2559
        %v2561 = vrot.slane %v2560, 2
        %v2562 = vmax.f32 %v2560, %v2561
        %v2563 = vrot.slane %v2562, 1
        %v2564 = vmax.f32 %v2562, %v2563
        %v2565 = vsel %vm2543, %v2520, -inf
        %v2566 = vrot.slane %v2565, 4
        %v2567 = vmax.f32 %v2565, %v2566
        %v2568 = vrot.slane %v2567, 2
        %v2569 = vmax.f32 %v2567, %v2568
        %v2570 = vrot.slane %v2569, 1
        %v2571 = vmax.f32 %v2569, %v2570
        %v2572 = vsel %vm2543, %v2525, -inf
        %v2573 = vrot.slane %v2572, 4
        %v2574 = vmax.f32 %v2572, %v2573
        %v2575 = vrot.slane %v2574, 2
        %v2576 = vmax.f32 %v2574, %v2575
        %v2577 = vrot.slane %v2576, 1
        %v2578 = vmax.f32 %v2576, %v2577
        %v2579 = vsel %vm2543, %v2530, -inf
        %v2580 = vrot.slane %v2579, 4
        %v2581 = vmax.f32 %v2579, %v2580
        %v2582 = vrot.slane %v2581, 2
        %v2583 = vmax.f32 %v2581, %v2582
        %v2584 = vrot.slane %v2583, 1
        %v2585 = vmax.f32 %v2583, %v2584
        %v2586 = vsel %vm2543, %v2535, -inf
        %v2587 = vrot.slane %v2586, 4
        %v2588 = vmax.f32 %v2586, %v2587
        %v2589 = vrot.slane %v2588, 2
        %v2590 = vmax.f32 %v2588, %v2589
        %v2591 = vrot.slane %v2590, 1
        %v2592 = vmax.f32 %v2590, %v2591
        %v2593 = vsel %vm2543, %v2540, -inf
        %v2594 = vrot.slane %v2593, 4
        %v2595 = vmax.f32 %v2593, %v2594
        %v2596 = vrot.slane %v2595, 2
        %v2597 = vmax.f32 %v2595, %v2596
        %v2598 = vrot.slane %v2597, 1
        %v2599 = vmax.f32 %v2597, %v2598
        %v2600 = vld [vmem:[%s1056] sm:$0xff]
        %v2601 = vld [vmem:[%s25] sm:$0x7]
        %v2602 = vld [vmem:[%s27] sm:$0x1]
        %v2604 = vlaneseq
        %v2605 = vshrl.u32 %v2604, 7
        %v2606 = vsub.s32 0, %v2605
        %v2607 = vrot.slane %v2602, %v2606
        %v2610 = vsel %vm1073, %v2600, 0
        %v2613 = vsel %vm1098, %v2601, 0
        %2615 = vmatprep.subr.mxu0 0.0
        %2616 = vmatpush1.msra.mxu0 %v2613
        %2617 = vmatprep.subr.mxu0 0.0
        %2618 = vmatpush1.msra.mxu0 0.0
        %2619 = vmatprep.subr.mxu0 0.0
        %2620 = vmatpush1.msra.mxu0 0.0
        %2621 = vmatprep.subr.mxu0 0.0
        %2622 = vmatpush1.msra.mxu0 0.0
        %2623 = vmatprep.subr.mxu0 0.0
        %2624 = vmatpush1.msra.mxu0 0.0
        %2625 = vmatprep.subr.mxu0 0.0
        %2626 = vmatpush1.msra.mxu0 0.0
        %2627 = vmatprep.subr.mxu0 0.0
        %2628 = vmatpush1.msra.mxu0 0.0
        %2629 = vmatprep.subr.mxu0 0.0
        %2630 = vmatpush1.msra.mxu0 0.0
        %2631 = vmatprep.subr.mxu0 0.0
        %2632 = vmatpush1.msra.mxu0 0.0
        %2633 = vmatprep.subr.mxu0 0.0
        %2634 = vmatpush1.msra.mxu0 0.0
        %2635 = vmatprep.subr.mxu0 0.0
        %2636 = vmatpush1.msra.mxu0 0.0
        %2637 = vmatprep.subr.mxu0 0.0
        %2638 = vmatpush1.msra.mxu0 0.0
        %2639 = vmatprep.subr.mxu0 0.0
        %2640 = vmatpush1.msra.mxu0 0.0
        %2641 = vmatprep.subr.mxu0 0.0
        %2642 = vmatpush1.msra.mxu0 0.0
        %2643 = vmatprep.subr.mxu0 0.0
        %2644 = vmatpush1.msra.mxu0 0.0
        %2645 = vmatprep.subr.mxu0 0.0
        %2646 = vmatpush1.msra.mxu0 0.0
        %2647 = vmatprep.subr.mxu0 0.0
        %2648 = vmatpush1.msra.mxu0 0.0
        %2649 = vmatprep.subr.mxu0 0.0
        %2650 = vmatpush1.msra.mxu0 0.0
        %2651 = vmatprep.subr.mxu0 0.0
        %2652 = vmatpush1.msra.mxu0 0.0
        %2653 = vmatprep.subr.mxu0 0.0
        %2654 = vmatpush1.msra.mxu0 0.0
        %2655 = vmatprep.subr.mxu0 0.0
        %2656 = vmatpush1.msra.mxu0 0.0
        %2657 = vmatprep.subr.mxu0 0.0
        %2658 = vmatpush1.msra.mxu0 0.0
        %2659 = vmatprep.subr.mxu0 0.0
        %2660 = vmatpush1.msra.mxu0 0.0
        %2661 = vmatprep.subr.mxu0 0.0
        %2662 = vmatpush1.msra.mxu0 0.0
        %2663 = vmatprep.subr.mxu0 0.0
        %2664 = vmatpush1.msra.mxu0 0.0
        %2665 = vmatprep.subr.mxu0 0.0
        %2666 = vmatpush1.msra.mxu0 0.0
        %2667 = vmatprep.subr.mxu0 0.0
        %2668 = vmatpush1.msra.mxu0 0.0
        %2669 = vmatprep.subr.mxu0 0.0
        %2670 = vmatpush1.msra.mxu0 0.0
        %2671 = vmatprep.subr.mxu0 0.0
        %2672 = vmatpush1.msra.mxu0 0.0
        %2673 = vmatprep.subr.mxu0 0.0
        %2674 = vmatpush1.msra.mxu0 0.0
        %2675 = vmatprep.subr.mxu0 0.0
        %2676 = vmatpush1.msra.mxu0 0.0
        %2677 = vmatprep.subr.mxu0 0.0
        %2678 = vmatpush1.msra.mxu0 0.0
        %2679 = vmatprep.mubr.f32.mxu0 0.0
        %2680 = vmatmul.mubr.f32.gmra.mrb[0].mxu0 %v2610
        %v2681 = vpop.f32.mrb[0].mxu0
        %v2682 = vadd.f32 %v2607, %v2681
        %v2683 = vpop.f32.mrb[0].mxu0
        %2684 = vdwg.mxu0
        %v2685 = vmul.f32 %v2682, 0.5
        %v2686 = vmul.f32 %v2682, 0.044715
        %v2687 = vmul.f32 %v2686, %v2682
        %v2688 = vmul.f32 %v2687, %v2682
        %v2689 = vadd.f32 %v2682, %v2688
        %v2690 = vmul.f32 %v2689, 0.7978846
        %v2691 = vtanh.pop %v2690
        %v2692 = vadd.f32 %v2691, 1.0
        %v2693 = vmul.f32 %v2685, %v2692
        %v2694 = vld [vmem:[%s29] sm:$0xff]
        %v2695 = vld [vmem:[%s29 + $0x8] sm:$0xff]
        %v2696 = vld [vmem:[%s29 + $0x10] sm:$0xff]
        %v2697 = vld [vmem:[%s29 + $0x18] sm:$0xff]
        %v2698 = vld [vmem:[%s29 + $0x20] sm:$0xff]
        %v2699 = vld [vmem:[%s29 + $0x28] sm:$0xff]
        %v2700 = vld [vmem:[%s29 + $0x30] sm:$0xff]
        %v2701 = vld [vmem:[%s29 + $0x38] sm:$0xff]
        %v2702 = vld [vmem:[%s29 + $0x40] sm:$0xff]
        %v2703 = vld [vmem:[%s29 + $0x48] sm:$0xff]
        %v2704 = vld [vmem:[%s29 + $0x50] sm:$0xff]
        %v2705 = vld [vmem:[%s29 + $0x58] sm:$0xff]
        %v2706 = vld [vmem:[%s29 + $0x60] sm:$0xff]
        %v2707 = vld [vmem:[%s29 + $0x68] sm:$0xff]
        %v2708 = vld [vmem:[%s29 + $0x70] sm:$0xff]
        %v2709 = vld [vmem:[%s29 + $0x78] sm:$0xff]
        %v2710 = vld [vmem:[%s31] sm:$0x1]
        %v2712 = vlaneseq
        %v2713 = vshrl.u32 %v2712, 7
        %v2714 = vsub.s32 0, %v2713
        %v2715 = vrot.slane %v2710, %v2714
        %2717 = vmatprep.subr.mxu0 0.0
        %2718 = vmatpush1.msra.mxu0 %v2694
        %2719 = vmatprep.subr.mxu0 0.0
        %2720 = vmatpush1.msra.mxu0 %v2695
        %2721 = vmatprep.subr.mxu0 0.0
        %2722 = vmatpush1.msra.mxu0 %v2696
        %2723 = vmatprep.subr.mxu0 0.0
        %2724 = vmatpush1.msra.mxu0 %v2697
        %2725 = vmatprep.subr.mxu0 0.0
        %2726 = vmatpush1.msra.mxu0 %v2698
        %2727 = vmatprep.subr.mxu0 0.0
        %2728 = vmatpush1.msra.mxu0 %v2699
        %2729 = vmatprep.subr.mxu0 0.0
        %2730 = vmatpush1.msra.mxu0 %v2700
        %2731 = vmatprep.subr.mxu0 0.0
        %2732 = vmatpush1.msra.mxu0 %v2701
        %2733 = vmatprep.subr.mxu0 0.0
        %2734 = vmatpush1.msra.mxu0 %v2702
        %2735 = vmatprep.subr.mxu0 0.0
        %2736 = vmatpush1.msra.mxu0 %v2703
        %2737 = vmatprep.subr.mxu0 0.0
        %2738 = vmatpush1.msra.mxu0 %v2704
        %2739 = vmatprep.subr.mxu0 0.0
        %2740 = vmatpush1.msra.mxu0 %v2705
        %2741 = vmatprep.subr.mxu0 0.0
        %2742 = vmatpush1.msra.mxu0 %v2706
        %2743 = vmatprep.subr.mxu0 0.0
        %2744 = vmatpush1.msra.mxu0 %v2707
        %2745 = vmatprep.subr.mxu0 0.0
        %2746 = vmatpush1.msra.mxu0 %v2708
        %2747 = vmatprep.subr.mxu0 0.0
        %2748 = vmatpush1.msra.mxu0 %v2709
        %2749 = vmatprep.subr.mxu0 0.0
        %2750 = vmatpush1.msra.mxu0 0.0
        %2751 = vmatprep.subr.mxu0 0.0
        %2752 = vmatpush1.msra.mxu0 0.0
        %2753 = vmatprep.subr.mxu0 0.0
        %2754 = vmatpush1.msra.mxu0 0.0
        %2755 = vmatprep.subr.mxu0 0.0
        %2756 = vmatpush1.msra.mxu0 0.0
        %2757 = vmatprep.subr.mxu0 0.0
        %2758 = vmatpush1.msra.mxu0 0.0
        %2759 = vmatprep.subr.mxu0 0.0
        %2760 = vmatpush1.msra.mxu0 0.0
        %2761 = vmatprep.subr.mxu0 0.0
        %2762 = vmatpush1.msra.mxu0 0.0
        %2763 = vmatprep.subr.mxu0 0.0
        %2764 = vmatpush1.msra.mxu0 0.0
        %2765 = vmatprep.subr.mxu0 0.0
        %2766 = vmatpush1.msra.mxu0 0.0
        %2767 = vmatprep.subr.mxu0 0.0
        %2768 = vmatpush1.msra.mxu0 0.0
        %2769 = vmatprep.subr.mxu0 0.0
        %2770 = vmatpush1.msra.mxu0 0.0
        %2771 = vmatprep.subr.mxu0 0.0
        %2772 = vmatpush1.msra.mxu0 0.0
        %2773 = vmatprep.subr.mxu0 0.0
        %2774 = vmatpush1.msra.mxu0 0.0
        %2775 = vmatprep.subr.mxu0 0.0
        %2776 = vmatpush1.msra.mxu0 0.0
        %2777 = vmatprep.subr.mxu0 0.0
        %2778 = vmatpush1.msra.mxu0 0.0
        %2779 = vmatprep.subr.mxu0 0.0
        %2780 = vmatpush1.msra.mxu0 0.0
        %2781 = vmatprep.mubr.f32.mxu0 0.0
        %2782 = vmatmul.mubr.f32.gmra.mrb[0].mxu0 %v2693
        %v2783 = vpop.f32.mrb[0].mxu0
        %v2784 = vadd.f32 %v2715, %v2783
        %v2785 = vpop.f32.mrb[0].mxu0
        %2786 = vdwg.mxu0
        %v2787 = vld [vmem:[%s21] sm:$0x1]
        %vm2796 = vcmask 1042434
        %v2797 = vsel %vm2796, %v2557, %v2550
        %vm2798 = vcmask 1043459
        %v2799 = vsel %vm2798, %v2564, %v2797
        %vm2800 = vcmask 1044484
        %v2801 = vsel %vm2800, %v2571, %v2799
        %vm2802 = vcmask 1045509
        %v2803 = vsel %vm2802, %v2578, %v2801
        %vm2804 = vcmask 1046534
        %v2805 = vsel %vm2804, %v2585, %v2803
        %vm2806 = vcmask 1047559
        %v2807 = vsel %vm2806, %v2592, %v2805
        %vm2810 = vcmask 1040384
        %v2811 = vsel %vm2810, %v2787, %v2807
        %v2812 = vld [vmem:[%s23] sm:$0x1]
        %v2814 = vrot.slane %v2784, 7
        %v2816 = vsel %vm2810, %v2812, %v2814
        %v2817 = vadd.f32 %v2811, %v2816
        %v2818 = vadd.f32 %v2599, %v2814
        %v2819 = vld [vmem:[%s33] sm:$0x1]
        %v2820 = vld [vmem:[%s35] sm:$0x1]
        %v2821 = vsel %vm2543, %v2817, 0.0
        %2822 = vadd.xlane.f32.xlu0 %v2821
        %v2823 = vpop.xlane.xlu0 %2822
        %vm2824 = vcmask 253952
        %v2825 = vsel %vm2824, %v2818, 0.0
        %2826 = vadd.xlane.f32.xlu0 %v2825
        %v2827 = vpop.xlane.xlu0 %2826
        %v2828 = vrcp.pop 32.0
        %v2829 = vmul.f32 %v2823, %v2828
        %v2830 = vmul.f32 %v2827, %v2828
        %v2831 = vsub.f32 %v2817, %v2829
        %v2832 = vsub.f32 %v2818, %v2830
        %v2833 = vmul.f32 %v2831, %v2831
        %v2834 = vmul.f32 %v2832, %v2832
        %v2835 = vsel %vm2543, %v2833, 0.0
        %2836 = vadd.xlane.f32.xlu0 %v2835
        %v2837 = vpop.xlane.xlu0 %2836
        %v2838 = vsel %vm2824, %v2834, 0.0
        %2839 = vadd.xlane.f32.xlu0 %v2838
        %v2840 = vpop.xlane.xlu0 %2839
        %v2841 = vmul.f32 %v2837, %v2828
        %v2842 = vmul.f32 %v2840, %v2828
        %v2843 = vadd.f32 %v2841, 1e-05
        %v2844 = vadd.f32 %v2842, 1e-05
        %v2845 = vrsqrt.pop %v2843
        %v2846 = vrsqrt.pop %v2844
        %v2847 = vmul.f32 %v2831, %v2845
        %v2848 = vmul.f32 %v2832, %v2846
        %v2850 = vlaneseq
        %v2851 = vshrl.u32 %v2850, 7
        %v2852 = vsub.s32 0, %v2851
        %v2853 = vrot.slane %v2819, %v2852
        %v2855 = vmul.f32 %v2847, %v2853
        %v2856 = vmul.f32 %v2848, %v2853
        %v2858 = vlaneseq
        %v2859 = vshrl.u32 %v2858, 7
        %v2860 = vsub.s32 0, %v2859
        %v2861 = vrot.slane %v2820, %v2860
        %v2863 = vadd.f32 %v2855, %v2861
        %v2864 = vadd.f32 %v2856, %v2861
        %v2865 = vld [vmem:[%s37] sm:$0xff]
        %v2866 = vld [vmem:[%s37 + $0x8] sm:$0xff]
        %v2867 = vld [vmem:[%s37 + $0x10] sm:$0xff]
        %v2868 = vld [vmem:[%s37 + $0x18] sm:$0xff]
        %v2869 = vld [vmem:[%s39] sm:$0x1]
        %v2871 = vlaneseq
        %v2872 = vshrl.u32 %v2871, 7
        %v2873 = vsub.s32 0, %v2872
        %v2874 = vrot.slane %v2869, %v2873
        %v2877 = vsel %vm2543, %v2863, 0
        %v2880 = vsel %vm2543, %v2864, 0
        %2882 = vmatprep.subr.mxu0 0.0
        %2883 = vmatpush1.msra.mxu0 %v2865
        %2884 = vmatprep.subr.mxu0 0.0
        %2885 = vmatpush1.msra.mxu0 %v2866
        %2886 = vmatprep.subr.mxu0 0.0
        %2887 = vmatpush1.msra.mxu0 %v2867
        %2888 = vmatprep.subr.mxu0 0.0
        %2889 = vmatpush1.msra.mxu0 %v2868
        %2890 = vmatprep.subr.mxu0 0.0
        %2891 = vmatpush1.msra.mxu0 0.0
        %2892 = vmatprep.subr.mxu0 0.0
        %2893 = vmatpush1.msra.mxu0 0.0
        %2894 = vmatprep.subr.mxu0 0.0
        %2895 = vmatpush1.msra.mxu0 0.0
        %2896 = vmatprep.subr.mxu0 0.0
        %2897 = vmatpush1.msra.mxu0 0.0
        %2898 = vmatprep.subr.mxu0 0.0
        %2899 = vmatpush1.msra.mxu0 0.0
        %2900 = vmatprep.subr.mxu0 0.0
        %2901 = vmatpush1.msra.mxu0 0.0
        %2902 = vmatprep.subr.mxu0 0.0
        %2903 = vmatpush1.msra.mxu0 0.0
        %2904 = vmatprep.subr.mxu0 0.0
        %2905 = vmatpush1.msra.mxu0 0.0
        %2906 = vmatprep.subr.mxu0 0.0
        %2907 = vmatpush1.msra.mxu0 0.0
        %2908 = vmatprep.subr.mxu0 0.0
        %2909 = vmatpush1.msra.mxu0 0.0
        %2910 = vmatprep.subr.mxu0 0.0
        %2911 = vmatpush1.msra.mxu0 0.0
        %2912 = vmatprep.subr.mxu0 0.0
        %2913 = vmatpush1.msra.mxu0 0.0
        %2914 = vmatprep.subr.mxu0 0.0
        %2915 = vmatpush1.msra.mxu0 0.0
        %2916 = vmatprep.subr.mxu0 0.0
        %2917 = vmatpush1.msra.mxu0 0.0
        %2918 = vmatprep.subr.mxu0 0.0
        %2919 = vmatpush1.msra.mxu0 0.0
        %2920 = vmatprep.subr.mxu0 0.0
        %2921 = vmatpush1.msra.mxu0 0.0
        %2922 = vmatprep.subr.mxu0 0.0
        %2923 = vmatpush1.msra.mxu0 0.0
        %2924 = vmatprep.subr.mxu0 0.0
        %2925 = vmatpush1.msra.mxu0 0.0
        %2926 = vmatprep.subr.mxu0 0.0
        %2927 = vmatpush1.msra.mxu0 0.0
        %2928 = vmatprep.subr.mxu0 0.0
        %2929 = vmatpush1.msra.mxu0 0.0
        %2930 = vmatprep.subr.mxu0 0.0
        %2931 = vmatpush1.msra.mxu0 0.0
        %2932 = vmatprep.subr.mxu0 0.0
        %2933 = vmatpush1.msra.mxu0 0.0
        %2934 = vmatprep.subr.mxu0 0.0
        %2935 = vmatpush1.msra.mxu0 0.0
        %2936 = vmatprep.subr.mxu0 0.0
        %2937 = vmatpush1.msra.mxu0 0.0
        %2938 = vmatprep.subr.mxu0 0.0
        %2939 = vmatpush1.msra.mxu0 0.0
        %2940 = vmatprep.subr.mxu0 0.0
        %2941 = vmatpush1.msra.mxu0 0.0
        %2942 = vmatprep.subr.mxu0 0.0
        %2943 = vmatpush1.msra.mxu0 0.0
        %2944 = vmatprep.subr.mxu0 0.0
        %2945 = vmatpush1.msra.mxu0 0.0
        %2946 = vmatprep.mubr.f32.mxu0 0.0
        %2947 = vmatmul.mubr.f32.gmra.mrb[0].mxu0 %v2877
        %v2948 = vpop.f32.mrb[0].mxu0
        %v2949 = vadd.f32 %v2874, %v2948
        %v2950 = vpop.f32.mrb[0].mxu0
        %2951 = vmatprep.mubr.f32.mxu0 0.0
        %2952 = vmatmul.mubr.f32.gmra.mrb[0].mxu0 %v2880
        %v2953 = vpop.f32.mrb[0].mxu0
        %v2954 = vadd.f32 %v2874, %v2953
        %v2955 = vpop.f32.mrb[0].mxu0
        %2956 = vdwg.mxu0
        %v2957 = vld [vmem:[%s41] sm:$0xff]
        %v2958 = vld [vmem:[%s41 + $0x8] sm:$0xff]
        %v2959 = vld [vmem:[%s41 + $0x10] sm:$0xff]
        %v2960 = vld [vmem:[%s41 + $0x18] sm:$0xff]
        %2963 = vrot.lane.b32.xlu0 %v2949, 96
        %v2964 = vpop.permute.xlu0 %2963
        %2965 = vrot.lane.b32.xlu0 %v2954, 96
        %v2966 = vpop.permute.xlu0 %2965
        %vm2967 = vcmask 130048
        %v2968 = vsel %vm2967, %v2949, 0
        %v2970 = vsel %vm2967, %v2954, 0
        %v2972 = vsel %vm2967, %v2964, 0
        %v2974 = vsel %vm2967, %v2966, 0
        %2976 = vmatprep.subr.mxu0 0.0
        %2977 = vmatpush1.xpose.msra.mxu0 %v2972
        %2978 = vmatprep.subr.mxu0 0.0
        %2979 = vmatpush1.xpose.msra.mxu0 %v2974
        %2980 = vmatprep.subr.mxu0 0.0
        %2981 = vmatpush1.xpose.msra.mxu0 0.0
        %2982 = vmatprep.subr.mxu0 0.0
        %2983 = vmatpush1.xpose.msra.mxu0 0.0
        %2984 = vmatprep.subr.mxu0 0.0
        %2985 = vmatpush1.xpose.msra.mxu0 0.0
        %2986 = vmatprep.subr.mxu0 0.0
        %2987 = vmatpush1.xpose.msra.mxu0 0.0
        %2988 = vmatprep.subr.mxu0 0.0
        %2989 = vmatpush1.xpose.msra.mxu0 0.0
        %2990 = vmatprep.subr.mxu0 0.0
        %2991 = vmatpush1.xpose.msra.mxu0 0.0
        %2992 = vmatprep.subr.mxu0 0.0
        %2993 = vmatpush1.xpose.msra.mxu0 0.0
        %2994 = vmatprep.subr.mxu0 0.0
        %2995 = vmatpush1.xpose.msra.mxu0 0.0
        %2996 = vmatprep.subr.mxu0 0.0
        %2997 = vmatpush1.xpose.msra.mxu0 0.0
        %2998 = vmatprep.subr.mxu0 0.0
        %2999 = vmatpush1.xpose.msra.mxu0 0.0
        %3000 = vmatprep.subr.mxu0 0.0
        %3001 = vmatpush1.xpose.msra.mxu0 0.0
        %3002 = vmatprep.subr.mxu0 0.0
        %3003 = vmatpush1.xpose.msra.mxu0 0.0
        %3004 = vmatprep.subr.mxu0 0.0
        %3005 = vmatpush1.xpose.msra.mxu0 0.0
        %3006 = vmatprep.subr.mxu0 0.0
        %3007 = vmatpush1.xpose.msra.mxu0 0.0
        %3008 = vmatprep.subr.mxu0 0.0
        %3009 = vmatpush1.xpose.msra.mxu0 0.0
        %3010 = vmatprep.subr.mxu0 0.0
        %3011 = vmatpush1.xpose.msra.mxu0 0.0
        %3012 = vmatprep.subr.mxu0 0.0
        %3013 = vmatpush1.xpose.msra.mxu0 0.0
        %3014 = vmatprep.subr.mxu0 0.0
        %3015 = vmatpush1.xpose.msra.mxu0 0.0
        %3016 = vmatprep.subr.mxu0 0.0
        %3017 = vmatpush1.xpose.msra.mxu0 0.0
        %3018 = vmatprep.subr.mxu0 0.0
        %3019 = vmatpush1.xpose.msra.mxu0 0.0
        %3020 = vmatprep.subr.mxu0 0.0
        %3021 = vmatpush1.xpose.msra.mxu0 0.0
        %3022 = vmatprep.subr.mxu0 0.0
        %3023 = vmatpush1.xpose.msra.mxu0 0.0
        %3024 = vmatprep.subr.mxu0 0.0
        %3025 = vmatpush1.xpose.msra.mxu0 0.0
        %3026 = vmatprep.subr.mxu0 0.0
        %3027 = vmatpush1.xpose.msra.mxu0 0.0
        %3028 = vmatprep.subr.mxu0 0.0
        %3029 = vmatpush1.xpose.msra.mxu0 0.0
        %3030 = vmatprep.subr.mxu0 0.0
        %3031 = vmatpush1.xpose.msra.mxu0 0.0
        %3032 = vmatprep.subr.mxu0 0.0
        %3033 = vmatpush1.xpose.msra.mxu0 0.0
        %3034 = vmatprep.subr.mxu0 0.0
        %3035 = vmatpush1.xpose.msra.mxu0 0.0
        %3036 = vmatprep.subr.mxu0 0.0
        %3037 = vmatpush1.xpose.msra.mxu0 0.0
        %3038 = vmatprep.subr.mxu0 0.0
        %3039 = vmatpush1.xpose.msra.mxu0 0.0
        %3040 = vmatprep.mubr.f32.mxu0 0.0
        %3041 = vmatmul.mubr.f32.gmra.mrb[0].mxu0 %v2968
        %v3042 = vpop.f32.mrb[0].mxu0
        %v3043 = vadd.f32 0.0, %v3042
        %v3044 = vpop.f32.mrb[0].mxu0
        %3045 = vmatprep.mubr.f32.mxu0 0.0
        %3046 = vmatmul.mubr.f32.gmra.mrb[0].mxu0 %v2970
        %v3047 = vpop.f32.mrb[0].mxu0
        %v3048 = vadd.f32 0.0, %v3047
        %v3049 = vpop.f32.mrb[0].mxu0
        %3050 = vdwg.mxu0
        %v3051 = vmul.f32 %v3043, 0.25
        %v3052 = vmul.f32 %v3048, 0.25
        %vm3053 = vcmask 72704
        %v3054 = vsel %vm3053, %v3051, -inf
        %3055 = vmax.xlane.f32.xlu0 %v3054
        %v3056 = vpop.xlane.xlu0 %3055
        %vm3057 = vcmask 65536
        %v3058 = vsel %vm3057, %v3052, -inf
        %3059 = vmax.xlane.f32.xlu0 %v3058
        %v3060 = vpop.xlane.xlu0 %3059
        %v3061 = vsub.f32 %v3051, %v3056
        %v3062 = vsub.f32 %v3052, %v3060
        %v3063 = vmul.f32 %v3061, 1.442695
        %v3064 = vpow.pop %v3063
        %v3065 = vmul.f32 %v3062, 1.442695
        %v3066 = vpow.pop %v3065
        %v3067 = vsel %vm3053, %v3064, 0.0
        %3068 = vadd.xlane.f32.xlu0 %v3067
        %v3069 = vpop.xlane.xlu0 %3068
        %v3070 = vsel %vm3057, %v3066, 0.0
        %3071 = vadd.xlane.f32.xlu0 %v3070
        %v3072 = vpop.xlane.xlu0 %3071
        %v3073 = vrcp.pop %v3069
        %v3074 = vrcp.pop %v3072
        %v3075 = vmul.f32 %v3064, %v3073
        %v3076 = vmul.f32 %v3066, %v3074
        %3077 = vrot.lane.b32.xlu0 %v2949, 64
        %v3078 = vpop.permute.xlu0 %3077
        %3079 = vrot.lane.b32.xlu0 %v2954, 64
        %v3080 = vpop.permute.xlu0 %3079
        %v3083 = vsel %vm3053, %v3075, 0
        %v3086 = vsel %vm3053, %v3076, 0
        %v3088 = vsel %vm2810, %v3080, 0
        %3090 = vmatprep.subr.mxu0 0.0
        %3091 = vmatpush1.msra.mxu0 %v3078
        %3092 = vmatprep.subr.mxu0 0.0
        %3093 = vmatpush1.msra.mxu0 %v3088
        %3094 = vmatprep.subr.mxu0 0.0
        %3095 = vmatpush1.msra.mxu0 0.0
        %3096 = vmatprep.subr.mxu0 0.0
        %3097 = vmatpush1.msra.mxu0 0.0
        %3098 = vmatprep.subr.mxu0 0.0
        %3099 = vmatpush1.msra.mxu0 0.0
        %3100 = vmatprep.subr.mxu0 0.0
        %3101 = vmatpush1.msra.mxu0 0.0
        %3102 = vmatprep.subr.mxu0 0.0
        %3103 = vmatpush1.msra.mxu0 0.0
        %3104 = vmatprep.subr.mxu0 0.0
        %3105 = vmatpush1.msra.mxu0 0.0
        %3106 = vmatprep.subr.mxu0 0.0
        %3107 = vmatpush1.msra.mxu0 0.0
        %3108 = vmatprep.subr.mxu0 0.0
        %3109 = vmatpush1.msra.mxu0 0.0
        %3110 = vmatprep.subr.mxu0 0.0
        %3111 = vmatpush1.msra.mxu0 0.0
        %3112 = vmatprep.subr.mxu0 0.0
        %3113 = vmatpush1.msra.mxu0 0.0
        %3114 = vmatprep.subr.mxu0 0.0
        %3115 = vmatpush1.msra.mxu0 0.0
        %3116 = vmatprep.subr.mxu0 0.0
        %3117 = vmatpush1.msra.mxu0 0.0
        %3118 = vmatprep.subr.mxu0 0.0
        %3119 = vmatpush1.msra.mxu0 0.0
        %3120 = vmatprep.subr.mxu0 0.0
        %3121 = vmatpush1.msra.mxu0 0.0
        %3122 = vmatprep.subr.mxu0 0.0
        %3123 = vmatpush1.msra.mxu0 0.0
        %3124 = vmatprep.subr.mxu0 0.0
        %3125 = vmatpush1.msra.mxu0 0.0
        %3126 = vmatprep.subr.mxu0 0.0
        %3127 = vmatpush1.msra.mxu0 0.0
        %3128 = vmatprep.subr.mxu0 0.0
        %3129 = vmatpush1.msra.mxu0 0.0
        %3130 = vmatprep.subr.mxu0 0.0
        %3131 = vmatpush1.msra.mxu0 0.0
        %3132 = vmatprep.subr.mxu0 0.0
        %3133 = vmatpush1.msra.mxu0 0.0
        %3134 = vmatprep.subr.mxu0 0.0
        %3135 = vmatpush1.msra.mxu0 0.0
        %3136 = vmatprep.subr.mxu0 0.0
        %3137 = vmatpush1.msra.mxu0 0.0
        %3138 = vmatprep.subr.mxu0 0.0
        %3139 = vmatpush1.msra.mxu0 0.0
        %3140 = vmatprep.subr.mxu0 0.0
        %3141 = vmatpush1.msra.mxu0 0.0
        %3142 = vmatprep.subr.mxu0 0.0
        %3143 = vmatpush1.msra.mxu0 0.0
        %3144 = vmatprep.subr.mxu0 0.0
        %3145 = vmatpush1.msra.mxu0 0.0
        %3146 = vmatprep.subr.mxu0 0.0
        %3147 = vmatpush1.msra.mxu0 0.0
        %3148 = vmatprep.subr.mxu0 0.0
        %3149 = vmatpush1.msra.mxu0 0.0
        %3150 = vmatprep.subr.mxu0 0.0
        %3151 = vmatpush1.msra.mxu0 0.0
        %3152 = vmatprep.subr.mxu0 0.0
        %3153 = vmatpush1.msra.mxu0 0.0
        %3154 = vmatprep.mubr.f32.mxu0 0.0
        %3155 = vmatmul.mubr.f32.gmra.mrb[0].mxu0 %v3083
        %v3156 = vpop.f32.mrb[0].mxu0
        %v3157 = vadd.f32 0.0, %v3156
        %v3158 = vpop.f32.mrb[0].mxu0
        %3159 = vmatprep.mubr.f32.mxu0 0.0
        %3160 = vmatmul.mubr.f32.gmra.mrb[0].mxu0 %v3086
        %v3161 = vpop.f32.mrb[0].mxu0
        %v3162 = vadd.f32 0.0, %v3161
        %v3163 = vpop.f32.mrb[0].mxu0
        %3164 = vdwg.mxu0
        %3165 = vrot.lane.b32.xlu0 %v2949, 112
        %v3166 = vpop.permute.xlu0 %3165
        %3167 = vrot.lane.b32.xlu0 %v2954, 112
        %v3168 = vpop.permute.xlu0 %3167
        %3169 = vrot.lane.b32.xlu0 %v2949, 80
        %v3170 = vpop.permute.xlu0 %3169
        %3171 = vrot.lane.b32.xlu0 %v2954, 80
        %v3172 = vpop.permute.xlu0 %3171
        %v3173 = vsel %vm2967, %v3166, 0
        %v3175 = vsel %vm2967, %v3168, 0
        %v3177 = vsel %vm2967, %v3170, 0
        %v3179 = vsel %vm2967, %v3172, 0
        %3181 = vmatprep.subr.mxu0 0.0
        %3182 = vmatpush1.xpose.msra.mxu0 %v3177
        %3183 = vmatprep.subr.mxu0 0.0
        %3184 = vmatpush1.xpose.msra.mxu0 %v3179
        %3185 = vmatprep.subr.mxu0 0.0
        %3186 = vmatpush1.xpose.msra.mxu0 0.0
        %3187 = vmatprep.subr.mxu0 0.0
        %3188 = vmatpush1.xpose.msra.mxu0 0.0
        %3189 = vmatprep.subr.mxu0 0.0
        %3190 = vmatpush1.xpose.msra.mxu0 0.0
        %3191 = vmatprep.subr.mxu0 0.0
        %3192 = vmatpush1.xpose.msra.mxu0 0.0
        %3193 = vmatprep.subr.mxu0 0.0
        %3194 = vmatpush1.xpose.msra.mxu0 0.0
        %3195 = vmatprep.subr.mxu0 0.0
        %3196 = vmatpush1.xpose.msra.mxu0 0.0
        %3197 = vmatprep.subr.mxu0 0.0
        %3198 = vmatpush1.xpose.msra.mxu0 0.0
        %3199 = vmatprep.subr.mxu0 0.0
        %3200 = vmatpush1.xpose.msra.mxu0 0.0
        %3201 = vmatprep.subr.mxu0 0.0
        %3202 = vmatpush1.xpose.msra.mxu0 0.0
        %3203 = vmatprep.subr.mxu0 0.0
        %3204 = vmatpush1.xpose.msra.mxu0 0.0
        %3205 = vmatprep.subr.mxu0 0.0
        %3206 = vmatpush1.xpose.msra.mxu0 0.0
        %3207 = vmatprep.subr.mxu0 0.0
        %3208 = vmatpush1.xpose.msra.mxu0 0.0
        %3209 = vmatprep.subr.mxu0 0.0
        %3210 = vmatpush1.xpose.msra.mxu0 0.0
        %3211 = vmatprep.subr.mxu0 0.0
        %3212 = vmatpush1.xpose.msra.mxu0 0.0
        %3213 = vmatprep.subr.mxu0 0.0
        %3214 = vmatpush1.xpose.msra.mxu0 0.0
        %3215 = vmatprep.subr.mxu0 0.0
        %3216 = vmatpush1.xpose.msra.mxu0 0.0
        %3217 = vmatprep.subr.mxu0 0.0
        %3218 = vmatpush1.xpose.msra.mxu0 0.0
        %3219 = vmatprep.subr.mxu0 0.0
        %3220 = vmatpush1.xpose.msra.mxu0 0.0
        %3221 = vmatprep.subr.mxu0 0.0
        %3222 = vmatpush1.xpose.msra.mxu0 0.0
        %3223 = vmatprep.subr.mxu0 0.0
        %3224 = vmatpush1.xpose.msra.mxu0 0.0
        %3225 = vmatprep.subr.mxu0 0.0
        %3226 = vmatpush1.xpose.msra.mxu0 0.0
        %3227 = vmatprep.subr.mxu0 0.0
        %3228 = vmatpush1.xpose.msra.mxu0 0.0
        %3229 = vmatprep.subr.mxu0 0.0
        %3230 = vmatpush1.xpose.msra.mxu0 0.0
        %3231 = vmatprep.subr.mxu0 0.0
        %3232 = vmatpush1.xpose.msra.mxu0 0.0
        %3233 = vmatprep.subr.mxu0 0.0
        %3234 = vmatpush1.xpose.msra.mxu0 0.0
        %3235 = vmatprep.subr.mxu0 0.0
        %3236 = vmatpush1.xpose.msra.mxu0 0.0
        %3237 = vmatprep.subr.mxu0 0.0
        %3238 = vmatpush1.xpose.msra.mxu0 0.0
        %3239 = vmatprep.subr.mxu0 0.0
        %3240 = vmatpush1.xpose.msra.mxu0 0.0
        %3241 = vmatprep.subr.mxu0 0.0
        %3242 = vmatpush1.xpose.msra.mxu0 0.0
        %3243 = vmatprep.subr.mxu0 0.0
        %3244 = vmatpush1.xpose.msra.mxu0 0.0
        %3245 = vmatprep.mubr.f32.mxu0 0.0
        %3246 = vmatmul.mubr.f32.gmra.mrb[0].mxu0 %v3173
        %v3247 = vpop.f32.mrb[0].mxu0
        %v3248 = vadd.f32 0.0, %v3247
        %v3249 = vpop.f32.mrb[0].mxu0
        %3250 = vmatprep.mubr.f32.mxu0 0.0
        %3251 = vmatmul.mubr.f32.gmra.mrb[0].mxu0 %v3175
        %v3252 = vpop.f32.mrb[0].mxu0
        %v3253 = vadd.f32 0.0, %v3252
        %v3254 = vpop.f32.mrb[0].mxu0
        %3255 = vdwg.mxu0
        %v3256 = vmul.f32 %v3248, 0.25
        %v3257 = vmul.f32 %v3253, 0.25
        %v3258 = vsel %vm3053, %v3256, -inf
        %3259 = vmax.xlane.f32.xlu0 %v3258
        %v3260 = vpop.xlane.xlu0 %3259
        %v3261 = vsel %vm3057, %v3257, -inf
        %3262 = vmax.xlane.f32.xlu0 %v3261
        %v3263 = vpop.xlane.xlu0 %3262
        %v3264 = vsub.f32 %v3256, %v3260
        %v3265 = vsub.f32 %v3257, %v3263
        %v3266 = vmul.f32 %v3264, 1.442695
        %v3267 = vpow.pop %v3266
        %v3268 = vmul.f32 %v3265, 1.442695
        %v3269 = vpow.pop %v3268
        %v3270 = vsel %vm3053, %v3267, 0.0
        %3271 = vadd.xlane.f32.xlu0 %v3270
        %v3272 = vpop.xlane.xlu0 %3271
        %v3273 = vsel %vm3057, %v3269, 0.0
        %3274 = vadd.xlane.f32.xlu0 %v3273
        %v3275 = vpop.xlane.xlu0 %3274
        %v3276 = vrcp.pop %v3272
        %v3277 = vrcp.pop %v3275
        %v3278 = vmul.f32 %v3267, %v3276
        %v3279 = vmul.f32 %v3269, %v3277
        %3280 = vrot.lane.b32.xlu0 %v2949, 48
        %v3281 = vpop.permute.xlu0 %3280
        %3282 = vrot.lane.b32.xlu0 %v2954, 48
        %v3283 = vpop.permute.xlu0 %3282
        %v3286 = vsel %vm3053, %v3278, 0
        %v3289 = vsel %vm3053, %v3279, 0
        %v3291 = vsel %vm2810, %v3283, 0
        %3293 = vmatprep.subr.mxu0 0.0
        %3294 = vmatpush1.msra.mxu0 %v3281
        %3295 = vmatprep.subr.mxu0 0.0
        %3296 = vmatpush1.msra.mxu0 %v3291
        %3297 = vmatprep.subr.mxu0 0.0
        %3298 = vmatpush1.msra.mxu0 0.0
        %3299 = vmatprep.subr.mxu0 0.0
        %3300 = vmatpush1.msra.mxu0 0.0
        %3301 = vmatprep.subr.mxu0 0.0
        %3302 = vmatpush1.msra.mxu0 0.0
        %3303 = vmatprep.subr.mxu0 0.0
        %3304 = vmatpush1.msra.mxu0 0.0
        %3305 = vmatprep.subr.mxu0 0.0
        %3306 = vmatpush1.msra.mxu0 0.0
        %3307 = vmatprep.subr.mxu0 0.0
        %3308 = vmatpush1.msra.mxu0 0.0
        %3309 = vmatprep.subr.mxu0 0.0
        %3310 = vmatpush1.msra.mxu0 0.0
        %3311 = vmatprep.subr.mxu0 0.0
        %3312 = vmatpush1.msra.mxu0 0.0
        %3313 = vmatprep.subr.mxu0 0.0
        %3314 = vmatpush1.msra.mxu0 0.0
        %3315 = vmatprep.subr.mxu0 0.0
        %3316 = vmatpush1.msra.mxu0 0.0
        %3317 = vmatprep.subr.mxu0 0.0
        %3318 = vmatpush1.msra.mxu0 0.0
        %3319 = vmatprep.subr.mxu0 0.0
        %3320 = vmatpush1.msra.mxu0 0.0
        %3321 = vmatprep.subr.mxu0 0.0
        %3322 = vmatpush1.msra.mxu0 0.0
        %3323 = vmatprep.subr.mxu0 0.0
        %3324 = vmatpush1.msra.mxu0 0.0
        %3325 = vmatprep.subr.mxu0 0.0
        %3326 = vmatpush1.msra.mxu0 0.0
        %3327 = vmatprep.subr.mxu0 0.0
        %3328 = vmatpush1.msra.mxu0 0.0
        %3329 = vmatprep.subr.mxu0 0.0
        %3330 = vmatpush1.msra.mxu0 0.0
        %3331 = vmatprep.subr.mxu0 0.0
        %3332 = vmatpush1.msra.mxu0 0.0
        %3333 = vmatprep.subr.mxu0 0.0
        %3334 = vmatpush1.msra.mxu0 0.0
        %3335 = vmatprep.subr.mxu0 0.0
        %3336 = vmatpush1.msra.mxu0 0.0
        %3337 = vmatprep.subr.mxu0 0.0
        %3338 = vmatpush1.msra.mxu0 0.0
        %3339 = vmatprep.subr.mxu0 0.0
        %3340 = vmatpush1.msra.mxu0 0.0
        %3341 = vmatprep.subr.mxu0 0.0
        %3342 = vmatpush1.msra.mxu0 0.0
        %3343 = vmatprep.subr.mxu0 0.0
        %3344 = vmatpush1.msra.mxu0 0.0
        %3345 = vmatprep.subr.mxu0 0.0
        %3346 = vmatpush1.msra.mxu0 0.0
        %3347 = vmatprep.subr.mxu0 0.0
        %3348 = vmatpush1.msra.mxu0 0.0
        %3349 = vmatprep.subr.mxu0 0.0
        %3350 = vmatpush1.msra.mxu0 0.0
        %3351 = vmatprep.subr.mxu0 0.0
        %3352 = vmatpush1.msra.mxu0 0.0
        %3353 = vmatprep.subr.mxu0 0.0
        %3354 = vmatpush1.msra.mxu0 0.0
        %3355 = vmatprep.subr.mxu0 0.0
        %3356 = vmatpush1.msra.mxu0 0.0
        %3357 = vmatprep.mubr.f32.mxu0 0.0
        %3358 = vmatmul.mubr.f32.gmra.mrb[0].mxu0 %v3286
        %v3359 = vpop.f32.mrb[0].mxu0
        %v3360 = vadd.f32 0.0, %v3359
        %v3361 = vpop.f32.mrb[0].mxu0
        %3362 = vmatprep.mubr.f32.mxu0 0.0
        %3363 = vmatmul.mubr.f32.gmra.mrb[0].mxu0 %v3289
        %v3364 = vpop.f32.mrb[0].mxu0
        %v3365 = vadd.f32 0.0, %v3364
        %v3366 = vpop.f32.mrb[0].mxu0
        %3367 = vdwg.mxu0
        %v3369 = vsel %vm2967, %v3360, 0
        %v3372 = vsel %vm2967, %v3365, 0
        %3374 = vmatprep.subr.mxu0 0.0
        %3375 = vmatpush1.msra.mxu0 %v2959
        %3376 = vmatprep.subr.mxu0 0.0
        %3377 = vmatpush1.msra.mxu0 %v2960
        %3378 = vmatprep.subr.mxu0 0.0
        %3379 = vmatpush1.msra.mxu0 0.0
        %3380 = vmatprep.subr.mxu0 0.0
        %3381 = vmatpush1.msra.mxu0 0.0
        %3382 = vmatprep.subr.mxu0 0.0
        %3383 = vmatpush1.msra.mxu0 0.0
        %3384 = vmatprep.subr.mxu0 0.0
        %3385 = vmatpush1.msra.mxu0 0.0
        %3386 = vmatprep.subr.mxu0 0.0
        %3387 = vmatpush1.msra.mxu0 0.0
        %3388 = vmatprep.subr.mxu0 0.0
        %3389 = vmatpush1.msra.mxu0 0.0
        %3390 = vmatprep.subr.mxu0 0.0
        %3391 = vmatpush1.msra.mxu0 0.0
        %3392 = vmatprep.subr.mxu0 0.0
        %3393 = vmatpush1.msra.mxu0 0.0
        %3394 = vmatprep.subr.mxu0 0.0
        %3395 = vmatpush1.msra.mxu0 0.0
        %3396 = vmatprep.subr.mxu0 0.0
        %3397 = vmatpush1.msra.mxu0 0.0
        %3398 = vmatprep.subr.mxu0 0.0
        %3399 = vmatpush1.msra.mxu0 0.0
        %3400 = vmatprep.subr.mxu0 0.0
        %3401 = vmatpush1.msra.mxu0 0.0
        %3402 = vmatprep.subr.mxu0 0.0
        %3403 = vmatpush1.msra.mxu0 0.0
        %3404 = vmatprep.subr.mxu0 0.0
        %3405 = vmatpush1.msra.mxu0 0.0
        %3406 = vmatprep.subr.mxu0 0.0
        %3407 = vmatpush1.msra.mxu0 0.0
        %3408 = vmatprep.subr.mxu0 0.0
        %3409 = vmatpush1.msra.mxu0 0.0
        %3410 = vmatprep.subr.mxu0 0.0
        %3411 = vmatpush1.msra.mxu0 0.0
        %3412 = vmatprep.subr.mxu0 0.0
        %3413 = vmatpush1.msra.mxu0 0.0
        %3414 = vmatprep.subr.mxu0 0.0
        %3415 = vmatpush1.msra.mxu0 0.0
        %3416 = vmatprep.subr.mxu0 0.0
        %3417 = vmatpush1.msra.mxu0 0.0
        %3418 = vmatprep.subr.mxu0 0.0
        %3419 = vmatpush1.msra.mxu0 0.0
        %3420 = vmatprep.subr.mxu0 0.0
        %3421 = vmatpush1.msra.mxu0 0.0
        %3422 = vmatprep.subr.mxu0 0.0
        %3423 = vmatpush1.msra.mxu0 0.0
        %3424 = vmatprep.subr.mxu0 0.0
        %3425 = vmatpush1.msra.mxu0 0.0
        %3426 = vmatprep.subr.mxu0 0.0
        %3427 = vmatpush1.msra.mxu0 0.0
        %3428 = vmatprep.subr.mxu0 0.0
        %3429 = vmatpush1.msra.mxu0 0.0
        %3430 = vmatprep.subr.mxu0 0.0
        %3431 = vmatpush1.msra.mxu0 0.0
        %3432 = vmatprep.subr.mxu0 0.0
        %3433 = vmatpush1.msra.mxu0 0.0
        %3434 = vmatprep.subr.mxu0 0.0
        %3435 = vmatpush1.msra.mxu0 0.0
        %3436 = vmatprep.subr.mxu0 0.0
        %3437 = vmatpush1.msra.mxu0 0.0
        %3438 = vmatprep.mubr.f32.mxu0 0.0
        %3439 = vmatmul.mubr.f32.gmra.mrb[0].mxu0 %v3369
        %v3440 = vpop.f32.mrb[0].mxu0
        %v3441 = vadd.f32 0.0, %v3440
        %v3442 = vpop.f32.mrb[0].mxu0
        %3443 = vmatprep.mubr.f32.mxu0 0.0
        %3444 = vmatmul.mubr.f32.gmra.mrb[0].mxu0 %v3372
        %v3445 = vpop.f32.mrb[0].mxu0
        %v3446 = vadd.f32 0.0, %v3445
        %v3447 = vpop.f32.mrb[0].mxu0
        %3448 = vdwg.mxu0
        %v3450 = vsel %vm2967, %v3157, 0
        %v3453 = vsel %vm2967, %v3162, 0
        %3455 = vmatprep.subr.mxu0 0.0
        %3456 = vmatpush1.msra.mxu0 %v2957
        %3457 = vmatprep.subr.mxu0 0.0
        %3458 = vmatpush1.msra.mxu0 %v2958
        %3459 = vmatprep.subr.mxu0 0.0
        %3460 = vmatpush1.msra.mxu0 0.0
        %3461 = vmatprep.subr.mxu0 0.0
        %3462 = vmatpush1.msra.mxu0 0.0
        %3463 = vmatprep.subr.mxu0 0.0
        %3464 = vmatpush1.msra.mxu0 0.0
        %3465 = vmatprep.subr.mxu0 0.0
        %3466 = vmatpush1.msra.mxu0 0.0
        %3467 = vmatprep.subr.mxu0 0.0
        %3468 = vmatpush1.msra.mxu0 0.0
        %3469 = vmatprep.subr.mxu0 0.0
        %3470 = vmatpush1.msra.mxu0 0.0
        %3471 = vmatprep.subr.mxu0 0.0
        %3472 = vmatpush1.msra.mxu0 0.0
        %3473 = vmatprep.subr.mxu0 0.0
        %3474 = vmatpush1.msra.mxu0 0.0
        %3475 = vmatprep.subr.mxu0 0.0
        %3476 = vmatpush1.msra.mxu0 0.0
        %3477 = vmatprep.subr.mxu0 0.0
        %3478 = vmatpush1.msra.mxu0 0.0
        %3479 = vmatprep.subr.mxu0 0.0
        %3480 = vmatpush1.msra.mxu0 0.0
        %3481 = vmatprep.subr.mxu0 0.0
        %3482 = vmatpush1.msra.mxu0 0.0
        %3483 = vmatprep.subr.mxu0 0.0
        %3484 = vmatpush1.msra.mxu0 0.0
        %3485 = vmatprep.subr.mxu0 0.0
        %3486 = vmatpush1.msra.mxu0 0.0
        %3487 = vmatprep.subr.mxu0 0.0
        %3488 = vmatpush1.msra.mxu0 0.0
        %3489 = vmatprep.subr.mxu0 0.0
        %3490 = vmatpush1.msra.mxu0 0.0
        %3491 = vmatprep.subr.mxu0 0.0
        %3492 = vmatpush1.msra.mxu0 0.0
        %3493 = vmatprep.subr.mxu0 0.0
        %3494 = vmatpush1.msra.mxu0 0.0
        %3495 = vmatprep.subr.mxu0 0.0
        %3496 = vmatpush1.msra.mxu0 0.0
        %3497 = vmatprep.subr.mxu0 0.0
        %3498 = vmatpush1.msra.mxu0 0.0
        %3499 = vmatprep.subr.mxu0 0.0
        %3500 = vmatpush1.msra.mxu0 0.0
        %3501 = vmatprep.subr.mxu0 0.0
        %3502 = vmatpush1.msra.mxu0 0.0
        %3503 = vmatprep.subr.mxu0 0.0
        %3504 = vmatpush1.msra.mxu0 0.0
        %3505 = vmatprep.subr.mxu0 0.0
        %3506 = vmatpush1.msra.mxu0 0.0
        %3507 = vmatprep.subr.mxu0 0.0
        %3508 = vmatpush1.msra.mxu0 0.0
        %3509 = vmatprep.subr.mxu0 0.0
        %3510 = vmatpush1.msra.mxu0 0.0
        %3511 = vmatprep.subr.mxu0 0.0
        %3512 = vmatpush1.msra.mxu0 0.0
        %3513 = vmatprep.subr.mxu0 0.0
        %3514 = vmatpush1.msra.mxu0 0.0
        %3515 = vmatprep.subr.mxu0 0.0
        %3516 = vmatpush1.msra.mxu0 0.0
        %3517 = vmatprep.subr.mxu0 0.0
        %3518 = vmatpush1.msra.mxu0 0.0
        %3519 = vmatprep.mubr.f32.mxu0 0.0
        %3520 = vmatmul.mubr.f32.gmra.mrb[0].mxu0 %v3450
        %v3521 = vpop.f32.mrb[0].mxu0
        %v3522 = vadd.f32 %v3441, %v3521
        %v3523 = vpop.f32.mrb[0].mxu0
        %3524 = vmatprep.mubr.f32.mxu0 0.0
        %3525 = vmatmul.mubr.f32.gmra.mrb[0].mxu0 %v3453
        %v3526 = vpop.f32.mrb[0].mxu0
        %v3527 = vadd.f32 %v3446, %v3526
        %v3528 = vpop.f32.mrb[0].mxu0
        %3529 = vdwg.mxu0
        %v3530 = vld [vmem:[%s43] sm:$0x1]
        %v3532 = vlaneseq
        %v3533 = vshrl.u32 %v3532, 7
        %v3534 = vsub.s32 0, %v3533
        %v3535 = vrot.slane %v3530, %v3534
        %v3537 = vadd.f32 %v3522, %v3535
        %v3538 = vadd.f32 %v3527, %v3535
        %v3539 = vadd.f32 %v2817, %v3537
        %v3540 = vadd.f32 %v2818, %v3538
        %v3541 = vld [vmem:[%s45] sm:$0x1]
        %v3542 = vld [vmem:[%s47] sm:$0x1]
        %v3543 = vsel %vm2543, %v3539, 0.0
        %3544 = vadd.xlane.f32.xlu0 %v3543
        %v3545 = vpop.xlane.xlu0 %3544
        %v3546 = vsel %vm2824, %v3540, 0.0
        %3547 = vadd.xlane.f32.xlu0 %v3546
        %v3548 = vpop.xlane.xlu0 %3547
        %v3549 = vmul.f32 %v3545, %v2828
        %v3550 = vmul.f32 %v3548, %v2828
        %v3551 = vsub.f32 %v3539, %v3549
        %v3552 = vsub.f32 %v3540, %v3550
        %v3553 = vmul.f32 %v3551, %v3551
        %v3554 = vmul.f32 %v3552, %v3552
        %v3555 = vsel %vm2543, %v3553, 0.0
        %3556 = vadd.xlane.f32.xlu0 %v3555
        %v3557 = vpop.xlane.xlu0 %3556
        %v3558 = vsel %vm2824, %v3554, 0.0
        %3559 = vadd.xlane.f32.xlu0 %v3558
        %v3560 = vpop.xlane.xlu0 %3559
        %v3561 = vmul.f32 %v3557, %v2828
        %v3562 = vmul.f32 %v3560, %v2828
        %v3563 = vadd.f32 %v3561, 1e-05
        %v3564 = vadd.f32 %v3562, 1e-05
        %v3565 = vrsqrt.pop %v3563
        %v3566 = vrsqrt.pop %v3564
        %v3567 = vmul.f32 %v3551, %v3565
        %v3568 = vmul.f32 %v3552, %v3566
        %v3570 = vlaneseq
        %v3571 = vshrl.u32 %v3570, 7
        %v3572 = vsub.s32 0, %v3571
        %v3573 = vrot.slane %v3541, %v3572
        %v3575 = vmul.f32 %v3567, %v3573
        %v3576 = vmul.f32 %v3568, %v3573
        %v3578 = vlaneseq
        %v3579 = vshrl.u32 %v3578, 7
        %v3580 = vsub.s32 0, %v3579
        %v3581 = vrot.slane %v3542, %v3580
        %v3583 = vadd.f32 %v3575, %v3581
        %v3584 = vadd.f32 %v3576, %v3581
        %v3585 = vld [vmem:[%s49] sm:$0xff]
        %v3586 = vld [vmem:[%s49 + $0x8] sm:$0xff]
        %v3587 = vld [vmem:[%s49 + $0x10] sm:$0xff]
        %v3588 = vld [vmem:[%s49 + $0x18] sm:$0xff]
        %v3589 = vld [vmem:[%s51] sm:$0x1]
        %v3591 = vlaneseq
        %v3592 = vshrl.u32 %v3591, 7
        %v3593 = vsub.s32 0, %v3592
        %v3594 = vrot.slane %v3589, %v3593
        %v3597 = vsel %vm2543, %v3583, 0
        %v3600 = vsel %vm2543, %v3584, 0
        %3602 = vmatprep.subr.mxu0 0.0
        %3603 = vmatpush1.msra.mxu0 %v3585
        %3604 = vmatprep.subr.mxu0 0.0
        %3605 = vmatpush1.msra.mxu0 %v3586
        %3606 = vmatprep.subr.mxu0 0.0
        %3607 = vmatpush1.msra.mxu0 %v3587
        %3608 = vmatprep.subr.mxu0 0.0
        %3609 = vmatpush1.msra.mxu0 %v3588
        %3610 = vmatprep.subr.mxu0 0.0
        %3611 = vmatpush1.msra.mxu0 0.0
        %3612 = vmatprep.subr.mxu0 0.0
        %3613 = vmatpush1.msra.mxu0 0.0
        %3614 = vmatprep.subr.mxu0 0.0
        %3615 = vmatpush1.msra.mxu0 0.0
        %3616 = vmatprep.subr.mxu0 0.0
        %3617 = vmatpush1.msra.mxu0 0.0
        %3618 = vmatprep.subr.mxu0 0.0
        %3619 = vmatpush1.msra.mxu0 0.0
        %3620 = vmatprep.subr.mxu0 0.0
        %3621 = vmatpush1.msra.mxu0 0.0
        %3622 = vmatprep.subr.mxu0 0.0
        %3623 = vmatpush1.msra.mxu0 0.0
        %3624 = vmatprep.subr.mxu0 0.0
        %3625 = vmatpush1.msra.mxu0 0.0
        %3626 = vmatprep.subr.mxu0 0.0
        %3627 = vmatpush1.msra.mxu0 0.0
        %3628 = vmatprep.subr.mxu0 0.0
        %3629 = vmatpush1.msra.mxu0 0.0
        %3630 = vmatprep.subr.mxu0 0.0
        %3631 = vmatpush1.msra.mxu0 0.0
        %3632 = vmatprep.subr.mxu0 0.0
        %3633 = vmatpush1.msra.mxu0 0.0
        %3634 = vmatprep.subr.mxu0 0.0
        %3635 = vmatpush1.msra.mxu0 0.0
        %3636 = vmatprep.subr.mxu0 0.0
        %3637 = vmatpush1.msra.mxu0 0.0
        %3638 = vmatprep.subr.mxu0 0.0
        %3639 = vmatpush1.msra.mxu0 0.0
        %3640 = vmatprep.subr.mxu0 0.0
        %3641 = vmatpush1.msra.mxu0 0.0
        %3642 = vmatprep.subr.mxu0 0.0
        %3643 = vmatpush1.msra.mxu0 0.0
        %3644 = vmatprep.subr.mxu0 0.0
        %3645 = vmatpush1.msra.mxu0 0.0
        %3646 = vmatprep.subr.mxu0 0.0
        %3647 = vmatpush1.msra.mxu0 0.0
        %3648 = vmatprep.subr.mxu0 0.0
        %3649 = vmatpush1.msra.mxu0 0.0
        %3650 = vmatprep.subr.mxu0 0.0
        %3651 = vmatpush1.msra.mxu0 0.0
        %3652 = vmatprep.subr.mxu0 0.0
        %3653 = vmatpush1.msra.mxu0 0.0
        %3654 = vmatprep.subr.mxu0 0.0
        %3655 = vmatpush1.msra.mxu0 0.0
        %3656 = vmatprep.subr.mxu0 0.0
        %3657 = vmatpush1.msra.mxu0 0.0
        %3658 = vmatprep.subr.mxu0 0.0
        %3659 = vmatpush1.msra.mxu0 0.0
        %3660 = vmatprep.subr.mxu0 0.0
        %3661 = vmatpush1.msra.mxu0 0.0
        %3662 = vmatprep.subr.mxu0 0.0
        %3663 = vmatpush1.msra.mxu0 0.0
        %3664 = vmatprep.subr.mxu0 0.0
        %3665 = vmatpush1.msra.mxu0 0.0
        %3666 = vmatprep.mubr.f32.mxu0 0.0
        %3667 = vmatmul.mubr.f32.gmra.mrb[0].mxu0 %v3597
        %v3668 = vpop.f32.mrb[0].mxu0
        %v3669 = vadd.f32 %v3594, %v3668
        %v3670 = vpop.f32.mrb[0].mxu0
        %3671 = vmatprep.mubr.f32.mxu0 0.0
        %3672 = vmatmul.mubr.f32.gmra.mrb[0].mxu0 %v3600
        %v3673 = vpop.f32.mrb[0].mxu0
        %v3674 = vadd.f32 %v3594, %v3673
        %v3675 = vpop.f32.mrb[0].mxu0
        %3676 = vdwg.mxu0
        %v3677 = vmul.f32 %v3669, 0.5
        %v3678 = vmul.f32 %v3674, 0.5
        %v3679 = vmul.f32 %v3669, 0.044715
        %v3680 = vmul.f32 %v3674, 0.044715
        %v3681 = vmul.f32 %v3679, %v3669
        %v3682 = vmul.f32 %v3680, %v3674
        %v3683 = vmul.f32 %v3681, %v3669
        %v3684 = vmul.f32 %v3682, %v3674
        %v3685 = vadd.f32 %v3669, %v3683
        %v3686 = vadd.f32 %v3674, %v3684
        %v3687 = vmul.f32 %v3685, 0.7978846
        %v3688 = vmul.f32 %v3686, 0.7978846
        %v3689 = vtanh.pop %v3687
        %v3690 = vtanh.pop %v3688
        %v3691 = vadd.f32 %v3689, 1.0
        %v3692 = vadd.f32 %v3690, 1.0
        %v3693 = vmul.f32 %v3677, %v3691
        %v3694 = vmul.f32 %v3678, %v3692
        %v3695 = vld [vmem:[%s53] sm:$0xff]
        %v3696 = vld [vmem:[%s53 + $0x8] sm:$0xff]
        %v3697 = vld [vmem:[%s53 + $0x10] sm:$0xff]
        %v3698 = vld [vmem:[%s53 + $0x18] sm:$0xff]
        %v3699 = vld [vmem:[%s53 + $0x20] sm:$0xff]
        %v3700 = vld [vmem:[%s53 + $0x28] sm:$0xff]
        %v3701 = vld [vmem:[%s53 + $0x30] sm:$0xff]
        %v3702 = vld [vmem:[%s53 + $0x38] sm:$0xff]
        %v3703 = vld [vmem:[%s53 + $0x40] sm:$0xff]
        %v3704 = vld [vmem:[%s53 + $0x48] sm:$0xff]
        %v3705 = vld [vmem:[%s53 + $0x50] sm:$0xff]
        %v3706 = vld [vmem:[%s53 + $0x58] sm:$0xff]
        %v3707 = vld [vmem:[%s53 + $0x60] sm:$0xff]
        %v3708 = vld [vmem:[%s53 + $0x68] sm:$0xff]
        %v3709 = vld [vmem:[%s53 + $0x70] sm:$0xff]
        %v3710 = vld [vmem:[%s53 + $0x78] sm:$0xff]
        %v3711 = vld [vmem:[%s55] sm:$0x1]
        %v3713 = vlaneseq
        %v3714 = vshrl.u32 %v3713, 7
        %v3715 = vsub.s32 0, %v3714
        %v3716 = vrot.slane %v3711, %v3715
        %3718 = vmatprep.subr.mxu0 0.0
        %3719 = vmatpush1.msra.mxu0 %v3695
        %3720 = vmatprep.subr.mxu0 0.0
        %3721 = vmatpush1.msra.mxu0 %v3696
        %3722 = vmatprep.subr.mxu0 0.0
        %3723 = vmatpush1.msra.mxu0 %v3697
        %3724 = vmatprep.subr.mxu0 0.0
        %3725 = vmatpush1.msra.mxu0 %v3698
        %3726 = vmatprep.subr.mxu0 0.0
        %3727 = vmatpush1.msra.mxu0 %v3699
        %3728 = vmatprep.subr.mxu0 0.0
        %3729 = vmatpush1.msra.mxu0 %v3700
        %3730 = vmatprep.subr.mxu0 0.0
        %3731 = vmatpush1.msra.mxu0 %v3701
        %3732 = vmatprep.subr.mxu0 0.0
        %3733 = vmatpush1.msra.mxu0 %v3702
        %3734 = vmatprep.subr.mxu0 0.0
        %3735 = vmatpush1.msra.mxu0 %v3703
        %3736 = vmatprep.subr.mxu0 0.0
        %3737 = vmatpush1.msra.mxu0 %v3704
        %3738 = vmatprep.subr.mxu0 0.0
        %3739 = vmatpush1.msra.mxu0 %v3705
        %3740 = vmatprep.subr.mxu0 0.0
        %3741 = vmatpush1.msra.mxu0 %v3706
        %3742 = vmatprep.subr.mxu0 0.0
        %3743 = vmatpush1.msra.mxu0 %v3707
        %3744 = vmatprep.subr.mxu0 0.0
        %3745 = vmatpush1.msra.mxu0 %v3708
        %3746 = vmatprep.subr.mxu0 0.0
        %3747 = vmatpush1.msra.mxu0 %v3709
        %3748 = vmatprep.subr.mxu0 0.0
        %3749 = vmatpush1.msra.mxu0 %v3710
        %3750 = vmatprep.subr.mxu0 0.0
        %3751 = vmatpush1.msra.mxu0 0.0
        %3752 = vmatprep.subr.mxu0 0.0
        %3753 = vmatpush1.msra.mxu0 0.0
        %3754 = vmatprep.subr.mxu0 0.0
        %3755 = vmatpush1.msra.mxu0 0.0
        %3756 = vmatprep.subr.mxu0 0.0
        %3757 = vmatpush1.msra.mxu0 0.0
        %3758 = vmatprep.subr.mxu0 0.0
        %3759 = vmatpush1.msra.mxu0 0.0
        %3760 = vmatprep.subr.mxu0 0.0
        %3761 = vmatpush1.msra.mxu0 0.0
        %3762 = vmatprep.subr.mxu0 0.0
        %3763 = vmatpush1.msra.mxu0 0.0
        %3764 = vmatprep.subr.mxu0 0.0
        %3765 = vmatpush1.msra.mxu0 0.0
        %3766 = vmatprep.subr.mxu0 0.0
        %3767 = vmatpush1.msra.mxu0 0.0
        %3768 = vmatprep.subr.mxu0 0.0
        %3769 = vmatpush1.msra.mxu0 0.0
        %3770 = vmatprep.subr.mxu0 0.0
        %3771 = vmatpush1.msra.mxu0 0.0
        %3772 = vmatprep.subr.mxu0 0.0
        %3773 = vmatpush1.msra.mxu0 0.0
        %3774 = vmatprep.subr.mxu0 0.0
        %3775 = vmatpush1.msra.mxu0 0.0
        %3776 = vmatprep.subr.mxu0 0.0
        %3777 = vmatpush1.msra.mxu0 0.0
        %3778 = vmatprep.subr.mxu0 0.0
        %3779 = vmatpush1.msra.mxu0 0.0
        %3780 = vmatprep.subr.mxu0 0.0
        %3781 = vmatpush1.msra.mxu0 0.0
        %3782 = vmatprep.mubr.f32.mxu0 0.0
        %3783 = vmatmul.mubr.f32.gmra.mrb[0].mxu0 %v3693
        %v3784 = vpop.f32.mrb[0].mxu0
        %v3785 = vadd.f32 %v3716, %v3784
        %v3786 = vpop.f32.mrb[0].mxu0
        %3787 = vmatprep.mubr.f32.mxu0 0.0
        %3788 = vmatmul.mubr.f32.gmra.mrb[0].mxu0 %v3694
        %v3789 = vpop.f32.mrb[0].mxu0
        %v3790 = vadd.f32 %v3716, %v3789
        %v3791 = vpop.f32.mrb[0].mxu0
        %3792 = vdwg.mxu0
        %v3793 = vadd.f32 %v3539, %v3785
        %v3794 = vadd.f32 %v3540, %v3790
        %v3795 = vadd.f32 %v3793, %v2816
        %v3796 = vadd.f32 %v3794, %v2814
        %s3797 = scalar_lea.vmem %s33, 1
        %v3798 = vld [vmem:[%s3797] sm:$0x1]
        %s3799 = scalar_lea.vmem %s35, 1
        %v3800 = vld [vmem:[%s3799] sm:$0x1]
        %v3801 = vsel %vm2543, %v3795, 0.0
        %3802 = vadd.xlane.f32.xlu0 %v3801
        %v3803 = vpop.xlane.xlu0 %3802
        %v3804 = vsel %vm2824, %v3796, 0.0
        %3805 = vadd.xlane.f32.xlu0 %v3804
        %v3806 = vpop.xlane.xlu0 %3805
        %v3807 = vmul.f32 %v3803, %v2828
        %v3808 = vmul.f32 %v3806, %v2828
        %v3809 = vsub.f32 %v3795, %v3807
        %v3810 = vsub.f32 %v3796, %v3808
        %v3811 = vmul.f32 %v3809, %v3809
        %v3812 = vmul.f32 %v3810, %v3810
        %v3813 = vsel %vm2543, %v3811, 0.0
        %3814 = vadd.xlane.f32.xlu0 %v3813
        %v3815 = vpop.xlane.xlu0 %3814
        %v3816 = vsel %vm2824, %v3812, 0.0
        %3817 = vadd.xlane.f32.xlu0 %v3816
        %v3818 = vpop.xlane.xlu0 %3817
        %v3819 = vmul.f32 %v3815, %v2828
        %v3820 = vmul.f32 %v3818, %v2828
        %v3821 = vadd.f32 %v3819, 1e-05
        %v3822 = vadd.f32 %v3820, 1e-05
        %v3823 = vrsqrt.pop %v3821
        %v3824 = vrsqrt.pop %v3822
        %v3825 = vmul.f32 %v3809, %v3823
        %v3826 = vmul.f32 %v3810, %v3824
        %v3828 = vlaneseq
        %v3829 = vshrl.u32 %v3828, 7
        %v3830 = vsub.s32 0, %v3829
        %v3831 = vrot.slane %v3798, %v3830
        %v3833 = vmul.f32 %v3825, %v3831
        %v3834 = vmul.f32 %v3826, %v3831
        %v3836 = vlaneseq
        %v3837 = vshrl.u32 %v3836, 7
        %v3838 = vsub.s32 0, %v3837
        %v3839 = vrot.slane %v3800, %v3838
        %v3841 = vadd.f32 %v3833, %v3839
        %v3842 = vadd.f32 %v3834, %v3839
        %s3843 = scalar_lea.vmem %s37, 32
        %v3844 = vld [vmem:[%s3843] sm:$0xff]
        %v3845 = vld [vmem:[%s3843 + $0x8] sm:$0xff]
        %v3846 = vld [vmem:[%s3843 + $0x10] sm:$0xff]
        %v3847 = vld [vmem:[%s3843 + $0x18] sm:$0xff]
        %s3848 = scalar_lea.vmem %s39, 1
        %v3849 = vld [vmem:[%s3848] sm:$0x1]
        %v3851 = vlaneseq
        %v3852 = vshrl.u32 %v3851, 7
        %v3853 = vsub.s32 0, %v3852
        %v3854 = vrot.slane %v3849, %v3853
        %v3857 = vsel %vm2543, %v3841, 0
        %v3860 = vsel %vm2543, %v3842, 0
        %3862 = vmatprep.subr.mxu0 0.0
        %3863 = vmatpush1.msra.mxu0 %v3844
        %3864 = vmatprep.subr.mxu0 0.0
        %3865 = vmatpush1.msra.mxu0 %v3845
        %3866 = vmatprep.subr.mxu0 0.0
        %3867 = vmatpush1.msra.mxu0 %v3846
        %3868 = vmatprep.subr.mxu0 0.0
        %3869 = vmatpush1.msra.mxu0 %v3847
        %3870 = vmatprep.subr.mxu0 0.0
        %3871 = vmatpush1.msra.mxu0 0.0
        %3872 = vmatprep.subr.mxu0 0.0
        %3873 = vmatpush1.msra.mxu0 0.0
        %3874 = vmatprep.subr.mxu0 0.0
        %3875 = vmatpush1.msra.mxu0 0.0
        %3876 = vmatprep.subr.mxu0 0.0
        %3877 = vmatpush1.msra.mxu0 0.0
        %3878 = vmatprep.subr.mxu0 0.0
        %3879 = vmatpush1.msra.mxu0 0.0
        %3880 = vmatprep.subr.mxu0 0.0
        %3881 = vmatpush1.msra.mxu0 0.0
        %3882 = vmatprep.subr.mxu0 0.0
        %3883 = vmatpush1.msra.mxu0 0.0
        %3884 = vmatprep.subr.mxu0 0.0
        %3885 = vmatpush1.msra.mxu0 0.0
        %3886 = vmatprep.subr.mxu0 0.0
        %3887 = vmatpush1.msra.mxu0 0.0
        %3888 = vmatprep.subr.mxu0 0.0
        %3889 = vmatpush1.msra.mxu0 0.0
        %3890 = vmatprep.subr.mxu0 0.0
        %3891 = vmatpush1.msra.mxu0 0.0
        %3892 = vmatprep.subr.mxu0 0.0
        %3893 = vmatpush1.msra.mxu0 0.0
        %3894 = vmatprep.subr.mxu0 0.0
        %3895 = vmatpush1.msra.mxu0 0.0
        %3896 = vmatprep.subr.mxu0 0.0
        %3897 = vmatpush1.msra.mxu0 0.0
        %3898 = vmatprep.subr.mxu0 0.0
        %3899 = vmatpush1.msra.mxu0 0.0
        %3900 = vmatprep.subr.mxu0 0.0
        %3901 = vmatpush1.msra.mxu0 0.0
        %3902 = vmatprep.subr.mxu0 0.0
        %3903 = vmatpush1.msra.mxu0 0.0
        %3904 = vmatprep.subr.mxu0 0.0
        %3905 = vmatpush1.msra.mxu0 0.0
        %3906 = vmatprep.subr.mxu0 0.0
        %3907 = vmatpush1.msra.mxu0 0.0
        %3908 = vmatprep.subr.mxu0 0.0
        %3909 = vmatpush1.msra.mxu0 0.0
        %3910 = vmatprep.subr.mxu0 0.0
        %3911 = vmatpush1.msra.mxu0 0.0
        %3912 = vmatprep.subr.mxu0 0.0
        %3913 = vmatpush1.msra.mxu0 0.0
        %3914 = vmatprep.subr.mxu0 0.0
        %3915 = vmatpush1.msra.mxu0 0.0
        %3916 = vmatprep.subr.mxu0 0.0
        %3917 = vmatpush1.msra.mxu0 0.0
        %3918 = vmatprep.subr.mxu0 0.0
        %3919 = vmatpush1.msra.mxu0 0.0
        %3920 = vmatprep.subr.mxu0 0.0
        %3921 = vmatpush1.msra.mxu0 0.0
        %3922 = vmatprep.subr.mxu0 0.0
        %3923 = vmatpush1.msra.mxu0 0.0
        %3924 = vmatprep.subr.mxu0 0.0
        %3925 = vmatpush1.msra.mxu0 0.0
        %3926 = vmatprep.mubr.f32.mxu0 0.0
        %3927 = vmatmul.mubr.f32.gmra.mrb[0].mxu0 %v3857
        %v3928 = vpop.f32.mrb[0].mxu0
        %v3929 = vadd.f32 %v3854, %v3928
        %v3930 = vpop.f32.mrb[0].mxu0
        %3931 = vmatprep.mubr.f32.mxu0 0.0
        %3932 = vmatmul.mubr.f32.gmra.mrb[0].mxu0 %v3860
        %v3933 = vpop.f32.mrb[0].mxu0
        %v3934 = vadd.f32 %v3854, %v3933
        %v3935 = vpop.f32.mrb[0].mxu0
        %3936 = vdwg.mxu0
        %s3937 = scalar_lea.vmem %s41, 32
        %v3938 = vld [vmem:[%s3937] sm:$0xff]
        %v3939 = vld [vmem:[%s3937 + $0x8] sm:$0xff]
        %v3940 = vld [vmem:[%s3937 + $0x10] sm:$0xff]
        %v3941 = vld [vmem:[%s3937 + $0x18] sm:$0xff]
        %3944 = vrot.lane.b32.xlu0 %v3929, 96
        %v3945 = vpop.permute.xlu0 %3944
        %3946 = vrot.lane.b32.xlu0 %v3934, 96
        %v3947 = vpop.permute.xlu0 %3946
        %v3948 = vsel %vm2967, %v3929, 0
        %v3950 = vsel %vm2967, %v3934, 0
        %v3952 = vsel %vm2967, %v3945, 0
        %v3954 = vsel %vm2967, %v3947, 0
        %3956 = vmatprep.subr.mxu0 0.0
        %3957 = vmatpush1.xpose.msra.mxu0 %v3952
        %3958 = vmatprep.subr.mxu0 0.0
        %3959 = vmatpush1.xpose.msra.mxu0 %v3954
        %3960 = vmatprep.subr.mxu0 0.0
        %3961 = vmatpush1.xpose.msra.mxu0 0.0
        %3962 = vmatprep.subr.mxu0 0.0
        %3963 = vmatpush1.xpose.msra.mxu0 0.0
        %3964 = vmatprep.subr.mxu0 0.0
        %3965 = vmatpush1.xpose.msra.mxu0 0.0
        %3966 = vmatprep.subr.mxu0 0.0
        %3967 = vmatpush1.xpose.msra.mxu0 0.0
        %3968 = vmatprep.subr.mxu0 0.0
        %3969 = vmatpush1.xpose.msra.mxu0 0.0
        %3970 = vmatprep.subr.mxu0 0.0
        %3971 = vmatpush1.xpose.msra.mxu0 0.0
        %3972 = vmatprep.subr.mxu0 0.0
        %3973 = vmatpush1.xpose.msra.mxu0 0.0
        %3974 = vmatprep.subr.mxu0 0.0
        %3975 = vmatpush1.xpose.msra.mxu0 0.0
        %3976 = vmatprep.subr.mxu0 0.0
        %3977 = vmatpush1.xpose.msra.mxu0 0.0
        %3978 = vmatprep.subr.mxu0 0.0
        %3979 = vmatpush1.xpose.msra.mxu0 0.0
        %3980 = vmatprep.subr.mxu0 0.0
        %3981 = vmatpush1.xpose.msra.mxu0 0.0
        %3982 = vmatprep.subr.mxu0 0.0
        %3983 = vmatpush1.xpose.msra.mxu0 0.0
        %3984 = vmatprep.subr.mxu0 0.0
        %3985 = vmatpush1.xpose.msra.mxu0 0.0
        %3986 = vmatprep.subr.mxu0 0.0
        %3987 = vmatpush1.xpose.msra.mxu0 0.0
        %3988 = vmatprep.subr.mxu0 0.0
        %3989 = vmatpush1.xpose.msra.mxu0 0.0
        %3990 = vmatprep.subr.mxu0 0.0
        %3991 = vmatpush1.xpose.msra.mxu0 0.0
        %3992 = vmatprep.subr.mxu0 0.0
        %3993 = vmatpush1.xpose.msra.mxu0 0.0
        %3994 = vmatprep.subr.mxu0 0.0
        %3995 = vmatpush1.xpose.msra.mxu0 0.0
        %3996 = vmatprep.subr.mxu0 0.0
        %3997 = vmatpush1.xpose.msra.mxu0 0.0
        %3998 = vmatprep.subr.mxu0 0.0
        %3999 = vmatpush1.xpose.msra.mxu0 0.0
        %4000 = vmatprep.subr.mxu0 0.0
        %4001 = vmatpush1.xpose.msra.mxu0 0.0
        %4002 = vmatprep.subr.mxu0 0.0
        %4003 = vmatpush1.xpose.msra.mxu0 0.0
        %4004 = vmatprep.subr.mxu0 0.0
        %4005 = vmatpush1.xpose.msra.mxu0 0.0
        %4006 = vmatprep.subr.mxu0 0.0
        %4007 = vmatpush1.xpose.msra.mxu0 0.0
        %4008 = vmatprep.subr.mxu0 0.0
        %4009 = vmatpush1.xpose.msra.mxu0 0.0
        %4010 = vmatprep.subr.mxu0 0.0
        %4011 = vmatpush1.xpose.msra.mxu0 0.0
        %4012 = vmatprep.subr.mxu0 0.0
        %4013 = vmatpush1.xpose.msra.mxu0 0.0
        %4014 = vmatprep.subr.mxu0 0.0
        %4015 = vmatpush1.xpose.msra.mxu0 0.0
        %4016 = vmatprep.subr.mxu0 0.0
        %4017 = vmatpush1.xpose.msra.mxu0 0.0
        %4018 = vmatprep.subr.mxu0 0.0
        %4019 = vmatpush1.xpose.msra.mxu0 0.0
        %4020 = vmatprep.mubr.f32.mxu0 0.0
        %4021 = vmatmul.mubr.f32.gmra.mrb[0].mxu0 %v3948
        %v4022 = vpop.f32.mrb[0].mxu0
        %v4023 = vadd.f32 0.0, %v4022
        %v4024 = vpop.f32.mrb[0].mxu0
        %4025 = vmatprep.mubr.f32.mxu0 0.0
        %4026 = vmatmul.mubr.f32.gmra.mrb[0].mxu0 %v3950
        %v4027 = vpop.f32.mrb[0].mxu0
        %v4028 = vadd.f32 0.0, %v4027
        %v4029 = vpop.f32.mrb[0].mxu0
        %4030 = vdwg.mxu0
        %v4031 = vmul.f32 %v4023, 0.25
        %v4032 = vmul.f32 %v4028, 0.25
        %v4033 = vsel %vm3053, %v4031, -inf
        %4034 = vmax.xlane.f32.xlu0 %v4033
        %v4035 = vpop.xlane.xlu0 %4034
        %v4036 = vsel %vm3057, %v4032, -inf
        %4037 = vmax.xlane.f32.xlu0 %v4036
        %v4038 = vpop.xlane.xlu0 %4037
        %v4039 = vsub.f32 %v4031, %v4035
        %v4040 = vsub.f32 %v4032, %v4038
        %v4041 = vmul.f32 %v4039, 1.442695
        %v4042 = vpow.pop %v4041
        %v4043 = vmul.f32 %v4040, 1.442695
        %v4044 = vpow.pop %v4043
        %v4045 = vsel %vm3053, %v4042, 0.0
        %4046 = vadd.xlane.f32.xlu0 %v4045
        %v4047 = vpop.xlane.xlu0 %4046
        %v4048 = vsel %vm3057, %v4044, 0.0
        %4049 = vadd.xlane.f32.xlu0 %v4048
        %v4050 = vpop.xlane.xlu0 %4049
        %v4051 = vrcp.pop %v4047
        %v4052 = vrcp.pop %v4050
        %v4053 = vmul.f32 %v4042, %v4051
        %v4054 = vmul.f32 %v4044, %v4052
        %4055 = vrot.lane.b32.xlu0 %v3929, 64
        %v4056 = vpop.permute.xlu0 %4055
        %4057 = vrot.lane.b32.xlu0 %v3934, 64
        %v4058 = vpop.permute.xlu0 %4057
        %v4061 = vsel %vm3053, %v4053, 0
        %v4064 = vsel %vm3053, %v4054, 0
        %v4066 = vsel %vm2810, %v4058, 0
        %4068 = vmatprep.subr.mxu0 0.0
        %4069 = vmatpush1.msra.mxu0 %v4056
        %4070 = vmatprep.subr.mxu0 0.0
        %4071 = vmatpush1.msra.mxu0 %v4066
        %4072 = vmatprep.subr.mxu0 0.0
        %4073 = vmatpush1.msra.mxu0 0.0
        %4074 = vmatprep.subr.mxu0 0.0
        %4075 = vmatpush1.msra.mxu0 0.0
        %4076 = vmatprep.subr.mxu0 0.0
        %4077 = vmatpush1.msra.mxu0 0.0
        %4078 = vmatprep.subr.mxu0 0.0
        %4079 = vmatpush1.msra.mxu0 0.0
        %4080 = vmatprep.subr.mxu0 0.0
        %4081 = vmatpush1.msra.mxu0 0.0
        %4082 = vmatprep.subr.mxu0 0.0
        %4083 = vmatpush1.msra.mxu0 0.0
        %4084 = vmatprep.subr.mxu0 0.0
        %4085 = vmatpush1.msra.mxu0 0.0
        %4086 = vmatprep.subr.mxu0 0.0
        %4087 = vmatpush1.msra.mxu0 0.0
        %4088 = vmatprep.subr.mxu0 0.0
        %4089 = vmatpush1.msra.mxu0 0.0
        %4090 = vmatprep.subr.mxu0 0.0
        %4091 = vmatpush1.msra.mxu0 0.0
        %4092 = vmatprep.subr.mxu0 0.0
        %4093 = vmatpush1.msra.mxu0 0.0
        %4094 = vmatprep.subr.mxu0 0.0
        %4095 = vmatpush1.msra.mxu0 0.0
        %4096 = vmatprep.subr.mxu0 0.0
        %4097 = vmatpush1.msra.mxu0 0.0
        %4098 = vmatprep.subr.mxu0 0.0
        %4099 = vmatpush1.msra.mxu0 0.0
        %4100 = vmatprep.subr.mxu0 0.0
        %4101 = vmatpush1.msra.mxu0 0.0
        %4102 = vmatprep.subr.mxu0 0.0
        %4103 = vmatpush1.msra.mxu0 0.0
        %4104 = vmatprep.subr.mxu0 0.0
        %4105 = vmatpush1.msra.mxu0 0.0
        %4106 = vmatprep.subr.mxu0 0.0
        %4107 = vmatpush1.msra.mxu0 0.0
        %4108 = vmatprep.subr.mxu0 0.0
        %4109 = vmatpush1.msra.mxu0 0.0
        %4110 = vmatprep.subr.mxu0 0.0
        %4111 = vmatpush1.msra.mxu0 0.0
        %4112 = vmatprep.subr.mxu0 0.0
        %4113 = vmatpush1.msra.mxu0 0.0
        %4114 = vmatprep.subr.mxu0 0.0
        %4115 = vmatpush1.msra.mxu0 0.0
        %4116 = vmatprep.subr.mxu0 0.0
        %4117 = vmatpush1.msra.mxu0 0.0
        %4118 = vmatprep.subr.mxu0 0.0
        %4119 = vmatpush1.msra.mxu0 0.0
        %4120 = vmatprep.subr.mxu0 0.0
        %4121 = vmatpush1.msra.mxu0 0.0
        %4122 = vmatprep.subr.mxu0 0.0
        %4123 = vmatpush1.msra.mxu0 0.0
        %4124 = vmatprep.subr.mxu0 0.0
        %4125 = vmatpush1.msra.mxu0 0.0
        %4126 = vmatprep.subr.mxu0 0.0
        %4127 = vmatpush1.msra.mxu0 0.0
        %4128 = vmatprep.subr.mxu0 0.0
        %4129 = vmatpush1.msra.mxu0 0.0
        %4130 = vmatprep.subr.mxu0 0.0
        %4131 = vmatpush1.msra.mxu0 0.0
        %4132 = vmatprep.mubr.f32.mxu0 0.0
        %4133 = vmatmul.mubr.f32.gmra.mrb[0].mxu0 %v4061
        %v4134 = vpop.f32.mrb[0].mxu0
        %v4135 = vadd.f32 0.0, %v4134
        %v4136 = vpop.f32.mrb[0].mxu0
        %4137 = vmatprep.mubr.f32.mxu0 0.0
        %4138 = vmatmul.mubr.f32.gmra.mrb[0].mxu0 %v4064
        %v4139 = vpop.f32.mrb[0].mxu0
        %v4140 = vadd.f32 0.0, %v4139
        %v4141 = vpop.f32.mrb[0].mxu0
        %4142 = vdwg.mxu0
        %4143 = vrot.lane.b32.xlu0 %v3929, 112
        %v4144 = vpop.permute.xlu0 %4143
        %4145 = vrot.lane.b32.xlu0 %v3934, 112
        %v4146 = vpop.permute.xlu0 %4145
        %4147 = vrot.lane.b32.xlu0 %v3929, 80
        %v4148 = vpop.permute.xlu0 %4147
        %4149 = vrot.lane.b32.xlu0 %v3934, 80
        %v4150 = vpop.permute.xlu0 %4149
        %v4151 = vsel %vm2967, %v4144, 0
        %v4153 = vsel %vm2967, %v4146, 0
        %v4155 = vsel %vm2967, %v4148, 0
        %v4157 = vsel %vm2967, %v4150, 0
        %4159 = vmatprep.subr.mxu0 0.0
        %4160 = vmatpush1.xpose.msra.mxu0 %v4155
        %4161 = vmatprep.subr.mxu0 0.0
        %4162 = vmatpush1.xpose.msra.mxu0 %v4157
        %4163 = vmatprep.subr.mxu0 0.0
        %4164 = vmatpush1.xpose.msra.mxu0 0.0
        %4165 = vmatprep.subr.mxu0 0.0
        %4166 = vmatpush1.xpose.msra.mxu0 0.0
        %4167 = vmatprep.subr.mxu0 0.0
        %4168 = vmatpush1.xpose.msra.mxu0 0.0
        %4169 = vmatprep.subr.mxu0 0.0
        %4170 = vmatpush1.xpose.msra.mxu0 0.0
        %4171 = vmatprep.subr.mxu0 0.0
        %4172 = vmatpush1.xpose.msra.mxu0 0.0
        %4173 = vmatprep.subr.mxu0 0.0
        %4174 = vmatpush1.xpose.msra.mxu0 0.0
        %4175 = vmatprep.subr.mxu0 0.0
        %4176 = vmatpush1.xpose.msra.mxu0 0.0
        %4177 = vmatprep.subr.mxu0 0.0
        %4178 = vmatpush1.xpose.msra.mxu0 0.0
        %4179 = vmatprep.subr.mxu0 0.0
        %4180 = vmatpush1.xpose.msra.mxu0 0.0
        %4181 = vmatprep.subr.mxu0 0.0
        %4182 = vmatpush1.xpose.msra.mxu0 0.0
        %4183 = vmatprep.subr.mxu0 0.0
        %4184 = vmatpush1.xpose.msra.mxu0 0.0
        %4185 = vmatprep.subr.mxu0 0.0
        %4186 = vmatpush1.xpose.msra.mxu0 0.0
        %4187 = vmatprep.subr.mxu0 0.0
        %4188 = vmatpush1.xpose.msra.mxu0 0.0
        %4189 = vmatprep.subr.mxu0 0.0
        %4190 = vmatpush1.xpose.msra.mxu0 0.0
        %4191 = vmatprep.subr.mxu0 0.0
        %4192 = vmatpush1.xpose.msra.mxu0 0.0
        %4193 = vmatprep.subr.mxu0 0.0
        %4194 = vmatpush1.xpose.msra.mxu0 0.0
        %4195 = vmatprep.subr.mxu0 0.0
        %4196 = vmatpush1.xpose.msra.mxu0 0.0
        %4197 = vmatprep.subr.mxu0 0.0
        %4198 = vmatpush1.xpose.msra.mxu0 0.0
        %4199 = vmatprep.subr.mxu0 0.0
        %4200 = vmatpush1.xpose.msra.mxu0 0.0
        %4201 = vmatprep.subr.mxu0 0.0
        %4202 = vmatpush1.xpose.msra.mxu0 0.0
        %4203 = vmatprep.subr.mxu0 0.0
        %4204 = vmatpush1.xpose.msra.mxu0 0.0
        %4205 = vmatprep.subr.mxu0 0.0
        %4206 = vmatpush1.xpose.msra.mxu0 0.0
        %4207 = vmatprep.subr.mxu0 0.0
        %4208 = vmatpush1.xpose.msra.mxu0 0.0
        %4209 = vmatprep.subr.mxu0 0.0
        %4210 = vmatpush1.xpose.msra.mxu0 0.0
        %4211 = vmatprep.subr.mxu0 0.0
        %4212 = vmatpush1.xpose.msra.mxu0 0.0
        %4213 = vmatprep.subr.mxu0 0.0
        %4214 = vmatpush1.xpose.msra.mxu0 0.0
        %4215 = vmatprep.subr.mxu0 0.0
        %4216 = vmatpush1.xpose.msra.mxu0 0.0
        %4217 = vmatprep.subr.mxu0 0.0
        %4218 = vmatpush1.xpose.msra.mxu0 0.0
        %4219 = vmatprep.subr.mxu0 0.0
        %4220 = vmatpush1.xpose.msra.mxu0 0.0
        %4221 = vmatprep.subr.mxu0 0.0
        %4222 = vmatpush1.xpose.msra.mxu0 0.0
        %4223 = vmatprep.mubr.f32.mxu0 0.0
        %4224 = vmatmul.mubr.f32.gmra.mrb[0].mxu0 %v4151
        %v4225 = vpop.f32.mrb[0].mxu0
        %v4226 = vadd.f32 0.0, %v4225
        %v4227 = vpop.f32.mrb[0].mxu0
        %4228 = vmatprep.mubr.f32.mxu0 0.0
        %4229 = vmatmul.mubr.f32.gmra.mrb[0].mxu0 %v4153
        %v4230 = vpop.f32.mrb[0].mxu0
        %v4231 = vadd.f32 0.0, %v4230
        %v4232 = vpop.f32.mrb[0].mxu0
        %4233 = vdwg.mxu0
        %v4234 = vmul.f32 %v4226, 0.25
        %v4235 = vmul.f32 %v4231, 0.25
        %v4236 = vsel %vm3053, %v4234, -inf
        %4237 = vmax.xlane.f32.xlu0 %v4236
        %v4238 = vpop.xlane.xlu0 %4237
        %v4239 = vsel %vm3057, %v4235, -inf
        %4240 = vmax.xlane.f32.xlu0 %v4239
        %v4241 = vpop.xlane.xlu0 %4240
        %v4242 = vsub.f32 %v4234, %v4238
        %v4243 = vsub.f32 %v4235, %v4241
        %v4244 = vmul.f32 %v4242, 1.442695
        %v4245 = vpow.pop %v4244
        %v4246 = vmul.f32 %v4243, 1.442695
        %v4247 = vpow.pop %v4246
        %v4248 = vsel %vm3053, %v4245, 0.0
        %4249 = vadd.xlane.f32.xlu0 %v4248
        %v4250 = vpop.xlane.xlu0 %4249
        %v4251 = vsel %vm3057, %v4247, 0.0
        %4252 = vadd.xlane.f32.xlu0 %v4251
        %v4253 = vpop.xlane.xlu0 %4252
        %v4254 = vrcp.pop %v4250
        %v4255 = vrcp.pop %v4253
        %v4256 = vmul.f32 %v4245, %v4254
        %v4257 = vmul.f32 %v4247, %v4255
        %4258 = vrot.lane.b32.xlu0 %v3929, 48
        %v4259 = vpop.permute.xlu0 %4258
        %4260 = vrot.lane.b32.xlu0 %v3934, 48
        %v4261 = vpop.permute.xlu0 %4260
        %v4264 = vsel %vm3053, %v4256, 0
        %v4267 = vsel %vm3053, %v4257, 0
        %v4269 = vsel %vm2810, %v4261, 0
        %4271 = vmatprep.subr.mxu0 0.0
        %4272 = vmatpush1.msra.mxu0 %v4259
        %4273 = vmatprep.subr.mxu0 0.0
        %4274 = vmatpush1.msra.mxu0 %v4269
        %4275 = vmatprep.subr.mxu0 0.0
        %4276 = vmatpush1.msra.mxu0 0.0
        %4277 = vmatprep.subr.mxu0 0.0
        %4278 = vmatpush1.msra.mxu0 0.0
        %4279 = vmatprep.subr.mxu0 0.0
        %4280 = vmatpush1.msra.mxu0 0.0
        %4281 = vmatprep.subr.mxu0 0.0
        %4282 = vmatpush1.msra.mxu0 0.0
        %4283 = vmatprep.subr.mxu0 0.0
        %4284 = vmatpush1.msra.mxu0 0.0
        %4285 = vmatprep.subr.mxu0 0.0
        %4286 = vmatpush1.msra.mxu0 0.0
        %4287 = vmatprep.subr.mxu0 0.0
        %4288 = vmatpush1.msra.mxu0 0.0
        %4289 = vmatprep.subr.mxu0 0.0
        %4290 = vmatpush1.msra.mxu0 0.0
        %4291 = vmatprep.subr.mxu0 0.0
        %4292 = vmatpush1.msra.mxu0 0.0
        %4293 = vmatprep.subr.mxu0 0.0
        %4294 = vmatpush1.msra.mxu0 0.0
        %4295 = vmatprep.subr.mxu0 0.0
        %4296 = vmatpush1.msra.mxu0 0.0
        %4297 = vmatprep.subr.mxu0 0.0
        %4298 = vmatpush1.msra.mxu0 0.0
        %4299 = vmatprep.subr.mxu0 0.0
        %4300 = vmatpush1.msra.mxu0 0.0
        %4301 = vmatprep.subr.mxu0 0.0
        %4302 = vmatpush1.msra.mxu0 0.0
        %4303 = vmatprep.subr.mxu0 0.0
        %4304 = vmatpush1.msra.mxu0 0.0
        %4305 = vmatprep.subr.mxu0 0.0
        %4306 = vmatpush1.msra.mxu0 0.0
        %4307 = vmatprep.subr.mxu0 0.0
        %4308 = vmatpush1.msra.mxu0 0.0
        %4309 = vmatprep.subr.mxu0 0.0
        %4310 = vmatpush1.msra.mxu0 0.0
        %4311 = vmatprep.subr.mxu0 0.0
        %4312 = vmatpush1.msra.mxu0 0.0
        %4313 = vmatprep.subr.mxu0 0.0
        %4314 = vmatpush1.msra.mxu0 0.0
        %4315 = vmatprep.subr.mxu0 0.0
        %4316 = vmatpush1.msra.mxu0 0.0
        %4317 = vmatprep.subr.mxu0 0.0
        %4318 = vmatpush1.msra.mxu0 0.0
        %4319 = vmatprep.subr.mxu0 0.0
        %4320 = vmatpush1.msra.mxu0 0.0
        %4321 = vmatprep.subr.mxu0 0.0
        %4322 = vmatpush1.msra.mxu0 0.0
        %4323 = vmatprep.subr.mxu0 0.0
        %4324 = vmatpush1.msra.mxu0 0.0
        %4325 = vmatprep.subr.mxu0 0.0
        %4326 = vmatpush1.msra.mxu0 0.0
        %4327 = vmatprep.subr.mxu0 0.0
        %4328 = vmatpush1.msra.mxu0 0.0
        %4329 = vmatprep.subr.mxu0 0.0
        %4330 = vmatpush1.msra.mxu0 0.0
        %4331 = vmatprep.subr.mxu0 0.0
        %4332 = vmatpush1.msra.mxu0 0.0
        %4333 = vmatprep.subr.mxu0 0.0
        %4334 = vmatpush1.msra.mxu0 0.0
        %4335 = vmatprep.mubr.f32.mxu0 0.0
        %4336 = vmatmul.mubr.f32.gmra.mrb[0].mxu0 %v4264
        %v4337 = vpop.f32.mrb[0].mxu0
        %v4338 = vadd.f32 0.0, %v4337
        %v4339 = vpop.f32.mrb[0].mxu0
        %4340 = vmatprep.mubr.f32.mxu0 0.0
        %4341 = vmatmul.mubr.f32.gmra.mrb[0].mxu0 %v4267
        %v4342 = vpop.f32.mrb[0].mxu0
        %v4343 = vadd.f32 0.0, %v4342
        %v4344 = vpop.f32.mrb[0].mxu0
        %4345 = vdwg.mxu0
        %v4347 = vsel %vm2967, %v4338, 0
        %v4350 = vsel %vm2967, %v4343, 0
        %4352 = vmatprep.subr.mxu0 0.0
        %4353 = vmatpush1.msra.mxu0 %v3940
        %4354 = vmatprep.subr.mxu0 0.0
        %4355 = vmatpush1.msra.mxu0 %v3941
        %4356 = vmatprep.subr.mxu0 0.0
        %4357 = vmatpush1.msra.mxu0 0.0
        %4358 = vmatprep.subr.mxu0 0.0
        %4359 = vmatpush1.msra.mxu0 0.0
        %4360 = vmatprep.subr.mxu0 0.0
        %4361 = vmatpush1.msra.mxu0 0.0
        %4362 = vmatprep.subr.mxu0 0.0
        %4363 = vmatpush1.msra.mxu0 0.0
        %4364 = vmatprep.subr.mxu0 0.0
        %4365 = vmatpush1.msra.mxu0 0.0
        %4366 = vmatprep.subr.mxu0 0.0
        %4367 = vmatpush1.msra.mxu0 0.0
        %4368 = vmatprep.subr.mxu0 0.0
        %4369 = vmatpush1.msra.mxu0 0.0
        %4370 = vmatprep.subr.mxu0 0.0
        %4371 = vmatpush1.msra.mxu0 0.0
        %4372 = vmatprep.subr.mxu0 0.0
        %4373 = vmatpush1.msra.mxu0 0.0
        %4374 = vmatprep.subr.mxu0 0.0
        %4375 = vmatpush1.msra.mxu0 0.0
        %4376 = vmatprep.subr.mxu0 0.0
        %4377 = vmatpush1.msra.mxu0 0.0
        %4378 = vmatprep.subr.mxu0 0.0
        %4379 = vmatpush1.msra.mxu0 0.0
        %4380 = vmatprep.subr.mxu0 0.0
        %4381 = vmatpush1.msra.mxu0 0.0
        %4382 = vmatprep.subr.mxu0 0.0
        %4383 = vmatpush1.msra.mxu0 0.0
        %4384 = vmatprep.subr.mxu0 0.0
        %4385 = vmatpush1.msra.mxu0 0.0
        %4386 = vmatprep.subr.mxu0 0.0
        %4387 = vmatpush1.msra.mxu0 0.0
        %4388 = vmatprep.subr.mxu0 0.0
        %4389 = vmatpush1.msra.mxu0 0.0
        %4390 = vmatprep.subr.mxu0 0.0
        %4391 = vmatpush1.msra.mxu0 0.0
        %4392 = vmatprep.subr.mxu0 0.0
        %4393 = vmatpush1.msra.mxu0 0.0
        %4394 = vmatprep.subr.mxu0 0.0
        %4395 = vmatpush1.msra.mxu0 0.0
        %4396 = vmatprep.subr.mxu0 0.0
        %4397 = vmatpush1.msra.mxu0 0.0
        %4398 = vmatprep.subr.mxu0 0.0
        %4399 = vmatpush1.msra.mxu0 0.0
        %4400 = vmatprep.subr.mxu0 0.0
        %4401 = vmatpush1.msra.mxu0 0.0
        %4402 = vmatprep.subr.mxu0 0.0
        %4403 = vmatpush1.msra.mxu0 0.0
        %4404 = vmatprep.subr.mxu0 0.0
        %4405 = vmatpush1.msra.mxu0 0.0
        %4406 = vmatprep.subr.mxu0 0.0
        %4407 = vmatpush1.msra.mxu0 0.0
        %4408 = vmatprep.subr.mxu0 0.0
        %4409 = vmatpush1.msra.mxu0 0.0
        %4410 = vmatprep.subr.mxu0 0.0
        %4411 = vmatpush1.msra.mxu0 0.0
        %4412 = vmatprep.subr.mxu0 0.0
        %4413 = vmatpush1.msra.mxu0 0.0
        %4414 = vmatprep.subr.mxu0 0.0
        %4415 = vmatpush1.msra.mxu0 0.0
        %4416 = vmatprep.mubr.f32.mxu0 0.0
        %4417 = vmatmul.mubr.f32.gmra.mrb[0].mxu0 %v4347
        %v4418 = vpop.f32.mrb[0].mxu0
        %v4419 = vadd.f32 0.0, %v4418
        %v4420 = vpop.f32.mrb[0].mxu0
        %4421 = vmatprep.mubr.f32.mxu0 0.0
        %4422 = vmatmul.mubr.f32.gmra.mrb[0].mxu0 %v4350
        %v4423 = vpop.f32.mrb[0].mxu0
        %v4424 = vadd.f32 0.0, %v4423
        %v4425 = vpop.f32.mrb[0].mxu0
        %4426 = vdwg.mxu0
        %v4428 = vsel %vm2967, %v4135, 0
        %v4431 = vsel %vm2967, %v4140, 0
        %4433 = vmatprep.subr.mxu0 0.0
        %4434 = vmatpush1.msra.mxu0 %v3938
        %4435 = vmatprep.subr.mxu0 0.0
        %4436 = vmatpush1.msra.mxu0 %v3939
        %4437 = vmatprep.subr.mxu0 0.0
        %4438 = vmatpush1.msra.mxu0 0.0
        %4439 = vmatprep.subr.mxu0 0.0
        %4440 = vmatpush1.msra.mxu0 0.0
        %4441 = vmatprep.subr.mxu0 0.0
        %4442 = vmatpush1.msra.mxu0 0.0
        %4443 = vmatprep.subr.mxu0 0.0
        %4444 = vmatpush1.msra.mxu0 0.0
        %4445 = vmatprep.subr.mxu0 0.0
        %4446 = vmatpush1.msra.mxu0 0.0
        %4447 = vmatprep.subr.mxu0 0.0
        %4448 = vmatpush1.msra.mxu0 0.0
        %4449 = vmatprep.subr.mxu0 0.0
        %4450 = vmatpush1.msra.mxu0 0.0
        %4451 = vmatprep.subr.mxu0 0.0
        %4452 = vmatpush1.msra.mxu0 0.0
        %4453 = vmatprep.subr.mxu0 0.0
        %4454 = vmatpush1.msra.mxu0 0.0
        %4455 = vmatprep.subr.mxu0 0.0
        %4456 = vmatpush1.msra.mxu0 0.0
        %4457 = vmatprep.subr.mxu0 0.0
        %4458 = vmatpush1.msra.mxu0 0.0
        %4459 = vmatprep.subr.mxu0 0.0
        %4460 = vmatpush1.msra.mxu0 0.0
        %4461 = vmatprep.subr.mxu0 0.0
        %4462 = vmatpush1.msra.mxu0 0.0
        %4463 = vmatprep.subr.mxu0 0.0
        %4464 = vmatpush1.msra.mxu0 0.0
        %4465 = vmatprep.subr.mxu0 0.0
        %4466 = vmatpush1.msra.mxu0 0.0
        %4467 = vmatprep.subr.mxu0 0.0
        %4468 = vmatpush1.msra.mxu0 0.0
        %4469 = vmatprep.subr.mxu0 0.0
        %4470 = vmatpush1.msra.mxu0 0.0
        %4471 = vmatprep.subr.mxu0 0.0
        %4472 = vmatpush1.msra.mxu0 0.0
        %4473 = vmatprep.subr.mxu0 0.0
        %4474 = vmatpush1.msra.mxu0 0.0
        %4475 = vmatprep.subr.mxu0 0.0
        %4476 = vmatpush1.msra.mxu0 0.0
        %4477 = vmatprep.subr.mxu0 0.0
        %4478 = vmatpush1.msra.mxu0 0.0
        %4479 = vmatprep.subr.mxu0 0.0
        %4480 = vmatpush1.msra.mxu0 0.0
        %4481 = vmatprep.subr.mxu0 0.0
        %4482 = vmatpush1.msra.mxu0 0.0
        %4483 = vmatprep.subr.mxu0 0.0
        %4484 = vmatpush1.msra.mxu0 0.0
        %4485 = vmatprep.subr.mxu0 0.0
        %4486 = vmatpush1.msra.mxu0 0.0
        %4487 = vmatprep.subr.mxu0 0.0
        %4488 = vmatpush1.msra.mxu0 0.0
        %4489 = vmatprep.subr.mxu0 0.0
        %4490 = vmatpush1.msra.mxu0 0.0
        %4491 = vmatprep.subr.mxu0 0.0
        %4492 = vmatpush1.msra.mxu0 0.0
        %4493 = vmatprep.subr.mxu0 0.0
        %4494 = vmatpush1.msra.mxu0 0.0
        %4495 = vmatprep.subr.mxu0 0.0
        %4496 = vmatpush1.msra.mxu0 0.0
        %4497 = vmatprep.mubr.f32.mxu0 0.0
        %4498 = vmatmul.mubr.f32.gmra.mrb[0].mxu0 %v4428
        %v4499 = vpop.f32.mrb[0].mxu0
        %v4500 = vadd.f32 %v4419, %v4499
        %v4501 = vpop.f32.mrb[0].mxu0
        %4502 = vmatprep.mubr.f32.mxu0 0.0
        %4503 = vmatmul.mubr.f32.gmra.mrb[0].mxu0 %v4431
        %v4504 = vpop.f32.mrb[0].mxu0
        %v4505 = vadd.f32 %v4424, %v4504
        %v4506 = vpop.f32.mrb[0].mxu0
        %4507 = vdwg.mxu0
        %s4508 = scalar_lea.vmem %s43, 1
        %v4509 = vld [vmem:[%s4508] sm:$0x1]
        %v4511 = vlaneseq
        %v4512 = vshrl.u32 %v4511, 7
        %v4513 = vsub.s32 0, %v4512
        %v4514 = vrot.slane %v4509, %v4513
        %v4516 = vadd.f32 %v4500, %v4514
        %v4517 = vadd.f32 %v4505, %v4514
        %v4518 = vadd.f32 %v3795, %v4516
        %v4519 = vadd.f32 %v3796, %v4517
        %s4520 = scalar_lea.vmem %s45, 1
        %v4521 = vld [vmem:[%s4520] sm:$0x1]
        %s4522 = scalar_lea.vmem %s47, 1
        %v4523 = vld [vmem:[%s4522] sm:$0x1]
        %v4524 = vsel %vm2543, %v4518, 0.0
        %4525 = vadd.xlane.f32.xlu0 %v4524
        %v4526 = vpop.xlane.xlu0 %4525
        %v4527 = vsel %vm2824, %v4519, 0.0
        %4528 = vadd.xlane.f32.xlu0 %v4527
        %v4529 = vpop.xlane.xlu0 %4528
        %v4530 = vmul.f32 %v4526, %v2828
        %v4531 = vmul.f32 %v4529, %v2828
        %v4532 = vsub.f32 %v4518, %v4530
        %v4533 = vsub.f32 %v4519, %v4531
        %v4534 = vmul.f32 %v4532, %v4532
        %v4535 = vmul.f32 %v4533, %v4533
        %v4536 = vsel %vm2543, %v4534, 0.0
        %4537 = vadd.xlane.f32.xlu0 %v4536
        %v4538 = vpop.xlane.xlu0 %4537
        %v4539 = vsel %vm2824, %v4535, 0.0
        %4540 = vadd.xlane.f32.xlu0 %v4539
        %v4541 = vpop.xlane.xlu0 %4540
        %v4542 = vmul.f32 %v4538, %v2828
        %v4543 = vmul.f32 %v4541, %v2828
        %v4544 = vadd.f32 %v4542, 1e-05
        %v4545 = vadd.f32 %v4543, 1e-05
        %v4546 = vrsqrt.pop %v4544
        %v4547 = vrsqrt.pop %v4545
        %v4548 = vmul.f32 %v4532, %v4546
        %v4549 = vmul.f32 %v4533, %v4547
        %v4551 = vlaneseq
        %v4552 = vshrl.u32 %v4551, 7
        %v4553 = vsub.s32 0, %v4552
        %v4554 = vrot.slane %v4521, %v4553
        %v4556 = vmul.f32 %v4548, %v4554
        %v4557 = vmul.f32 %v4549, %v4554
        %v4559 = vlaneseq
        %v4560 = vshrl.u32 %v4559, 7
        %v4561 = vsub.s32 0, %v4560
        %v4562 = vrot.slane %v4523, %v4561
        %v4564 = vadd.f32 %v4556, %v4562
        %v4565 = vadd.f32 %v4557, %v4562
        %s4566 = scalar_lea.vmem %s49, 32
        %v4567 = vld [vmem:[%s4566] sm:$0xff]
        %v4568 = vld [vmem:[%s4566 + $0x8] sm:$0xff]
        %v4569 = vld [vmem:[%s4566 + $0x10] sm:$0xff]
        %v4570 = vld [vmem:[%s4566 + $0x18] sm:$0xff]
        %s4571 = scalar_lea.vmem %s51, 1
        %v4572 = vld [vmem:[%s4571] sm:$0x1]
        %v4574 = vlaneseq
        %v4575 = vshrl.u32 %v4574, 7
        %v4576 = vsub.s32 0, %v4575
        %v4577 = vrot.slane %v4572, %v4576
        %v4580 = vsel %vm2543, %v4564, 0
        %v4583 = vsel %vm2543, %v4565, 0
        %4585 = vmatprep.subr.mxu0 0.0
        %4586 = vmatpush1.msra.mxu0 %v4567
        %4587 = vmatprep.subr.mxu0 0.0
        %4588 = vmatpush1.msra.mxu0 %v4568
        %4589 = vmatprep.subr.mxu0 0.0
        %4590 = vmatpush1.msra.mxu0 %v4569
        %4591 = vmatprep.subr.mxu0 0.0
        %4592 = vmatpush1.msra.mxu0 %v4570
        %4593 = vmatprep.subr.mxu0 0.0
        %4594 = vmatpush1.msra.mxu0 0.0
        %4595 = vmatprep.subr.mxu0 0.0
        %4596 = vmatpush1.msra.mxu0 0.0
        %4597 = vmatprep.subr.mxu0 0.0
        %4598 = vmatpush1.msra.mxu0 0.0
        %4599 = vmatprep.subr.mxu0 0.0
        %4600 = vmatpush1.msra.mxu0 0.0
        %4601 = vmatprep.subr.mxu0 0.0
        %4602 = vmatpush1.msra.mxu0 0.0
        %4603 = vmatprep.subr.mxu0 0.0
        %4604 = vmatpush1.msra.mxu0 0.0
        %4605 = vmatprep.subr.mxu0 0.0
        %4606 = vmatpush1.msra.mxu0 0.0
        %4607 = vmatprep.subr.mxu0 0.0
        %4608 = vmatpush1.msra.mxu0 0.0
        %4609 = vmatprep.subr.mxu0 0.0
        %4610 = vmatpush1.msra.mxu0 0.0
        %4611 = vmatprep.subr.mxu0 0.0
        %4612 = vmatpush1.msra.mxu0 0.0
        %4613 = vmatprep.subr.mxu0 0.0
        %4614 = vmatpush1.msra.mxu0 0.0
        %4615 = vmatprep.subr.mxu0 0.0
        %4616 = vmatpush1.msra.mxu0 0.0
        %4617 = vmatprep.subr.mxu0 0.0
        %4618 = vmatpush1.msra.mxu0 0.0
        %4619 = vmatprep.subr.mxu0 0.0
        %4620 = vmatpush1.msra.mxu0 0.0
        %4621 = vmatprep.subr.mxu0 0.0
        %4622 = vmatpush1.msra.mxu0 0.0
        %4623 = vmatprep.subr.mxu0 0.0
        %4624 = vmatpush1.msra.mxu0 0.0
        %4625 = vmatprep.subr.mxu0 0.0
        %4626 = vmatpush1.msra.mxu0 0.0
        %4627 = vmatprep.subr.mxu0 0.0
        %4628 = vmatpush1.msra.mxu0 0.0
        %4629 = vmatprep.subr.mxu0 0.0
        %4630 = vmatpush1.msra.mxu0 0.0
        %4631 = vmatprep.subr.mxu0 0.0
        %4632 = vmatpush1.msra.mxu0 0.0
        %4633 = vmatprep.subr.mxu0 0.0
        %4634 = vmatpush1.msra.mxu0 0.0
        %4635 = vmatprep.subr.mxu0 0.0
        %4636 = vmatpush1.msra.mxu0 0.0
        %4637 = vmatprep.subr.mxu0 0.0
        %4638 = vmatpush1.msra.mxu0 0.0
        %4639 = vmatprep.subr.mxu0 0.0
        %4640 = vmatpush1.msra.mxu0 0.0
        %4641 = vmatprep.subr.mxu0 0.0
        %4642 = vmatpush1.msra.mxu0 0.0
        %4643 = vmatprep.subr.mxu0 0.0
        %4644 = vmatpush1.msra.mxu0 0.0
        %4645 = vmatprep.subr.mxu0 0.0
        %4646 = vmatpush1.msra.mxu0 0.0
        %4647 = vmatprep.subr.mxu0 0.0
        %4648 = vmatpush1.msra.mxu0 0.0
        %4649 = vmatprep.mubr.f32.mxu0 0.0
        %4650 = vmatmul.mubr.f32.gmra.mrb[0].mxu0 %v4580
        %v4651 = vpop.f32.mrb[0].mxu0
        %v4652 = vadd.f32 %v4577, %v4651
        %v4653 = vpop.f32.mrb[0].mxu0
        %4654 = vmatprep.mubr.f32.mxu0 0.0
        %4655 = vmatmul.mubr.f32.gmra.mrb[0].mxu0 %v4583
        %v4656 = vpop.f32.mrb[0].mxu0
        %v4657 = vadd.f32 %v4577, %v4656
        %v4658 = vpop.f32.mrb[0].mxu0
        %4659 = vdwg.mxu0
        %v4660 = vmul.f32 %v4652, 0.5
        %v4661 = vmul.f32 %v4657, 0.5
        %v4662 = vmul.f32 %v4652, 0.044715
        %v4663 = vmul.f32 %v4657, 0.044715
        %v4664 = vmul.f32 %v4662, %v4652
        %v4665 = vmul.f32 %v4663, %v4657
        %v4666 = vmul.f32 %v4664, %v4652
        %v4667 = vmul.f32 %v4665, %v4657
        %v4668 = vadd.f32 %v4652, %v4666
        %v4669 = vadd.f32 %v4657, %v4667
        %v4670 = vmul.f32 %v4668, 0.7978846
        %v4671 = vmul.f32 %v4669, 0.7978846
        %v4672 = vtanh.pop %v4670
        %v4673 = vtanh.pop %v4671
        %v4674 = vadd.f32 %v4672, 1.0
        %v4675 = vadd.f32 %v4673, 1.0
        %v4676 = vmul.f32 %v4660, %v4674
        %v4677 = vmul.f32 %v4661, %v4675
        %s4678 = scalar_lea.vmem %s53, 128
        %v4679 = vld [vmem:[%s4678] sm:$0xff]
        %v4680 = vld [vmem:[%s4678 + $0x8] sm:$0xff]
        %v4681 = vld [vmem:[%s4678 + $0x10] sm:$0xff]
        %v4682 = vld [vmem:[%s4678 + $0x18] sm:$0xff]
        %v4683 = vld [vmem:[%s4678 + $0x20] sm:$0xff]
        %v4684 = vld [vmem:[%s4678 + $0x28] sm:$0xff]
        %v4685 = vld [vmem:[%s4678 + $0x30] sm:$0xff]
        %v4686 = vld [vmem:[%s4678 + $0x38] sm:$0xff]
        %v4687 = vld [vmem:[%s4678 + $0x40] sm:$0xff]
        %v4688 = vld [vmem:[%s4678 + $0x48] sm:$0xff]
        %v4689 = vld [vmem:[%s4678 + $0x50] sm:$0xff]
        %v4690 = vld [vmem:[%s4678 + $0x58] sm:$0xff]
        %v4691 = vld [vmem:[%s4678 + $0x60] sm:$0xff]
        %v4692 = vld [vmem:[%s4678 + $0x68] sm:$0xff]
        %v4693 = vld [vmem:[%s4678 + $0x70] sm:$0xff]
        %v4694 = vld [vmem:[%s4678 + $0x78] sm:$0xff]
        %s4695 = scalar_lea.vmem %s55, 1
        %v4696 = vld [vmem:[%s4695] sm:$0x1]
        %v4698 = vlaneseq
        %v4699 = vshrl.u32 %v4698, 7
        %v4700 = vsub.s32 0, %v4699
        %v4701 = vrot.slane %v4696, %v4700
        %4703 = vmatprep.subr.mxu0 0.0
        %4704 = vmatpush1.msra.mxu0 %v4679
        %4705 = vmatprep.subr.mxu0 0.0
        %4706 = vmatpush1.msra.mxu0 %v4680
        %4707 = vmatprep.subr.mxu0 0.0
        %4708 = vmatpush1.msra.mxu0 %v4681
        %4709 = vmatprep.subr.mxu0 0.0
        %4710 = vmatpush1.msra.mxu0 %v4682
        %4711 = vmatprep.subr.mxu0 0.0
        %4712 = vmatpush1.msra.mxu0 %v4683
        %4713 = vmatprep.subr.mxu0 0.0
        %4714 = vmatpush1.msra.mxu0 %v4684
        %4715 = vmatprep.subr.mxu0 0.0
        %4716 = vmatpush1.msra.mxu0 %v4685
        %4717 = vmatprep.subr.mxu0 0.0
        %4718 = vmatpush1.msra.mxu0 %v4686
        %4719 = vmatprep.subr.mxu0 0.0
        %4720 = vmatpush1.msra.mxu0 %v4687
        %4721 = vmatprep.subr.mxu0 0.0
        %4722 = vmatpush1.msra.mxu0 %v4688
        %4723 = vmatprep.subr.mxu0 0.0
        %4724 = vmatpush1.msra.mxu0 %v4689
        %4725 = vmatprep.subr.mxu0 0.0
        %4726 = vmatpush1.msra.mxu0 %v4690
        %4727 = vmatprep.subr.mxu0 0.0
        %4728 = vmatpush1.msra.mxu0 %v4691
        %4729 = vmatprep.subr.mxu0 0.0
        %4730 = vmatpush1.msra.mxu0 %v4692
        %4731 = vmatprep.subr.mxu0 0.0
        %4732 = vmatpush1.msra.mxu0 %v4693
        %4733 = vmatprep.subr.mxu0 0.0
        %4734 = vmatpush1.msra.mxu0 %v4694
        %4735 = vmatprep.subr.mxu0 0.0
        %4736 = vmatpush1.msra.mxu0 0.0
        %4737 = vmatprep.subr.mxu0 0.0
        %4738 = vmatpush1.msra.mxu0 0.0
        %4739 = vmatprep.subr.mxu0 0.0
        %4740 = vmatpush1.msra.mxu0 0.0
        %4741 = vmatprep.subr.mxu0 0.0
        %4742 = vmatpush1.msra.mxu0 0.0
        %4743 = vmatprep.subr.mxu0 0.0
        %4744 = vmatpush1.msra.mxu0 0.0
        %4745 = vmatprep.subr.mxu0 0.0
        %4746 = vmatpush1.msra.mxu0 0.0
        %4747 = vmatprep.subr.mxu0 0.0
        %4748 = vmatpush1.msra.mxu0 0.0
        %4749 = vmatprep.subr.mxu0 0.0
        %4750 = vmatpush1.msra.mxu0 0.0
        %4751 = vmatprep.subr.mxu0 0.0
        %4752 = vmatpush1.msra.mxu0 0.0
        %4753 = vmatprep.subr.mxu0 0.0
        %4754 = vmatpush1.msra.mxu0 0.0
        %4755 = vmatprep.subr.mxu0 0.0
        %4756 = vmatpush1.msra.mxu0 0.0
        %4757 = vmatprep.subr.mxu0 0.0
        %4758 = vmatpush1.msra.mxu0 0.0
        %4759 = vmatprep.subr.mxu0 0.0
        %4760 = vmatpush1.msra.mxu0 0.0
        %4761 = vmatprep.subr.mxu0 0.0
        %4762 = vmatpush1.msra.mxu0 0.0
        %4763 = vmatprep.subr.mxu0 0.0
        %4764 = vmatpush1.msra.mxu0 0.0
        %4765 = vmatprep.subr.mxu0 0.0
        %4766 = vmatpush1.msra.mxu0 0.0
        %4767 = vmatprep.mubr.f32.mxu0 0.0
        %4768 = vmatmul.mubr.f32.gmra.mrb[0].mxu0 %v4676
        %v4769 = vpop.f32.mrb[0].mxu0
        %v4770 = vadd.f32 %v4701, %v4769
        %v4771 = vpop.f32.mrb[0].mxu0
        %4772 = vmatprep.mubr.f32.mxu0 0.0
        %4773 = vmatmul.mubr.f32.gmra.mrb[0].mxu0 %v4677
        %v4774 = vpop.f32.mrb[0].mxu0
        %v4775 = vadd.f32 %v4701, %v4774
        %v4776 = vpop.f32.mrb[0].mxu0
        %4777 = vdwg.mxu0
        %v4778 = vadd.f32 %v4518, %v4770
        %v4779 = vadd.f32 %v4519, %v4775
        %v4780 = vld [vmem:[%s57] sm:$0x1]
        %v4781 = vld [vmem:[%s59] sm:$0x1]
        %v4782 = vsel %vm2543, %v4778, 0.0
        %4783 = vadd.xlane.f32.xlu0 %v4782
        %v4784 = vpop.xlane.xlu0 %4783
        %v4785 = vsel %vm2824, %v4779, 0.0
        %4786 = vadd.xlane.f32.xlu0 %v4785
        %v4787 = vpop.xlane.xlu0 %4786
        %v4788 = vmul.f32 %v4784, %v2828
        %v4789 = vmul.f32 %v4787, %v2828
        %v4790 = vsub.f32 %v4778, %v4788
        %v4791 = vsub.f32 %v4779, %v4789
        %v4792 = vmul.f32 %v4790, %v4790
        %v4793 = vmul.f32 %v4791, %v4791
        %v4794 = vsel %vm2543, %v4792, 0.0
        %4795 = vadd.xlane.f32.xlu0 %v4794
        %v4796 = vpop.xlane.xlu0 %4795
        %v4797 = vsel %vm2824, %v4793, 0.0
        %4798 = vadd.xlane.f32.xlu0 %v4797
        %v4799 = vpop.xlane.xlu0 %4798
        %v4800 = vmul.f32 %v4796, %v2828
        %v4801 = vmul.f32 %v4799, %v2828
        %v4802 = vadd.f32 %v4800, 1e-05
        %v4803 = vadd.f32 %v4801, 1e-05
        %v4804 = vrsqrt.pop %v4802
        %v4805 = vrsqrt.pop %v4803
        %v4806 = vmul.f32 %v4790, %v4804
        %v4807 = vmul.f32 %v4791, %v4805
        %v4809 = vlaneseq
        %v4810 = vshrl.u32 %v4809, 7
        %v4811 = vsub.s32 0, %v4810
        %v4812 = vrot.slane %v4780, %v4811
        %v4814 = vmul.f32 %v4806, %v4812
        %v4815 = vmul.f32 %v4807, %v4812
        %v4817 = vlaneseq
        %v4818 = vshrl.u32 %v4817, 7
        %v4819 = vsub.s32 0, %v4818
        %v4820 = vrot.slane %v4781, %v4819
        %v4822 = vadd.f32 %v4814, %v4820
        %v4823 = vadd.f32 %v4815, %v4820
        %vm4824 = vcmask 261121
        %v4825 = vsel %vm4824, %v4822, -inf
        %v4826 = vsel %vm2824, %v4823, -inf
        %v4827 = vmax.f32 %v4825, %v4826
        %v4828 = vrot.slane %v4827, 4
        %v4829 = vmax.f32 %v4827, %v4828
        %v4830 = vrot.slane %v4829, 2
        %v4831 = vmax.f32 %v4829, %v4830
        %v4832 = vrot.slane %v4831, 1
        %v4833 = vmax.f32 %v4831, %v4832
        %v4834 = vld [vmem:[%s61] sm:$0xff]
        %v4835 = vld [vmem:[%s61 + $0x8] sm:$0xff]
        %v4836 = vld [vmem:[%s61 + $0x10] sm:$0xff]
        %v4837 = vld [vmem:[%s61 + $0x18] sm:$0xff]
        %v4838 = vld [vmem:[%s61 + $0x20] sm:$0xff]
        %v4839 = vld [vmem:[%s61 + $0x28] sm:$0xff]
        %v4840 = vld [vmem:[%s61 + $0x30] sm:$0xff]
        %v4841 = vld [vmem:[%s61 + $0x38] sm:$0xff]
        %v4842 = vld [vmem:[%s61 + $0x40] sm:$0xff]
        %v4843 = vld [vmem:[%s61 + $0x48] sm:$0xff]
        %v4844 = vld [vmem:[%s61 + $0x50] sm:$0xff]
        %v4845 = vld [vmem:[%s61 + $0x58] sm:$0xff]
        %v4846 = vld [vmem:[%s61 + $0x60] sm:$0xff]
        %v4847 = vld [vmem:[%s61 + $0x68] sm:$0xff]
        %v4848 = vld [vmem:[%s61 + $0x70] sm:$0xff]
        %v4849 = vld [vmem:[%s61 + $0x78] sm:$0xff]
        %v4851 = vsel %vm2543, %v4833, 0
        %4853 = vmatprep.subr.mxu0 %v4843
        %4854 = vmatpush1.msra.mxu0 %v4842
        %4855 = vmatprep.subr.mxu0 %v4845
        %4856 = vmatpush1.msra.mxu0 %v4844
        %4857 = vmatprep.subr.mxu0 %v4847
        %4858 = vmatpush1.msra.mxu0 %v4846
        %4859 = vmatprep.subr.mxu0 %v4849
        %4860 = vmatpush1.msra.mxu0 %v4848
        %4861 = vmatprep.subr.mxu0 0.0
        %4862 = vmatpush1.msra.mxu0 0.0
        %4863 = vmatprep.subr.mxu0 0.0
        %4864 = vmatpush1.msra.mxu0 0.0
        %4865 = vmatprep.subr.mxu0 0.0
        %4866 = vmatpush1.msra.mxu0 0.0
        %4867 = vmatprep.subr.mxu0 0.0
        %4868 = vmatpush1.msra.mxu0 0.0
        %4869 = vmatprep.subr.mxu0 0.0
        %4870 = vmatpush1.msra.mxu0 0.0
        %4871 = vmatprep.subr.mxu0 0.0
        %4872 = vmatpush1.msra.mxu0 0.0
        %4873 = vmatprep.subr.mxu0 0.0
        %4874 = vmatpush1.msra.mxu0 0.0
        %4875 = vmatprep.subr.mxu0 0.0
        %4876 = vmatpush1.msra.mxu0 0.0
        %4877 = vmatprep.subr.mxu0 0.0
        %4878 = vmatpush1.msra.mxu0 0.0
        %4879 = vmatprep.subr.mxu0 0.0
        %4880 = vmatpush1.msra.mxu0 0.0
        %4881 = vmatprep.subr.mxu0 0.0
        %4882 = vmatpush1.msra.mxu0 0.0
        %4883 = vmatprep.subr.mxu0 0.0
        %4884 = vmatpush1.msra.mxu0 0.0
        %4885 = vmatprep.subr.mxu0 0.0
        %4886 = vmatpush1.msra.mxu0 0.0
        %4887 = vmatprep.subr.mxu0 0.0
        %4888 = vmatpush1.msra.mxu0 0.0
        %4889 = vmatprep.subr.mxu0 0.0
        %4890 = vmatpush1.msra.mxu0 0.0
        %4891 = vmatprep.subr.mxu0 0.0
        %4892 = vmatpush1.msra.mxu0 0.0
        %4893 = vmatprep.subr.mxu0 0.0
        %4894 = vmatpush1.msra.mxu0 0.0
        %4895 = vmatprep.subr.mxu0 0.0
        %4896 = vmatpush1.msra.mxu0 0.0
        %4897 = vmatprep.subr.mxu0 0.0
        %4898 = vmatpush1.msra.mxu0 0.0
        %4899 = vmatprep.subr.mxu0 0.0
        %4900 = vmatpush1.msra.mxu0 0.0
        %4901 = vmatprep.subr.mxu0 0.0
        %4902 = vmatpush1.msra.mxu0 0.0
        %4903 = vmatprep.subr.mxu0 0.0
        %4904 = vmatpush1.msra.mxu0 0.0
        %4905 = vmatprep.subr.mxu0 0.0
        %4906 = vmatpush1.msra.mxu0 0.0
        %4907 = vmatprep.subr.mxu0 0.0
        %4908 = vmatpush1.msra.mxu0 0.0
        %4909 = vmatprep.subr.mxu0 0.0
        %4910 = vmatpush1.msra.mxu0 0.0
        %4911 = vmatprep.subr.mxu0 0.0
        %4912 = vmatpush1.msra.mxu0 0.0
        %4913 = vmatprep.subr.mxu0 0.0
        %4914 = vmatpush1.msra.mxu0 0.0
        %4915 = vmatprep.subr.mxu0 0.0
        %4916 = vmatpush1.msra.mxu0 0.0
        %4917 = vmatprep.mubr.f32.mxu0 0.0
        %4918 = vmatmul.mubr.f32.gmra.mrb[0].mxu0 %v4851
        %v4919 = vpop.f32.mrb[0].mxu0
        %v4920 = vadd.f32 0.0, %v4919
        %v4921 = vpop.f32.mrb[0].mxu0
        %v4922 = vadd.f32 0.0, %v4921
        %4923 = vdwg.mxu0
        %v4925 = vsel %vm2543, %v4822, 0
        %4927 = vmatprep.subr.mxu0 %v4835
        %4928 = vmatpush1.msra.mxu0 %v4834
        %4929 = vmatprep.subr.mxu0 %v4837
        %4930 = vmatpush1.msra.mxu0 %v4836
        %4931 = vmatprep.subr.mxu0 %v4839
        %4932 = vmatpush1.msra.mxu0 %v4838
        %4933 = vmatprep.subr.mxu0 %v4841
        %4934 = vmatpush1.msra.mxu0 %v4840
        %4935 = vmatprep.subr.mxu0 0.0
        %4936 = vmatpush1.msra.mxu0 0.0
        %4937 = vmatprep.subr.mxu0 0.0
        %4938 = vmatpush1.msra.mxu0 0.0
        %4939 = vmatprep.subr.mxu0 0.0
        %4940 = vmatpush1.msra.mxu0 0.0
        %4941 = vmatprep.subr.mxu0 0.0
        %4942 = vmatpush1.msra.mxu0 0.0
        %4943 = vmatprep.subr.mxu0 0.0
        %4944 = vmatpush1.msra.mxu0 0.0
        %4945 = vmatprep.subr.mxu0 0.0
        %4946 = vmatpush1.msra.mxu0 0.0
        %4947 = vmatprep.subr.mxu0 0.0
        %4948 = vmatpush1.msra.mxu0 0.0
        %4949 = vmatprep.subr.mxu0 0.0
        %4950 = vmatpush1.msra.mxu0 0.0
        %4951 = vmatprep.subr.mxu0 0.0
        %4952 = vmatpush1.msra.mxu0 0.0
        %4953 = vmatprep.subr.mxu0 0.0
        %4954 = vmatpush1.msra.mxu0 0.0
        %4955 = vmatprep.subr.mxu0 0.0
        %4956 = vmatpush1.msra.mxu0 0.0
        %4957 = vmatprep.subr.mxu0 0.0
        %4958 = vmatpush1.msra.mxu0 0.0
        %4959 = vmatprep.subr.mxu0 0.0
        %4960 = vmatpush1.msra.mxu0 0.0
        %4961 = vmatprep.subr.mxu0 0.0
        %4962 = vmatpush1.msra.mxu0 0.0
        %4963 = vmatprep.subr.mxu0 0.0
        %4964 = vmatpush1.msra.mxu0 0.0
        %4965 = vmatprep.subr.mxu0 0.0
        %4966 = vmatpush1.msra.mxu0 0.0
        %4967 = vmatprep.subr.mxu0 0.0
        %4968 = vmatpush1.msra.mxu0 0.0
        %4969 = vmatprep.subr.mxu0 0.0
        %4970 = vmatpush1.msra.mxu0 0.0
        %4971 = vmatprep.subr.mxu0 0.0
        %4972 = vmatpush1.msra.mxu0 0.0
        %4973 = vmatprep.subr.mxu0 0.0
        %4974 = vmatpush1.msra.mxu0 0.0
        %4975 = vmatprep.subr.mxu0 0.0
        %4976 = vmatpush1.msra.mxu0 0.0
        %4977 = vmatprep.subr.mxu0 0.0
        %4978 = vmatpush1.msra.mxu0 0.0
        %4979 = vmatprep.subr.mxu0 0.0
        %4980 = vmatpush1.msra.mxu0 0.0
        %4981 = vmatprep.subr.mxu0 0.0
        %4982 = vmatpush1.msra.mxu0 0.0
        %4983 = vmatprep.subr.mxu0 0.0
        %4984 = vmatpush1.msra.mxu0 0.0
        %4985 = vmatprep.subr.mxu0 0.0
        %4986 = vmatpush1.msra.mxu0 0.0
        %4987 = vmatprep.subr.mxu0 0.0
        %4988 = vmatpush1.msra.mxu0 0.0
        %4989 = vmatprep.subr.mxu0 0.0
        %4990 = vmatpush1.msra.mxu0 0.0
        %4991 = vmatprep.mubr.f32.mxu0 0.0
        %4992 = vmatmul.mubr.f32.gmra.mrb[0].mxu0 %v4925
        %v4993 = vpop.f32.mrb[0].mxu0
        %v4994 = vadd.f32 %v4920, %v4993
        %v4995 = vpop.f32.mrb[0].mxu0
        %v4996 = vadd.f32 %v4922, %v4995
        %4997 = vdwg.mxu0
        %v4998 = vld [vmem:[%s63] sm:$0x3]
        %v5000 = vlaneseq
        %v5001 = vshrl.u32 %v5000, 7
        %v5002 = vsub.s32 0, %v5001
        %v5003 = vrot.slane %v4998, %v5002
        %v5004 = vlaneseq
        %v5005 = vshrl.u32 %v5004, 7
        %v5006 = vsub.s32 1, %v5005
        %v5007 = vrot.slane %v4998, %v5006
        %v5010 = vadd.f32 %v4994, %v5003
        %v5011 = vadd.f32 %v4996, %v5007
        %v5012 = vmax.f32 %v5010, 0.0
        %v5013 = vmax.f32 %v5011, 0.0
        %v5014 = vld [vmem:[%s65] sm:$0xff]
        %v5015 = vld [vmem:[%s65 + $0x8] sm:$0xff]
        %v5016 = vld [vmem:[%s65 + $0x10] sm:$0xff]
        %v5017 = vld [vmem:[%s65 + $0x18] sm:$0xff]
        %v5018 = vld [vmem:[%s65 + $0x20] sm:$0xff]
        %v5019 = vld [vmem:[%s65 + $0x28] sm:$0xff]
        %v5020 = vld [vmem:[%s65 + $0x30] sm:$0xff]
        %v5021 = vld [vmem:[%s65 + $0x38] sm:$0xff]
        %v5022 = vld [vmem:[%s65 + $0x40] sm:$0xff]
        %v5023 = vld [vmem:[%s65 + $0x48] sm:$0xff]
        %v5024 = vld [vmem:[%s65 + $0x50] sm:$0xff]
        %v5025 = vld [vmem:[%s65 + $0x58] sm:$0xff]
        %v5026 = vld [vmem:[%s65 + $0x60] sm:$0xff]
        %v5027 = vld [vmem:[%s65 + $0x68] sm:$0xff]
        %v5028 = vld [vmem:[%s65 + $0x70] sm:$0xff]
        %v5029 = vld [vmem:[%s65 + $0x78] sm:$0xff]
        %v5030 = vld [vmem:[%s65 + $0x80] sm:$0xff]
        %v5031 = vld [vmem:[%s65 + $0x88] sm:$0xff]
        %v5032 = vld [vmem:[%s65 + $0x90] sm:$0xff]
        %v5033 = vld [vmem:[%s65 + $0x98] sm:$0xff]
        %v5034 = vld [vmem:[%s65 + $0xa0] sm:$0xff]
        %v5035 = vld [vmem:[%s65 + $0xa8] sm:$0xff]
        %v5036 = vld [vmem:[%s65 + $0xb0] sm:$0xff]
        %v5037 = vld [vmem:[%s65 + $0xb8] sm:$0xff]
        %v5038 = vld [vmem:[%s65 + $0xc0] sm:$0xff]
        %v5039 = vld [vmem:[%s65 + $0xc8] sm:$0xff]
        %v5040 = vld [vmem:[%s65 + $0xd0] sm:$0xff]
        %v5041 = vld [vmem:[%s65 + $0xd8] sm:$0xff]
        %v5042 = vld [vmem:[%s65 + $0xe0] sm:$0xff]
        %v5043 = vld [vmem:[%s65 + $0xe8] sm:$0xff]
        %v5044 = vld [vmem:[%s65 + $0xf0] sm:$0xff]
        %v5045 = vld [vmem:[%s65 + $0xf8] sm:$0xff]
        %v5046 = vld [vmem:[%s67] sm:$0x1]
        %5047 = vmatprep.subr.mxu0 0.0
        %5048 = vmatpush1.msra.mxu0 %v5014
        %5049 = vmatprep.subr.mxu0 0.0
        %5050 = vmatpush1.msra.mxu0 %v5015
        %5051 = vmatprep.subr.mxu0 0.0
        %5052 = vmatpush1.msra.mxu0 %v5016
        %5053 = vmatprep.subr.mxu0 0.0
        %5054 = vmatpush1.msra.mxu0 %v5017
        %5055 = vmatprep.subr.mxu0 0.0
        %5056 = vmatpush1.msra.mxu0 %v5018
        %5057 = vmatprep.subr.mxu0 0.0
        %5058 = vmatpush1.msra.mxu0 %v5019
        %5059 = vmatprep.subr.mxu0 0.0
        %5060 = vmatpush1.msra.mxu0 %v5020
        %5061 = vmatprep.subr.mxu0 0.0
        %5062 = vmatpush1.msra.mxu0 %v5021
        %5063 = vmatprep.subr.mxu0 0.0
        %5064 = vmatpush1.msra.mxu0 %v5022
        %5065 = vmatprep.subr.mxu0 0.0
        %5066 = vmatpush1.msra.mxu0 %v5023
        %5067 = vmatprep.subr.mxu0 0.0
        %5068 = vmatpush1.msra.mxu0 %v5024
        %5069 = vmatprep.subr.mxu0 0.0
        %5070 = vmatpush1.msra.mxu0 %v5025
        %5071 = vmatprep.subr.mxu0 0.0
        %5072 = vmatpush1.msra.mxu0 %v5026
        %5073 = vmatprep.subr.mxu0 0.0
        %5074 = vmatpush1.msra.mxu0 %v5027
        %5075 = vmatprep.subr.mxu0 0.0
        %5076 = vmatpush1.msra.mxu0 %v5028
        %5077 = vmatprep.subr.mxu0 0.0
        %5078 = vmatpush1.msra.mxu0 %v5029
        %5079 = vmatprep.subr.mxu0 0.0
        %5080 = vmatpush1.msra.mxu0 %v5030
        %5081 = vmatprep.subr.mxu0 0.0
        %5082 = vmatpush1.msra.mxu0 %v5031
        %5083 = vmatprep.subr.mxu0 0.0
        %5084 = vmatpush1.msra.mxu0 %v5032
        %5085 = vmatprep.subr.mxu0 0.0
        %5086 = vmatpush1.msra.mxu0 %v5033
        %5087 = vmatprep.subr.mxu0 0.0
        %5088 = vmatpush1.msra.mxu0 %v5034
        %5089 = vmatprep.subr.mxu0 0.0
        %5090 = vmatpush1.msra.mxu0 %v5035
        %5091 = vmatprep.subr.mxu0 0.0
        %5092 = vmatpush1.msra.mxu0 %v5036
        %5093 = vmatprep.subr.mxu0 0.0
        %5094 = vmatpush1.msra.mxu0 %v5037
        %5095 = vmatprep.subr.mxu0 0.0
        %5096 = vmatpush1.msra.mxu0 %v5038
        %5097 = vmatprep.subr.mxu0 0.0
        %5098 = vmatpush1.msra.mxu0 %v5039
        %5099 = vmatprep.subr.mxu0 0.0
        %5100 = vmatpush1.msra.mxu0 %v5040
        %5101 = vmatprep.subr.mxu0 0.0
        %5102 = vmatpush1.msra.mxu0 %v5041
        %5103 = vmatprep.subr.mxu0 0.0
        %5104 = vmatpush1.msra.mxu0 %v5042
        %5105 = vmatprep.subr.mxu0 0.0
        %5106 = vmatpush1.msra.mxu0 %v5043
        %5107 = vmatprep.subr.mxu0 0.0
        %5108 = vmatpush1.msra.mxu0 %v5044
        %5109 = vmatprep.subr.mxu0 0.0
        %5110 = vmatpush1.msra.mxu0 %v5045
        %5111 = vmatprep.mubr.f32.mxu0 %v5013
        %5112 = vmatmul.mubr.f32.gmra.mrb[0].mxu0 %v5012
        %v5113 = vpop.f32.mrb[0].mxu0
        %v5114 = vadd.f32 %v5046, %v5113
        %v5115 = vpop.f32.mrb[0].mxu0
        %5116 = vdwg.mxu0
        %vm5117 = vcmask 57344
        %5118 = vst.msk [vmem:[%s1047] sm:$0x1] %vm5117, %v5114
        %s5119 = sand.u32 %s815, 1
        %s5120 = scalar_lea.sflag [#allocation3], %s5119
        %s5121 = sand.u32 %s815, 1
        %s5122 = scalar_lea.vmem [#allocation2], %s5121
        // Predicated region
        $region157: #{point_transformer_forward.1} parent=155 // pred_check
          %p5123 = pneg %p825
        $region158: #{point_transformer_forward.1} parent=155 // pred_check_branch
          %5125 = sbr.rel (%p5123) target = $region160
        $region159: #{point_transformer_forward.1} parent=155 // pred_region
          %s5127 = ssub.s32 16, 16
          %5128 = vsyncadd %s5120, %s5127
          %s5129 = smul.addr %s83, 16
          %s5130 = scalar_lea.hbm %s69, %s5129
          %s5132 = sshll.u32 %s5122, 4
          %s5133 = int_to_ptr.vmem [resolvable:$true] %s5132
          %5135 = dma.vmem_to_hbm [thread:$0]  %s5133, 16, %s5130, %s5120
        $region160: #{point_transformer_forward.1} parent=155 // pred_fallthru
          _
      $region156: #{point_transformer_forward.1} parent=5 // pred_fallthru
        _
      %p5136 = scmp.le.s32.totalorder 2, %s78
      // Predicated region
      $region161: #{point_transformer_forward.1} parent=5 // pred_check
        %p5137 = pneg %p5136
      $region162: #{point_transformer_forward.1} parent=5 // pred_check_branch
        %5139 = sbr.rel (%p5137) target = $region164
      $region163: #{point_transformer_forward.1} parent=5 // pred_region
        %s5140 = ssub.s32 %s78, 2
        // Predicated region
        $region165: #{point_transformer_forward.1} parent=163 // pred_check
          %p5141 = pneg %p831
        $region166: #{point_transformer_forward.1} parent=163 // pred_check_branch
          %5143 = sbr.rel (%p5141) target = $region168
        $region167: #{point_transformer_forward.1} parent=163 // pred_region
          %s5144 = sand.u32 %s816, 1
          %s5145 = scalar_lea.sflag [#allocation3], %s5144
          %s5146 = sand.u32 %s816, 1
          %s5147 = scalar_lea.vmem [#allocation2], %s5146
          %5148 = dma.done %s5145, 16
        $region168: #{point_transformer_forward.1} parent=163 // pred_fallthru
          _
      $region164: #{point_transformer_forward.1} parent=5 // pred_fallthru
        _
    $region6: #{point_transformer_forward.1} parent=1 // loop_footer
      %s82 = sadd.s32 1, %s78
    $region7: #{point_transformer_forward.1} parent=1 // loop_footer_branch
      %77 = sbr.rel target = $region3
    $region8: #{point_transformer_forward.1} parent=1 // loop_exit
      _
    %5149 = vsyncpa [#allocation3], 1
    %s5150 = scalar_lea.sflag [#allocation3], 1
    %5151 = vsyncpa %s5150, 1

</llo_original>
